<compile_context>
chip_gen: v7x
topology: tpu7x:2x2x1
jax: 0.10.0
libtpu: 0.0.40
codegen_flags: <defaults>
</compile_context>

<pallas_src>
import functools
import math

import jax
import jax.numpy as jnp
from jax.experimental import pallas as pl
from jax.experimental.pallas import tpu as pltpu


def mha_kernel(x_ref, wq_ref, bq_ref, wk_ref, bk_ref, wv_ref, bv_ref,
               wp_ref, bp_ref, ek_ref, ev_ref, bias_ref, out_ref,
               *, n_head, d_key, d_value):
    f32 = jnp.float32
    H = n_head
    S = x_ref.shape[1]
    D = x_ref.shape[2]
    mm_dtype = x_ref.dtype                       # matmul operand dtype (f32 or bf16)
    inv_sqrt_dk = jnp.float32(1.0 / math.sqrt(d_key))

    x = x_ref[0]                                           # [S, D]
    xb = jnp.broadcast_to(x[None, :, :], (H, S, D))        # [H, S, D]

    # Head-batched QKV projections on the MXU (f32 accumulation).
    q = jnp.einsum('hsd,hdf->hsf', xb, wq_ref[...],
                   preferred_element_type=f32) + bq_ref[...]        # [H, S, dk]
    k = jnp.einsum('hsd,hdf->hsf', xb, wk_ref[...],
                   preferred_element_type=f32) + bk_ref[...]        # [H, S, dk]
    v = jnp.einsum('hsd,hdf->hsf', xb, wv_ref[...],
                   preferred_element_type=f32) + bv_ref[...]        # [H, S, dv]

    qm = q.astype(mm_dtype)
    km = k.astype(mm_dtype)
    vm = v.astype(mm_dtype)

    # Scores: content term + relative-position edge term, both as dot_general.
    s1 = jnp.einsum('hid,hjd->hij', qm, km,
                    preferred_element_type=f32)                      # [H, S, S]
    s2 = jnp.einsum('hid,ijd->hij', qm, ek_ref[...],
                    preferred_element_type=f32)                      # [H, S, S]
    scores = (s1 + s2) * inv_sqrt_dk + bias_ref[0]                   # [H, S, S]

    # Numerically stable softmax along j (lane axis); divide via EUP reciprocal.
    m = jnp.max(scores, axis=-1, keepdims=True)
    e = jnp.exp(scores - m)
    denom = jnp.sum(e, axis=-1, keepdims=True)
    use_approx = (x_ref.dtype != jnp.float32)
    w = e * pl.reciprocal(denom, approx=use_approx)
    # TODO(synk): attention dropout omitted (rate = 0.0 in this configuration).

    wm = w.astype(mm_dtype)
    c1 = jnp.einsum('hij,hjd->hid', wm, vm,
                    preferred_element_type=f32)                      # [H, S, dv]
    c2 = jnp.einsum('hij,ijd->hid', wm, ev_ref[...],
                    preferred_element_type=f32)                      # [H, S, dv]
    context = (c1 + c2).astype(mm_dtype)                             # [H, S, dv]

    # Output projection: per-head matmul then reduce over heads (no lane concat).
    out_h = jnp.einsum('hid,hdo->hio', context, wp_ref[...],
                       preferred_element_type=f32)                   # [H, S, D]
    out = jnp.sum(out_h, axis=0) + bp_ref[...]                       # [S, D]
    out_ref[0] = out.astype(out_ref.dtype)


def multi_head_attention_fwd(queries, edges_key, edges_value, attn_bias, params,
                             *, n_head, d_key, d_value, mm_dtype=jnp.bfloat16):
    B, S, d_model = queries.shape
    wq, bq, wk, bk, wv, bv, wp, bp = params
    H = n_head
    f32 = jnp.float32

    # Wrapper-side layout plumbing: per-head weight/bias views (no compute moved).
    wq_h = wq.reshape(d_model, H, d_key).transpose(1, 0, 2).astype(mm_dtype)     # [H, D, dk]
    wk_h = wk.reshape(d_model, H, d_key).transpose(1, 0, 2).astype(mm_dtype)     # [H, D, dk]
    wv_h = wv.reshape(d_model, H, d_value).transpose(1, 0, 2).astype(mm_dtype)   # [H, D, dv]
    wp_h = wp.reshape(H, d_value, d_model).astype(mm_dtype)                      # [H, dv, D]
    bq_h = bq.reshape(H, 1, d_key).astype(f32)
    bk_h = bk.reshape(H, 1, d_key).astype(f32)
    bv_h = bv.reshape(H, 1, d_value).astype(f32)
    bp_2d = bp.reshape(1, d_model).astype(f32)

    x = queries.astype(mm_dtype)
    ek = edges_key.astype(mm_dtype)
    ev = edges_value.astype(mm_dtype)
    bias = attn_bias.astype(f32)

    kern = functools.partial(mha_kernel, n_head=H, d_key=d_key, d_value=d_value)

    def const_spec(shape):
        n = len(shape)
        return pl.BlockSpec(shape, lambda b, _n=n: (0,) * _n)

    grid_spec = pltpu.PrefetchScalarGridSpec(
        num_scalar_prefetch=0,
        grid=(B,),
        in_specs=[
            pl.BlockSpec((1, S, d_model), lambda b: (b, 0, 0)),              # queries
            const_spec((H, d_model, d_key)), const_spec((H, 1, d_key)),      # Wq, bq
            const_spec((H, d_model, d_key)), const_spec((H, 1, d_key)),      # Wk, bk
            const_spec((H, d_model, d_value)), const_spec((H, 1, d_value)),  # Wv, bv
            const_spec((H, d_value, d_model)), const_spec((1, d_model)),     # Wp, bp
            const_spec((S, S, d_key)),                                       # edges_key
            const_spec((S, S, d_value)),                                     # edges_value
            pl.BlockSpec((1, H, S, S), lambda b: (b, 0, 0, 0)),              # attn_bias
        ],
        out_specs=pl.BlockSpec((1, S, d_model), lambda b: (b, 0, 0)),
    )

    return pl.pallas_call(
        kern,
        out_shape=jax.ShapeDtypeStruct((B, S, d_model), jnp.float32),
        grid_spec=grid_spec,
        compiler_params=pltpu.CompilerParams(
            dimension_semantics=("parallel",),
            vmem_limit_bytes=32 * 1024 * 1024),
    )(x, wq_h, bq_h, wk_h, bk_h, wv_h, bv_h, wp_h, bp_2d, ek, ev, bias)


def reference_fwd(queries, edges_key, edges_value, attn_bias, params,
                  *, n_head, d_key, d_value):
    """Plain-JAX mirror of the PyTorch forward for verification."""
    B, S, d_model = queries.shape
    wq, bq, wk, bk, wv, bv, wp, bp = params
    q = (queries @ wq + bq).reshape(B, S, n_head, d_key).transpose(0, 2, 1, 3)
    k = (queries @ wk + bk).reshape(B, S, n_head, d_key).transpose(0, 2, 1, 3)
    v = (queries @ wv + bv).reshape(B, S, n_head, d_value).transpose(0, 2, 1, 3)
    s1 = jnp.einsum('bhid,bhjd->bhij', q, k) / math.sqrt(d_key)
    s2 = jnp.einsum('bhid,ijd->bhij', q, edges_key) / math.sqrt(d_key)
    scores = s1 + s2 + attn_bias
    w = jax.nn.softmax(scores, axis=-1)
    c1 = jnp.einsum('bhij,bhjd->bhid', w, v)
    c2 = jnp.einsum('bhij,ijd->bhid', w, edges_value)
    context = (c1 + c2).transpose(0, 2, 1, 3).reshape(B, S, n_head * d_value)
    return context @ wp + bp


def trunc_normal(key, shape, std=0.02):
    # matches the torch truncated_normal helper: N(0, std) truncated to +-2*std
    return std * jax.random.truncated_normal(key, -2.0, 2.0, shape, jnp.float32)


if __name__ == "__main__":
    B, S = 2, 8
    d_model, n_head, d_key, d_value = 32, 4, 8, 8

    key = jax.random.PRNGKey(0)
    ks = jax.random.split(key, 8)

    # Parameters (Linear weights stored pre-transposed: [in, out]); biases zero
    # as in the PyTorch __init__.
    wq = trunc_normal(ks[0], (d_model, n_head * d_key))
    wk = trunc_normal(ks[1], (d_model, n_head * d_key))
    wv = trunc_normal(ks[2], (d_model, n_head * d_value))
    wp = trunc_normal(ks[3], (n_head * d_value, d_model))
    bq = jnp.zeros((n_head * d_key,), jnp.float32)
    bk = jnp.zeros((n_head * d_key,), jnp.float32)
    bv = jnp.zeros((n_head * d_value,), jnp.float32)
    bp = jnp.zeros((d_model,), jnp.float32)
    params = (wq, bq, wk, bk, wv, bv, wp, bp)

    queries = jax.random.normal(ks[4], (B, S, d_model), jnp.float32)
    edges_key = jax.random.normal(ks[5], (S, S, d_key), jnp.float32)
    edges_value = jax.random.normal(ks[6], (S, S, d_value), jnp.float32)
    attn_bias = 0.1 * jax.random.normal(ks[7], (B, n_head, S, S), jnp.float32)

    ref = reference_fwd(
        queries, edges_key, edges_value, attn_bias, params,
        n_head=n_head, d_key=d_key, d_value=d_value)

    # Exact path (f32 MXU operands) — strict correctness check.
    out_f32 = multi_head_attention_fwd(
        queries, edges_key, edges_value, attn_bias, params,
        n_head=n_head, d_key=d_key, d_value=d_value, mm_dtype=jnp.float32)
    out_f32 = jax.block_until_ready(out_f32)
    assert out_f32.shape == (B, S, d_model)
    assert jnp.allclose(out_f32, ref, atol=1e-4, rtol=1e-4), "f32 mismatch vs reference"

    # Fast path (bf16 MXU operands, f32 accumulation) — looser tolerance.
    out_bf16 = multi_head_attention_fwd(
        queries, edges_key, edges_value, attn_bias, params,
        n_head=n_head, d_key=d_key, d_value=d_value, mm_dtype=jnp.bfloat16)
    out_bf16 = jax.block_until_ready(out_bf16)
    assert out_bf16.shape == (B, S, d_model)
    assert jnp.allclose(out_bf16, ref, atol=1e-2, rtol=5e-2), "bf16 mismatch vs reference"

    print("KERNEL_OK")
</pallas_src>

<mosaic_0001>
module attributes {stable_mosaic.version = 11 : i64} {
  func.func @mha_kernel(%arg0: i32, %arg1: memref<1x8x32xf32, #tpu.memory_space<vmem>>, %arg2: memref<4x32x8xf32, #tpu.memory_space<vmem>>, %arg3: memref<4x1x8xf32, #tpu.memory_space<vmem>>, %arg4: memref<4x32x8xf32, #tpu.memory_space<vmem>>, %arg5: memref<4x1x8xf32, #tpu.memory_space<vmem>>, %arg6: memref<4x32x8xf32, #tpu.memory_space<vmem>>, %arg7: memref<4x1x8xf32, #tpu.memory_space<vmem>>, %arg8: memref<4x8x32xf32, #tpu.memory_space<vmem>>, %arg9: memref<1x32xf32, #tpu.memory_space<vmem>>, %arg10: memref<8x8x8xf32, #tpu.memory_space<vmem>>, %arg11: memref<8x8x8xf32, #tpu.memory_space<vmem>>, %arg12: memref<1x4x8x8xf32, #tpu.memory_space<vmem>>, %arg13: memref<1x8x32xf32, #tpu.memory_space<vmem>>) attributes {dimension_semantics = [#tpu.dimension_semantics<parallel>], iteration_bounds = array<i64: 2>, scalar_prefetch = 0 : i64, scratch_operands = 0 : i64, tpu.core_type = #tpu.core_type<tc>, window_params = [{transform_indices = @transform_0, window_bounds = array<i64: 1, 8, 32>}, {pipeline_mode = #tpu.pipeline_mode<synchronous>, transform_indices = @transform_1, window_bounds = array<i64: 4, 32, 8>}, {pipeline_mode = #tpu.pipeline_mode<synchronous>, transform_indices = @transform_2, window_bounds = array<i64: 4, 1, 8>}, {pipeline_mode = #tpu.pipeline_mode<synchronous>, transform_indices = @transform_3, window_bounds = array<i64: 4, 32, 8>}, {pipeline_mode = #tpu.pipeline_mode<synchronous>, transform_indices = @transform_4, window_bounds = array<i64: 4, 1, 8>}, {pipeline_mode = #tpu.pipeline_mode<synchronous>, transform_indices = @transform_5, window_bounds = array<i64: 4, 32, 8>}, {pipeline_mode = #tpu.pipeline_mode<synchronous>, transform_indices = @transform_6, window_bounds = array<i64: 4, 1, 8>}, {pipeline_mode = #tpu.pipeline_mode<synchronous>, transform_indices = @transform_7, window_bounds = array<i64: 4, 8, 32>}, {pipeline_mode = #tpu.pipeline_mode<synchronous>, transform_indices = @transform_8, window_bounds = array<i64: 1, 32>}, {pipeline_mode = #tpu.pipeline_mode<synchronous>, transform_indices = @transform_9, window_bounds = array<i64: 8, 8, 8>}, {pipeline_mode = #tpu.pipeline_mode<synchronous>, transform_indices = @transform_10, window_bounds = array<i64: 8, 8, 8>}, {transform_indices = @transform_11, window_bounds = array<i64: 1, 4, 8, 8>}, {transform_indices = @transform_12, window_bounds = array<i64: 1, 8, 32>}]} {
    %c0 = arith.constant 0 : index
    %c0_0 = arith.constant 0 : index
    %c0_1 = arith.constant 0 : index
    %0 = vector.load %arg1[%c0, %c0_0, %c0_1] : memref<1x8x32xf32, #tpu.memory_space<vmem>>, vector<1x8x32xf32>
    %1 = vector.shape_cast %0 : vector<1x8x32xf32> to vector<8x32xf32>
    %2 = vector.shape_cast %1 : vector<8x32xf32> to vector<1x8x32xf32>
    %3 = vector.shape_cast %2 : vector<1x8x32xf32> to vector<1x8x32xf32>
    %4 = vector.broadcast %3 : vector<1x8x32xf32> to vector<4x8x32xf32>
    %c0_2 = arith.constant 0 : index
    %c0_3 = arith.constant 0 : index
    %c0_4 = arith.constant 0 : index
    %5 = vector.load %arg2[%c0_2, %c0_3, %c0_4] : memref<4x32x8xf32, #tpu.memory_space<vmem>>, vector<4x32x8xf32>
    "tpu.trace_start"() <{level = 10 : i32, message = "hsd,hdf->hsf"}> : () -> ()
    %cst = arith.constant dense<0.000000e+00> : vector<4x8x8xf32>
    %6 = tpu.matmul %4, %5, %cst {dimension_numbers = #tpu.dot_dimension_numbers<[2], [1], [1], [2], [0, 0, 0, 1, 1, 2], [0], [0]>} : vector<4x8x32xf32>, vector<4x32x8xf32>, vector<4x8x8xf32> -> vector<4x8x8xf32>
    "tpu.trace_stop"() : () -> ()
    %c0_5 = arith.constant 0 : index
    %c0_6 = arith.constant 0 : index
    %c0_7 = arith.constant 0 : index
    %7 = vector.load %arg3[%c0_5, %c0_6, %c0_7] : memref<4x1x8xf32, #tpu.memory_space<vmem>>, vector<4x1x8xf32>
    %8 = vector.broadcast %7 : vector<4x1x8xf32> to vector<4x8x8xf32>
    %9 = arith.addf %6, %8 : vector<4x8x8xf32>
    %c0_8 = arith.constant 0 : index
    %c0_9 = arith.constant 0 : index
    %c0_10 = arith.constant 0 : index
    %10 = vector.load %arg4[%c0_8, %c0_9, %c0_10] : memref<4x32x8xf32, #tpu.memory_space<vmem>>, vector<4x32x8xf32>
    "tpu.trace_start"() <{level = 10 : i32, message = "hsd,hdf->hsf"}> : () -> ()
    %cst_11 = arith.constant dense<0.000000e+00> : vector<4x8x8xf32>
    %11 = tpu.matmul %4, %10, %cst_11 {dimension_numbers = #tpu.dot_dimension_numbers<[2], [1], [1], [2], [0, 0, 0, 1, 1, 2], [0], [0]>} : vector<4x8x32xf32>, vector<4x32x8xf32>, vector<4x8x8xf32> -> vector<4x8x8xf32>
    "tpu.trace_stop"() : () -> ()
    %c0_12 = arith.constant 0 : index
    %c0_13 = arith.constant 0 : index
    %c0_14 = arith.constant 0 : index
    %12 = vector.load %arg5[%c0_12, %c0_13, %c0_14] : memref<4x1x8xf32, #tpu.memory_space<vmem>>, vector<4x1x8xf32>
    %13 = vector.broadcast %12 : vector<4x1x8xf32> to vector<4x8x8xf32>
    %14 = arith.addf %11, %13 : vector<4x8x8xf32>
    %c0_15 = arith.constant 0 : index
    %c0_16 = arith.constant 0 : index
    %c0_17 = arith.constant 0 : index
    %15 = vector.load %arg6[%c0_15, %c0_16, %c0_17] : memref<4x32x8xf32, #tpu.memory_space<vmem>>, vector<4x32x8xf32>
    "tpu.trace_start"() <{level = 10 : i32, message = "hsd,hdf->hsf"}> : () -> ()
    %cst_18 = arith.constant dense<0.000000e+00> : vector<4x8x8xf32>
    %16 = tpu.matmul %4, %15, %cst_18 {dimension_numbers = #tpu.dot_dimension_numbers<[2], [1], [1], [2], [0, 0, 0, 1, 1, 2], [0], [0]>} : vector<4x8x32xf32>, vector<4x32x8xf32>, vector<4x8x8xf32> -> vector<4x8x8xf32>
    "tpu.trace_stop"() : () -> ()
    %c0_19 = arith.constant 0 : index
    %c0_20 = arith.constant 0 : index
    %c0_21 = arith.constant 0 : index
    %17 = vector.load %arg7[%c0_19, %c0_20, %c0_21] : memref<4x1x8xf32, #tpu.memory_space<vmem>>, vector<4x1x8xf32>
    %18 = vector.broadcast %17 : vector<4x1x8xf32> to vector<4x8x8xf32>
    %19 = arith.addf %16, %18 : vector<4x8x8xf32>
    "tpu.trace_start"() <{level = 10 : i32, message = "hid,hjd->hij"}> : () -> ()
    %cst_22 = arith.constant dense<0.000000e+00> : vector<4x8x8xf32>
    %20 = tpu.matmul %9, %14, %cst_22 {dimension_numbers = #tpu.dot_dimension_numbers<[2], [2], [1], [1], [0, 0, 0, 1, 1, 1], [0], [0]>} : vector<4x8x8xf32>, vector<4x8x8xf32>, vector<4x8x8xf32> -> vector<4x8x8xf32>
    "tpu.trace_stop"() : () -> ()
    %c0_23 = arith.constant 0 : index
    %c0_24 = arith.constant 0 : index
    %c0_25 = arith.constant 0 : index
    %21 = vector.load %arg10[%c0_23, %c0_24, %c0_25] : memref<8x8x8xf32, #tpu.memory_space<vmem>>, vector<8x8x8xf32>
    "tpu.trace_start"() <{level = 10 : i32, message = "hid,ijd->hij"}> : () -> ()
    %cst_26 = arith.constant dense<0.000000e+00> : vector<8x8x4xf32>
    %22 = tpu.matmul %21, %9, %cst_26 {dimension_numbers = #tpu.dot_dimension_numbers<[2], [2], [1], [0], [0, 0, 0, 1, 1, 0], [0], [1]>} : vector<8x8x8xf32>, vector<4x8x8xf32>, vector<8x8x4xf32> -> vector<8x8x4xf32>
    %23 = tpu.transpose %22, [2, 0, 1] : vector<8x8x4xf32> -> vector<4x8x8xf32>
    "tpu.trace_stop"() : () -> ()
    %24 = arith.addf %20, %23 : vector<4x8x8xf32>
    %cst_27 = arith.constant 0.353553385 : f32
    %25 = vector.broadcast %cst_27 : f32 to vector<4x8x8xf32>
    %26 = arith.mulf %24, %25 : vector<4x8x8xf32>
    %c0_28 = arith.constant 0 : index
    %c0_29 = arith.constant 0 : index
    %c0_30 = arith.constant 0 : index
    %c0_31 = arith.constant 0 : index
    %27 = vector.load %arg12[%c0_28, %c0_29, %c0_30, %c0_31] : memref<1x4x8x8xf32, #tpu.memory_space<vmem>>, vector<1x4x8x8xf32>
    %28 = vector.shape_cast %27 : vector<1x4x8x8xf32> to vector<4x8x8xf32>
    %29 = arith.addf %26, %28 : vector<4x8x8xf32>
    %cst_32 = arith.constant dense<0xFF800000> : vector<4x8xf32>
    %30 = vector.multi_reduction <maximumf>, %29, %cst_32 [2] : vector<4x8x8xf32> to vector<4x8xf32>
    %31 = vector.shape_cast %30 : vector<4x8xf32> to vector<4x8x1xf32>
    %32 = vector.broadcast %31 : vector<4x8x1xf32> to vector<4x8x8xf32>
    %33 = arith.subf %29, %32 : vector<4x8x8xf32>
    %34 = math.exp %33 : vector<4x8x8xf32>
    %cst_33 = arith.constant dense<0.000000e+00> : vector<4x8xf32>
    %35 = vector.multi_reduction <add>, %34, %cst_33 [2] : vector<4x8x8xf32> to vector<4x8xf32>
    %36 = vector.shape_cast %35 : vector<4x8xf32> to vector<4x8x1xf32>
    %37 = tpu.reciprocal %36 : vector<4x8x1xf32> -> vector<4x8x1xf32>
    %38 = vector.broadcast %37 : vector<4x8x1xf32> to vector<4x8x8xf32>
    %39 = arith.mulf %34, %38 : vector<4x8x8xf32>
    "tpu.trace_start"() <{level = 10 : i32, message = "hij,hjd->hid"}> : () -> ()
    %cst_34 = arith.constant dense<0.000000e+00> : vector<4x8x8xf32>
    %40 = tpu.matmul %39, %19, %cst_34 {dimension_numbers = #tpu.dot_dimension_numbers<[2], [1], [1], [2], [0, 0, 0, 1, 1, 2], [0], [0]>} : vector<4x8x8xf32>, vector<4x8x8xf32>, vector<4x8x8xf32> -> vector<4x8x8xf32>
    "tpu.trace_stop"() : () -> ()
    %c0_35 = arith.constant 0 : index
    %c0_36 = arith.constant 0 : index
    %c0_37 = arith.constant 0 : index
    %41 = vector.load %arg11[%c0_35, %c0_36, %c0_37] : memref<8x8x8xf32, #tpu.memory_space<vmem>>, vector<8x8x8xf32>
    "tpu.trace_start"() <{level = 10 : i32, message = "hij,ijd->hid"}> : () -> ()
    %cst_38 = arith.constant dense<0.000000e+00> : vector<8x8x4xf32>
    %42 = tpu.matmul %41, %39, %cst_38 {dimension_numbers = #tpu.dot_dimension_numbers<[1], [2], [2], [0], [0, 0, 0, 2, 1, 0], [0], [1]>} : vector<8x8x8xf32>, vector<4x8x8xf32>, vector<8x8x4xf32> -> vector<8x8x4xf32>
    %43 = tpu.transpose %42, [2, 0, 1] : vector<8x8x4xf32> -> vector<4x8x8xf32>
    "tpu.trace_stop"() : () -> ()
    %44 = arith.addf %40, %43 : vector<4x8x8xf32>
    %c0_39 = arith.constant 0 : index
    %c0_40 = arith.constant 0 : index
    %c0_41 = arith.constant 0 : index
    %45 = vector.load %arg8[%c0_39, %c0_40, %c0_41] : memref<4x8x32xf32, #tpu.memory_space<vmem>>, vector<4x8x32xf32>
    "tpu.trace_start"() <{level = 10 : i32, message = "hid,hdo->hio"}> : () -> ()
    %cst_42 = arith.constant dense<0.000000e+00> : vector<4x8x32xf32>
    %46 = tpu.matmul %44, %45, %cst_42 {dimension_numbers = #tpu.dot_dimension_numbers<[2], [1], [1], [2], [0, 0, 0, 1, 1, 2], [0], [0]>} : vector<4x8x8xf32>, vector<4x8x32xf32>, vector<4x8x32xf32> -> vector<4x8x32xf32>
    "tpu.trace_stop"() : () -> ()
    %cst_43 = arith.constant dense<0.000000e+00> : vector<8x32xf32>
    %47 = vector.multi_reduction <add>, %46, %cst_43 [0] : vector<4x8x32xf32> to vector<8x32xf32>
    %c0_44 = arith.constant 0 : index
    %c0_45 = arith.constant 0 : index
    %48 = vector.load %arg9[%c0_44, %c0_45] : memref<1x32xf32, #tpu.memory_space<vmem>>, vector<1x32xf32>
    %49 = vector.broadcast %48 : vector<1x32xf32> to vector<8x32xf32>
    %50 = arith.addf %47, %49 : vector<8x32xf32>
    %c0_46 = arith.constant 0 : index
    %c0_47 = arith.constant 0 : index
    %c0_48 = arith.constant 0 : index
    %51 = vector.load %arg13[%c0_46, %c0_47, %c0_48] : memref<1x8x32xf32, #tpu.memory_space<vmem>>, vector<1x8x32xf32>
    %52 = vector.shape_cast %51 : vector<1x8x32xf32> to vector<8x32xf32>
    %53 = vector.shape_cast %50 : vector<8x32xf32> to vector<1x8x32xf32>
    tpu.vector_store %arg13[%c0_46, %c0_47, %c0_48], %53 {strides = array<i32>} : memref<1x8x32xf32, #tpu.memory_space<vmem>>, vector<1x8x32xf32>,
    return
  }
  func.func @transform_0(%arg0: i32) -> (i32, i32, i32) {
    %c0_i32 = arith.constant 0 : i32
    %c0_i32_0 = arith.constant 0 : i32
    %c0_i32_1 = arith.constant 0 : i32
    return %arg0, %c0_i32, %c0_i32_0 : i32, i32, i32
  }
  func.func @transform_1(%arg0: i32) -> (i32, i32, i32) {
    %c0_i32 = arith.constant 0 : i32
    %c0_i32_0 = arith.constant 0 : i32
    %c0_i32_1 = arith.constant 0 : i32
    %c0_i32_2 = arith.constant 0 : i32
    return %c0_i32, %c0_i32_0, %c0_i32_1 : i32, i32, i32
  }
  func.func @transform_2(%arg0: i32) -> (i32, i32, i32) {
    %c0_i32 = arith.constant 0 : i32
    %c0_i32_0 = arith.constant 0 : i32
    %c0_i32_1 = arith.constant 0 : i32
    %c0_i32_2 = arith.constant 0 : i32
    return %c0_i32, %c0_i32_0, %c0_i32_1 : i32, i32, i32
  }
  func.func @transform_3(%arg0: i32) -> (i32, i32, i32) {
    %c0_i32 = arith.constant 0 : i32
    %c0_i32_0 = arith.constant 0 : i32
    %c0_i32_1 = arith.constant 0 : i32
    %c0_i32_2 = arith.constant 0 : i32
    return %c0_i32, %c0_i32_0, %c0_i32_1 : i32, i32, i32
  }
  func.func @transform_4(%arg0: i32) -> (i32, i32, i32) {
    %c0_i32 = arith.constant 0 : i32
    %c0_i32_0 = arith.constant 0 : i32
    %c0_i32_1 = arith.constant 0 : i32
    %c0_i32_2 = arith.constant 0 : i32
    return %c0_i32, %c0_i32_0, %c0_i32_1 : i32, i32, i32
  }
  func.func @transform_5(%arg0: i32) -> (i32, i32, i32) {
    %c0_i32 = arith.constant 0 : i32
    %c0_i32_0 = arith.constant 0 : i32
    %c0_i32_1 = arith.constant 0 : i32
    %c0_i32_2 = arith.constant 0 : i32
    return %c0_i32, %c0_i32_0, %c0_i32_1 : i32, i32, i32
  }
  func.func @transform_6(%arg0: i32) -> (i32, i32, i32) {
    %c0_i32 = arith.constant 0 : i32
    %c0_i32_0 = arith.constant 0 : i32
    %c0_i32_1 = arith.constant 0 : i32
    %c0_i32_2 = arith.constant 0 : i32
    return %c0_i32, %c0_i32_0, %c0_i32_1 : i32, i32, i32
  }
  func.func @transform_7(%arg0: i32) -> (i32, i32, i32) {
    %c0_i32 = arith.constant 0 : i32
    %c0_i32_0 = arith.constant 0 : i32
    %c0_i32_1 = arith.constant 0 : i32
    %c0_i32_2 = arith.constant 0 : i32
    return %c0_i32, %c0_i32_0, %c0_i32_1 : i32, i32, i32
  }
  func.func @transform_8(%arg0: i32) -> (i32, i32) {
    %c0_i32 = arith.constant 0 : i32
    %c0_i32_0 = arith.constant 0 : i32
    %c0_i32_1 = arith.constant 0 : i32
    return %c0_i32, %c0_i32_0 : i32, i32
  }
  func.func @transform_9(%arg0: i32) -> (i32, i32, i32) {
    %c0_i32 = arith.constant 0 : i32
    %c0_i32_0 = arith.constant 0 : i32
    %c0_i32_1 = arith.constant 0 : i32
    %c0_i32_2 = arith.constant 0 : i32
    return %c0_i32, %c0_i32_0, %c0_i32_1 : i32, i32, i32
  }
  func.func @transform_10(%arg0: i32) -> (i32, i32, i32) {
    %c0_i32 = arith.constant 0 : i32
    %c0_i32_0 = arith.constant 0 : i32
    %c0_i32_1 = arith.constant 0 : i32
    %c0_i32_2 = arith.constant 0 : i32
    return %c0_i32, %c0_i32_0, %c0_i32_1 : i32, i32, i32
  }
  func.func @transform_11(%arg0: i32) -> (i32, i32, i32, i32) {
    %c0_i32 = arith.constant 0 : i32
    %c0_i32_0 = arith.constant 0 : i32
    %c0_i32_1 = arith.constant 0 : i32
    %c0_i32_2 = arith.constant 0 : i32
    return %arg0, %c0_i32, %c0_i32_0, %c0_i32_1 : i32, i32, i32, i32
  }
  func.func @transform_12(%arg0: i32) -> (i32, i32, i32) {
    %c0_i32 = arith.constant 0 : i32
    %c0_i32_0 = arith.constant 0 : i32
    %c0_i32_1 = arith.constant 0 : i32
    return %arg0, %c0_i32, %c0_i32_0 : i32, i32, i32
  }
}

</mosaic_0001>

<llo_original>
// kernel: tpu_custom_call.1
$region0: #{tpu_custom_call.1}
  #allocation0 [shape = 'u32[]', space=smem, size = 0x4, offset = 0x4, fixed_abs, tag = 'smem constant byte address 0x4 - core index']
  #allocation1 [shape = 'u32[144,128]{1,0:T(1,128)}', space=vmem, size = 0x12000, scoped, tag = 'internal scratch']
  %s0 = inlined_call_operand.vmem [shape: f32[2,8,32], index: 0, kind: input, shape index: {}]
  %s1 = inlined_call_operand.vmem [shape: f32[4,32,8], index: 1, kind: input, shape index: {}]
  %s2 = inlined_call_operand.vmem [shape: f32[4,1,8], index: 2, kind: input, shape index: {}]
  %s3 = inlined_call_operand.vmem [shape: f32[4,32,8], index: 3, kind: input, shape index: {}]
  %s4 = inlined_call_operand.vmem [shape: f32[4,1,8], index: 4, kind: input, shape index: {}]
  %s5 = inlined_call_operand.vmem [shape: f32[4,32,8], index: 5, kind: input, shape index: {}]
  %s6 = inlined_call_operand.vmem [shape: f32[4,1,8], index: 6, kind: input, shape index: {}]
  %s7 = inlined_call_operand.vmem [shape: f32[4,8,32], index: 7, kind: input, shape index: {}]
  %s8 = inlined_call_operand.vmem [shape: f32[1,32], index: 8, kind: input, shape index: {}]
  %s9 = inlined_call_operand.vmem [shape: f32[8,8,8], index: 9, kind: input, shape index: {}]
  %s10 = inlined_call_operand.vmem [shape: f32[8,8,8], index: 10, kind: input, shape index: {}]
  %s11 = inlined_call_operand.vmem [shape: f32[2,4,8,8], index: 11, kind: input, shape index: {}]
  %s12 = inlined_call_operand.hbm [shape: f32[2,8,32], index: 12, kind: output, shape index: {}]
  %s13 = sld [smem:[#allocation0]]
  $region81: #{tpu_custom_call.1} parent=0
    _
  %s15 = ssub.s32 1, %s13
  %s16 = scalar_select 0, %s15, %s13
  $region1: #{tpu_custom_call.1} parent=0
    #allocation2 [shape = 'u8[8192]{0}', space=vmem, size = 0x2000, scoped, tag = 'output window, operand 0']
    #allocation3 [shape = 's32[2]{0}', space=sflag, size = 0x8, scoped, tag = 'scoped memory for tpu_custom_call.1']
    %17 = vsyncpa [#allocation3], 0
    %s18 = scalar_lea.sflag [#allocation3], 1
    %19 = vsyncpa %s18, 0
    loop: start=0, step=1, limit=4
    $region2: #{tpu_custom_call.1} parent=1 // loop_pre_header
      _
    $region3: #{tpu_custom_call.1} parent=1 // loop_header
      %s21 = sphi 0, %s25
      %p22 = scmp.ge.s32.totalorder %s21, 4
      %s31 = sphi 0, %s33
      %s34 = sphi 0, %s31
      %s35 = sphi 0, %s34
      %s51 = sphi 0, %s35
      %s55 = sphi 0, %s55
      %s57 = sphi 0, %s55
      %s58 = sphi 0, %s57
      %s72 = sphi 0, %s58
      %s76 = sphi 0, %s76
      %s78 = sphi 0, %s76
      %s79 = sphi 0, %s78
      %s93 = sphi 0, %s79
      %s97 = sphi 0, %s97
      %s99 = sphi 0, %s97
      %s100 = sphi 0, %s99
      %s114 = sphi 0, %s100
      %s118 = sphi 0, %s118
      %s120 = sphi 0, %s118
      %s121 = sphi 0, %s120
      %s135 = sphi 0, %s121
      %s139 = sphi 0, %s139
      %s141 = sphi 0, %s139
      %s142 = sphi 0, %s141
      %s156 = sphi 0, %s142
      %s160 = sphi 0, %s160
      %s162 = sphi 0, %s160
      %s163 = sphi 0, %s162
      %s177 = sphi 0, %s163
      %s181 = sphi 0, %s181
      %s183 = sphi 0, %s181
      %s184 = sphi 0, %s183
      %s198 = sphi 0, %s184
      %s202 = sphi 0, %s202
      %s204 = sphi 0, %s202
      %s205 = sphi 0, %s204
      %s219 = sphi 0, %s205
      %s223 = sphi 0, %s223
      %s225 = sphi 0, %s223
      %s226 = sphi 0, %s225
      %s240 = sphi 0, %s226
      %s244 = sphi 0, %s244
      %s246 = sphi 0, %s244
      %s247 = sphi 0, %s246
      %s261 = sphi 0, %s247
      %s267 = sphi 0, %s269
      %s270 = sphi 0, %s267
      %s271 = sphi 0, %s270
      %s287 = sphi 0, %s271
      %s293 = sphi 0, %s295
      %s296 = sphi 0, %s293
      %s297 = sphi 0, %s296
      %s313 = sphi 0, %s297
    $region4: #{tpu_custom_call.1} parent=1 // loop_header_branch
      %24 = sbr.rel (%p22) target = $region8
    $region5: #{tpu_custom_call.1} parent=1 // loop_body
      %s26 = ssub.s32 %s21, 1
      %s27 = ssub.s32 %s21, 2
      %s28 = sadd.s32 %s21, 1
      %s29 = ssub.s32 %s21, %s28
      %p30 = scmp.eq.s32.totalorder %s29, 0
      %s32 = sadd.s32 %s31, 1
      %s33 = scalar_select %p30, %s31, %s32
      %p36 = pneg %p30
      %p37 = scmp.eq.s32.totalorder %s21, 1
      %p38 = por %p36, %p37
      %p39 = scmp.ne.s32.totalorder %s31, %s34
      %p40 = scmp.eq.s32.totalorder %s21, 0
      %p41 = por %p39, %p40
      %p42 = scmp.ne.s32.totalorder %s31, %s34
      %p43 = scmp.eq.s32.totalorder %s26, 1
      %p44 = por %p42, %p43
      %p45 = scmp.ne.s32.totalorder %s34, %s35
      %p46 = scmp.eq.s32.totalorder %s26, 0
      %p47 = por %p45, %p46
      %p48 = scmp.ne.s32.totalorder %s34, %s35
      %p49 = scmp.eq.s32.totalorder %s27, 1
      %p50 = por %p48, %p49
      %p52 = scmp.ne.s32.totalorder %s35, %s51
      %p53 = scmp.eq.s32.totalorder %s27, 0
      %p54 = por %p52, %p53
      %s56 = sadd.s32 %s55, 1
      %p59 = scmp.eq.s32.totalorder %s21, 1
      %p60 = scmp.ne.s32.totalorder %s55, %s57
      %p61 = scmp.eq.s32.totalorder %s21, 0
      %p62 = por %p60, %p61
      %p63 = scmp.ne.s32.totalorder %s55, %s57
      %p64 = scmp.eq.s32.totalorder %s26, 1
      %p65 = por %p63, %p64
      %p66 = scmp.ne.s32.totalorder %s57, %s58
      %p67 = scmp.eq.s32.totalorder %s26, 0
      %p68 = por %p66, %p67
      %p69 = scmp.ne.s32.totalorder %s57, %s58
      %p70 = scmp.eq.s32.totalorder %s27, 1
      %p71 = por %p69, %p70
      %p73 = scmp.ne.s32.totalorder %s58, %s72
      %p74 = scmp.eq.s32.totalorder %s27, 0
      %p75 = por %p73, %p74
      %s77 = sadd.s32 %s76, 1
      %p80 = scmp.eq.s32.totalorder %s21, 1
      %p81 = scmp.ne.s32.totalorder %s76, %s78
      %p82 = scmp.eq.s32.totalorder %s21, 0
      %p83 = por %p81, %p82
      %p84 = scmp.ne.s32.totalorder %s76, %s78
      %p85 = scmp.eq.s32.totalorder %s26, 1
      %p86 = por %p84, %p85
      %p87 = scmp.ne.s32.totalorder %s78, %s79
      %p88 = scmp.eq.s32.totalorder %s26, 0
      %p89 = por %p87, %p88
      %p90 = scmp.ne.s32.totalorder %s78, %s79
      %p91 = scmp.eq.s32.totalorder %s27, 1
      %p92 = por %p90, %p91
      %p94 = scmp.ne.s32.totalorder %s79, %s93
      %p95 = scmp.eq.s32.totalorder %s27, 0
      %p96 = por %p94, %p95
      %s98 = sadd.s32 %s97, 1
      %p101 = scmp.eq.s32.totalorder %s21, 1
      %p102 = scmp.ne.s32.totalorder %s97, %s99
      %p103 = scmp.eq.s32.totalorder %s21, 0
      %p104 = por %p102, %p103
      %p105 = scmp.ne.s32.totalorder %s97, %s99
      %p106 = scmp.eq.s32.totalorder %s26, 1
      %p107 = por %p105, %p106
      %p108 = scmp.ne.s32.totalorder %s99, %s100
      %p109 = scmp.eq.s32.totalorder %s26, 0
      %p110 = por %p108, %p109
      %p111 = scmp.ne.s32.totalorder %s99, %s100
      %p112 = scmp.eq.s32.totalorder %s27, 1
      %p113 = por %p111, %p112
      %p115 = scmp.ne.s32.totalorder %s100, %s114
      %p116 = scmp.eq.s32.totalorder %s27, 0
      %p117 = por %p115, %p116
      %s119 = sadd.s32 %s118, 1
      %p122 = scmp.eq.s32.totalorder %s21, 1
      %p123 = scmp.ne.s32.totalorder %s118, %s120
      %p124 = scmp.eq.s32.totalorder %s21, 0
      %p125 = por %p123, %p124
      %p126 = scmp.ne.s32.totalorder %s118, %s120
      %p127 = scmp.eq.s32.totalorder %s26, 1
      %p128 = por %p126, %p127
      %p129 = scmp.ne.s32.totalorder %s120, %s121
      %p130 = scmp.eq.s32.totalorder %s26, 0
      %p131 = por %p129, %p130
      %p132 = scmp.ne.s32.totalorder %s120, %s121
      %p133 = scmp.eq.s32.totalorder %s27, 1
      %p134 = por %p132, %p133
      %p136 = scmp.ne.s32.totalorder %s121, %s135
      %p137 = scmp.eq.s32.totalorder %s27, 0
      %p138 = por %p136, %p137
      %s140 = sadd.s32 %s139, 1
      %p143 = scmp.eq.s32.totalorder %s21, 1
      %p144 = scmp.ne.s32.totalorder %s139, %s141
      %p145 = scmp.eq.s32.totalorder %s21, 0
      %p146 = por %p144, %p145
      %p147 = scmp.ne.s32.totalorder %s139, %s141
      %p148 = scmp.eq.s32.totalorder %s26, 1
      %p149 = por %p147, %p148
      %p150 = scmp.ne.s32.totalorder %s141, %s142
      %p151 = scmp.eq.s32.totalorder %s26, 0
      %p152 = por %p150, %p151
      %p153 = scmp.ne.s32.totalorder %s141, %s142
      %p154 = scmp.eq.s32.totalorder %s27, 1
      %p155 = por %p153, %p154
      %p157 = scmp.ne.s32.totalorder %s142, %s156
      %p158 = scmp.eq.s32.totalorder %s27, 0
      %p159 = por %p157, %p158
      %s161 = sadd.s32 %s160, 1
      %p164 = scmp.eq.s32.totalorder %s21, 1
      %p165 = scmp.ne.s32.totalorder %s160, %s162
      %p166 = scmp.eq.s32.totalorder %s21, 0
      %p167 = por %p165, %p166
      %p168 = scmp.ne.s32.totalorder %s160, %s162
      %p169 = scmp.eq.s32.totalorder %s26, 1
      %p170 = por %p168, %p169
      %p171 = scmp.ne.s32.totalorder %s162, %s163
      %p172 = scmp.eq.s32.totalorder %s26, 0
      %p173 = por %p171, %p172
      %p174 = scmp.ne.s32.totalorder %s162, %s163
      %p175 = scmp.eq.s32.totalorder %s27, 1
      %p176 = por %p174, %p175
      %p178 = scmp.ne.s32.totalorder %s163, %s177
      %p179 = scmp.eq.s32.totalorder %s27, 0
      %p180 = por %p178, %p179
      %s182 = sadd.s32 %s181, 1
      %p185 = scmp.eq.s32.totalorder %s21, 1
      %p186 = scmp.ne.s32.totalorder %s181, %s183
      %p187 = scmp.eq.s32.totalorder %s21, 0
      %p188 = por %p186, %p187
      %p189 = scmp.ne.s32.totalorder %s181, %s183
      %p190 = scmp.eq.s32.totalorder %s26, 1
      %p191 = por %p189, %p190
      %p192 = scmp.ne.s32.totalorder %s183, %s184
      %p193 = scmp.eq.s32.totalorder %s26, 0
      %p194 = por %p192, %p193
      %p195 = scmp.ne.s32.totalorder %s183, %s184
      %p196 = scmp.eq.s32.totalorder %s27, 1
      %p197 = por %p195, %p196
      %p199 = scmp.ne.s32.totalorder %s184, %s198
      %p200 = scmp.eq.s32.totalorder %s27, 0
      %p201 = por %p199, %p200
      %s203 = sadd.s32 %s202, 1
      %p206 = scmp.eq.s32.totalorder %s21, 1
      %p207 = scmp.ne.s32.totalorder %s202, %s204
      %p208 = scmp.eq.s32.totalorder %s21, 0
      %p209 = por %p207, %p208
      %p210 = scmp.ne.s32.totalorder %s202, %s204
      %p211 = scmp.eq.s32.totalorder %s26, 1
      %p212 = por %p210, %p211
      %p213 = scmp.ne.s32.totalorder %s204, %s205
      %p214 = scmp.eq.s32.totalorder %s26, 0
      %p215 = por %p213, %p214
      %p216 = scmp.ne.s32.totalorder %s204, %s205
      %p217 = scmp.eq.s32.totalorder %s27, 1
      %p218 = por %p216, %p217
      %p220 = scmp.ne.s32.totalorder %s205, %s219
      %p221 = scmp.eq.s32.totalorder %s27, 0
      %p222 = por %p220, %p221
      %s224 = sadd.s32 %s223, 1
      %p227 = scmp.eq.s32.totalorder %s21, 1
      %p228 = scmp.ne.s32.totalorder %s223, %s225
      %p229 = scmp.eq.s32.totalorder %s21, 0
      %p230 = por %p228, %p229
      %p231 = scmp.ne.s32.totalorder %s223, %s225
      %p232 = scmp.eq.s32.totalorder %s26, 1
      %p233 = por %p231, %p232
      %p234 = scmp.ne.s32.totalorder %s225, %s226
      %p235 = scmp.eq.s32.totalorder %s26, 0
      %p236 = por %p234, %p235
      %p237 = scmp.ne.s32.totalorder %s225, %s226
      %p238 = scmp.eq.s32.totalorder %s27, 1
      %p239 = por %p237, %p238
      %p241 = scmp.ne.s32.totalorder %s226, %s240
      %p242 = scmp.eq.s32.totalorder %s27, 0
      %p243 = por %p241, %p242
      %s245 = sadd.s32 %s244, 1
      %p248 = scmp.eq.s32.totalorder %s21, 1
      %p249 = scmp.ne.s32.totalorder %s244, %s246
      %p250 = scmp.eq.s32.totalorder %s21, 0
      %p251 = por %p249, %p250
      %p252 = scmp.ne.s32.totalorder %s244, %s246
      %p253 = scmp.eq.s32.totalorder %s26, 1
      %p254 = por %p252, %p253
      %p255 = scmp.ne.s32.totalorder %s246, %s247
      %p256 = scmp.eq.s32.totalorder %s26, 0
      %p257 = por %p255, %p256
      %p258 = scmp.ne.s32.totalorder %s246, %s247
      %p259 = scmp.eq.s32.totalorder %s27, 1
      %p260 = por %p258, %p259
      %p262 = scmp.ne.s32.totalorder %s247, %s261
      %p263 = scmp.eq.s32.totalorder %s27, 0
      %p264 = por %p262, %p263
      %s265 = ssub.s32 %s21, %s28
      %p266 = scmp.eq.s32.totalorder %s265, 0
      %s268 = sadd.s32 %s267, 1
      %s269 = scalar_select %p266, %s267, %s268
      %p272 = pneg %p266
      %p273 = scmp.eq.s32.totalorder %s21, 1
      %p274 = por %p272, %p273
      %p275 = scmp.ne.s32.totalorder %s267, %s270
      %p276 = scmp.eq.s32.totalorder %s21, 0
      %p277 = por %p275, %p276
      %p278 = scmp.ne.s32.totalorder %s267, %s270
      %p279 = scmp.eq.s32.totalorder %s26, 1
      %p280 = por %p278, %p279
      %p281 = scmp.ne.s32.totalorder %s270, %s271
      %p282 = scmp.eq.s32.totalorder %s26, 0
      %p283 = por %p281, %p282
      %p284 = scmp.ne.s32.totalorder %s270, %s271
      %p285 = scmp.eq.s32.totalorder %s27, 1
      %p286 = por %p284, %p285
      %p288 = scmp.ne.s32.totalorder %s271, %s287
      %p289 = scmp.eq.s32.totalorder %s27, 0
      %p290 = por %p288, %p289
      %s291 = ssub.s32 %s21, %s28
      %p292 = scmp.eq.s32.totalorder %s291, 0
      %s294 = sadd.s32 %s293, 1
      %s295 = scalar_select %p292, %s293, %s294
      %p298 = pneg %p292
      %p299 = scmp.eq.s32.totalorder %s21, 1
      %p300 = por %p298, %p299
      %p301 = scmp.ne.s32.totalorder %s293, %s296
      %p302 = scmp.eq.s32.totalorder %s21, 0
      %p303 = por %p301, %p302
      %p304 = scmp.ne.s32.totalorder %s293, %s296
      %p305 = scmp.eq.s32.totalorder %s26, 1
      %p306 = por %p304, %p305
      %p307 = scmp.ne.s32.totalorder %s296, %s297
      %p308 = scmp.eq.s32.totalorder %s26, 0
      %p309 = por %p307, %p308
      %p310 = scmp.ne.s32.totalorder %s296, %s297
      %p311 = scmp.eq.s32.totalorder %s27, 1
      %p312 = por %p310, %p311
      %p314 = scmp.ne.s32.totalorder %s297, %s313
      %p315 = scmp.eq.s32.totalorder %s27, 0
      %p316 = por %p314, %p315
      %p317 = scmp.le.s32.totalorder 1, %s21
      %p318 = scmp.lt.s32.totalorder %s21, 3
      %p319 = pnand %p317, %p318
      %p320 = pneg %p319
      // Predicated region
      $region9: #{tpu_custom_call.1} parent=5 // pred_check
        _
      $region10: #{tpu_custom_call.1} parent=5 // pred_check_branch
        %322 = sbr.rel (%p319) target = $region12
      $region11: #{tpu_custom_call.1} parent=5 // pred_region
        %s323 = ssub.s32 %s21, 1
        // Predicated region
        $region13: #{tpu_custom_call.1} parent=11 // pred_check
          %p324 = pneg %p68
        $region14: #{tpu_custom_call.1} parent=11 // pred_check_branch
          %326 = sbr.rel (%p324) target = $region16
        $region15: #{tpu_custom_call.1} parent=11 // pred_region
          _
        $region16: #{tpu_custom_call.1} parent=11 // pred_fallthru
          _
        // Predicated region
        $region17: #{tpu_custom_call.1} parent=11 // pred_check
          %p327 = pneg %p89
        $region18: #{tpu_custom_call.1} parent=11 // pred_check_branch
          %329 = sbr.rel (%p327) target = $region20
        $region19: #{tpu_custom_call.1} parent=11 // pred_region
          _
        $region20: #{tpu_custom_call.1} parent=11 // pred_fallthru
          _
        // Predicated region
        $region21: #{tpu_custom_call.1} parent=11 // pred_check
          %p330 = pneg %p110
        $region22: #{tpu_custom_call.1} parent=11 // pred_check_branch
          %332 = sbr.rel (%p330) target = $region24
        $region23: #{tpu_custom_call.1} parent=11 // pred_region
          _
        $region24: #{tpu_custom_call.1} parent=11 // pred_fallthru
          _
        // Predicated region
        $region25: #{tpu_custom_call.1} parent=11 // pred_check
          %p333 = pneg %p131
        $region26: #{tpu_custom_call.1} parent=11 // pred_check_branch
          %335 = sbr.rel (%p333) target = $region28
        $region27: #{tpu_custom_call.1} parent=11 // pred_region
          _
        $region28: #{tpu_custom_call.1} parent=11 // pred_fallthru
          _
        // Predicated region
        $region29: #{tpu_custom_call.1} parent=11 // pred_check
          %p336 = pneg %p152
        $region30: #{tpu_custom_call.1} parent=11 // pred_check_branch
          %338 = sbr.rel (%p336) target = $region32
        $region31: #{tpu_custom_call.1} parent=11 // pred_region
          _
        $region32: #{tpu_custom_call.1} parent=11 // pred_fallthru
          _
        // Predicated region
        $region33: #{tpu_custom_call.1} parent=11 // pred_check
          %p339 = pneg %p173
        $region34: #{tpu_custom_call.1} parent=11 // pred_check_branch
          %341 = sbr.rel (%p339) target = $region36
        $region35: #{tpu_custom_call.1} parent=11 // pred_region
          _
        $region36: #{tpu_custom_call.1} parent=11 // pred_fallthru
          _
        // Predicated region
        $region37: #{tpu_custom_call.1} parent=11 // pred_check
          %p342 = pneg %p194
        $region38: #{tpu_custom_call.1} parent=11 // pred_check_branch
          %344 = sbr.rel (%p342) target = $region40
        $region39: #{tpu_custom_call.1} parent=11 // pred_region
          _
        $region40: #{tpu_custom_call.1} parent=11 // pred_fallthru
          _
        // Predicated region
        $region41: #{tpu_custom_call.1} parent=11 // pred_check
          %p345 = pneg %p215
        $region42: #{tpu_custom_call.1} parent=11 // pred_check_branch
          %347 = sbr.rel (%p345) target = $region44
        $region43: #{tpu_custom_call.1} parent=11 // pred_region
          _
        $region44: #{tpu_custom_call.1} parent=11 // pred_fallthru
          _
        // Predicated region
        $region45: #{tpu_custom_call.1} parent=11 // pred_check
          %p348 = pneg %p236
        $region46: #{tpu_custom_call.1} parent=11 // pred_check_branch
          %350 = sbr.rel (%p348) target = $region48
        $region47: #{tpu_custom_call.1} parent=11 // pred_region
          _
        $region48: #{tpu_custom_call.1} parent=11 // pred_fallthru
          _
        // Predicated region
        $region49: #{tpu_custom_call.1} parent=11 // pred_check
          %p351 = pneg %p257
        $region50: #{tpu_custom_call.1} parent=11 // pred_check_branch
          %353 = sbr.rel (%p351) target = $region52
        $region51: #{tpu_custom_call.1} parent=11 // pred_region
          _
        $region52: #{tpu_custom_call.1} parent=11 // pred_fallthru
          _
      $region12: #{tpu_custom_call.1} parent=5 // pred_fallthru
        _
      %p354 = scmp.lt.s32.totalorder %s21, 2
      // Predicated region
      $region53: #{tpu_custom_call.1} parent=5 // pred_check
        %p355 = pneg %p354
      $region54: #{tpu_custom_call.1} parent=5 // pred_check_branch
        %357 = sbr.rel (%p355) target = $region56
      $region55: #{tpu_custom_call.1} parent=5 // pred_region
        // Predicated region
        $region57: #{tpu_custom_call.1} parent=55 // pred_check
          %p358 = pneg %p41
        $region58: #{tpu_custom_call.1} parent=55 // pred_check_branch
          %360 = sbr.rel (%p358) target = $region60
        $region59: #{tpu_custom_call.1} parent=55 // pred_region
          %p361 = scmp.lt.s32.totalorder %s21, 1
          %s362 = scalar_select %p361, %s21, 1
          %s363 = smul.addr %s362, 8
          %s364 = scalar_lea.vmem %s0, %s363
        $region60: #{tpu_custom_call.1} parent=55 // pred_fallthru
          _
        // Predicated region
        $region61: #{tpu_custom_call.1} parent=55 // pred_check
          %p365 = pneg %p277
        $region62: #{tpu_custom_call.1} parent=55 // pred_check_branch
          %367 = sbr.rel (%p365) target = $region64
        $region63: #{tpu_custom_call.1} parent=55 // pred_region
          %p368 = scmp.lt.s32.totalorder %s21, 1
          %s369 = scalar_select %p368, %s21, 1
          %s370 = smul.addr %s369, 4
          %s371 = smul.addr %s370, 8
          %s372 = scalar_lea.vmem %s11, %s371
        $region64: #{tpu_custom_call.1} parent=55 // pred_fallthru
          _
      $region56: #{tpu_custom_call.1} parent=5 // pred_fallthru
        _
      %p373 = scmp.le.s32.totalorder 1, %s21
      %p374 = scmp.lt.s32.totalorder %s21, 3
      %p375 = pnand %p373, %p374
      %p376 = pneg %p375
      // Predicated region
      $region65: #{tpu_custom_call.1} parent=5 // pred_check
        _
      $region66: #{tpu_custom_call.1} parent=5 // pred_check_branch
        %378 = sbr.rel (%p375) target = $region68
      $region67: #{tpu_custom_call.1} parent=5 // pred_region
        %s379 = ssub.s32 %s21, 1
        %p380 = scmp.lt.s32.totalorder %s26, 1
        %s381 = scalar_select %p380, %s26, 1
        %s382 = smul.addr %s381, 8
        %s383 = scalar_lea.vmem %s0, %s382
        %p384 = pneg %p47
        %p385 = pneg %p44
        %p386 = pneg %p68
        %p387 = pneg %p65
        %p388 = pneg %p89
        %p389 = pneg %p86
        %p390 = pneg %p110
        %p391 = pneg %p107
        %p392 = pneg %p131
        %p393 = pneg %p128
        %p394 = pneg %p152
        %p395 = pneg %p149
        %p396 = pneg %p173
        %p397 = pneg %p170
        %p398 = pneg %p194
        %p399 = pneg %p191
        %p400 = pneg %p215
        %p401 = pneg %p212
        %p402 = pneg %p236
        %p403 = pneg %p233
        %p404 = pneg %p257
        %p405 = pneg %p254
        %p406 = scmp.lt.s32.totalorder %s26, 1
        %s407 = scalar_select %p406, %s26, 1
        %s408 = smul.addr %s407, 4
        %s409 = smul.addr %s408, 8
        %s410 = scalar_lea.vmem %s11, %s409
        %p411 = pneg %p283
        %p412 = pneg %p280
        %p413 = pneg %p309
        %p414 = pneg %p306
        %s415 = sand.u32 %s296, 1
        %s416 = scalar_lea.sflag [#allocation3], %s415
        %s417 = sand.u32 %s296, 1
        %s418 = smul.addr %s417, 8
        %s419 = scalar_lea.vmem [#allocation2], %s418
        %p420 = scmp.lt.s32.totalorder %s26, 1
        %s421 = scalar_select %p420, %s26, 1
        %s422 = smul.addr %s421, 8
        %s423 = scalar_lea.vmem %s0, %s422
        %p424 = scmp.lt.s32.totalorder %s26, 1
        %s425 = scalar_select %p424, %s26, 1
        %s426 = smul.addr %s425, 4
        %s427 = smul.addr %s426, 8
        %s428 = scalar_lea.vmem %s11, %s427
        %v429 = vld [vmem:[%s423] sm:$0xff]
        %v430 = vld [vmem:[%s1] sm:$0xff]
        %v431 = vld [vmem:[%s1 + $0x8] sm:$0xff]
        %v432 = vld [vmem:[%s1 + $0x10] sm:$0xff]
        %v433 = vld [vmem:[%s1 + $0x18] sm:$0xff]
        %v434 = vld [vmem:[%s1 + $0x20] sm:$0xff]
        %v435 = vld [vmem:[%s1 + $0x28] sm:$0xff]
        %v436 = vld [vmem:[%s1 + $0x30] sm:$0xff]
        %v437 = vld [vmem:[%s1 + $0x38] sm:$0xff]
        %v438 = vld [vmem:[%s1 + $0x40] sm:$0xff]
        %v439 = vld [vmem:[%s1 + $0x48] sm:$0xff]
        %v440 = vld [vmem:[%s1 + $0x50] sm:$0xff]
        %v441 = vld [vmem:[%s1 + $0x58] sm:$0xff]
        %v442 = vld [vmem:[%s1 + $0x60] sm:$0xff]
        %v443 = vld [vmem:[%s1 + $0x68] sm:$0xff]
        %v444 = vld [vmem:[%s1 + $0x70] sm:$0xff]
        %v445 = vld [vmem:[%s1 + $0x78] sm:$0xff]
        %v446 = vld [vmem:[%s2] sm:$0x1]
        %v447 = vld [vmem:[%s2 + $0x1] sm:$0x1]
        %v448 = vld [vmem:[%s2 + $0x2] sm:$0x1]
        %v449 = vld [vmem:[%s2 + $0x3] sm:$0x1]
        %v454 = vlaneseq
        %v455 = vshrl.u32 %v454, 7
        %v456 = vsub.s32 0, %v455
        %v457 = vrot.slane %v446, %v456
        %v458 = vlaneseq
        %v459 = vshrl.u32 %v458, 7
        %v460 = vsub.s32 0, %v459
        %v461 = vrot.slane %v447, %v460
        %v462 = vlaneseq
        %v463 = vshrl.u32 %v462, 7
        %v464 = vsub.s32 0, %v463
        %v465 = vrot.slane %v448, %v464
        %v466 = vlaneseq
        %v467 = vshrl.u32 %v466, 7
        %v468 = vsub.s32 0, %v467
        %v469 = vrot.slane %v449, %v468
        %vm474 = vcmask 261120
        %v476 = vsel %vm474, %v429, 0
        %478 = vmatprep.subr.mxu0 0.0
        %479 = vmatpush1.msra.mxu0 %v430
        %480 = vmatprep.subr.mxu0 0.0
        %481 = vmatpush1.msra.mxu0 %v431
        %482 = vmatprep.subr.mxu0 0.0
        %483 = vmatpush1.msra.mxu0 %v432
        %484 = vmatprep.subr.mxu0 0.0
        %485 = vmatpush1.msra.mxu0 %v433
        %486 = vmatprep.subr.mxu0 0.0
        %487 = vmatpush1.msra.mxu0 0.0
        %488 = vmatprep.subr.mxu0 0.0
        %489 = vmatpush1.msra.mxu0 0.0
        %490 = vmatprep.subr.mxu0 0.0
        %491 = vmatpush1.msra.mxu0 0.0
        %492 = vmatprep.subr.mxu0 0.0
        %493 = vmatpush1.msra.mxu0 0.0
        %494 = vmatprep.subr.mxu0 0.0
        %495 = vmatpush1.msra.mxu0 0.0
        %496 = vmatprep.subr.mxu0 0.0
        %497 = vmatpush1.msra.mxu0 0.0
        %498 = vmatprep.subr.mxu0 0.0
        %499 = vmatpush1.msra.mxu0 0.0
        %500 = vmatprep.subr.mxu0 0.0
        %501 = vmatpush1.msra.mxu0 0.0
        %502 = vmatprep.subr.mxu0 0.0
        %503 = vmatpush1.msra.mxu0 0.0
        %504 = vmatprep.subr.mxu0 0.0
        %505 = vmatpush1.msra.mxu0 0.0
        %506 = vmatprep.subr.mxu0 0.0
        %507 = vmatpush1.msra.mxu0 0.0
        %508 = vmatprep.subr.mxu0 0.0
        %509 = vmatpush1.msra.mxu0 0.0
        %510 = vmatprep.subr.mxu0 0.0
        %511 = vmatpush1.msra.mxu0 0.0
        %512 = vmatprep.subr.mxu0 0.0
        %513 = vmatpush1.msra.mxu0 0.0
        %514 = vmatprep.subr.mxu0 0.0
        %515 = vmatpush1.msra.mxu0 0.0
        %516 = vmatprep.subr.mxu0 0.0
        %517 = vmatpush1.msra.mxu0 0.0
        %518 = vmatprep.subr.mxu0 0.0
        %519 = vmatpush1.msra.mxu0 0.0
        %520 = vmatprep.subr.mxu0 0.0
        %521 = vmatpush1.msra.mxu0 0.0
        %522 = vmatprep.subr.mxu0 0.0
        %523 = vmatpush1.msra.mxu0 0.0
        %524 = vmatprep.subr.mxu0 0.0
        %525 = vmatpush1.msra.mxu0 0.0
        %526 = vmatprep.subr.mxu0 0.0
        %527 = vmatpush1.msra.mxu0 0.0
        %528 = vmatprep.subr.mxu0 0.0
        %529 = vmatpush1.msra.mxu0 0.0
        %530 = vmatprep.subr.mxu0 0.0
        %531 = vmatpush1.msra.mxu0 0.0
        %532 = vmatprep.subr.mxu0 0.0
        %533 = vmatpush1.msra.mxu0 0.0
        %534 = vmatprep.subr.mxu0 0.0
        %535 = vmatpush1.msra.mxu0 0.0
        %536 = vmatprep.subr.mxu0 0.0
        %537 = vmatpush1.msra.mxu0 0.0
        %538 = vmatprep.subr.mxu0 0.0
        %539 = vmatpush1.msra.mxu0 0.0
        %540 = vmatprep.subr.mxu0 0.0
        %541 = vmatpush1.msra.mxu0 0.0
        %542 = vmatprep.mubr.f32.mxu0 0.0
        %543 = vmatmul.mubr.f32.gmra.mrb[0].mxu0 %v476
        %v544 = vpop.f32.mrb[0].mxu0
        %v545 = vadd.f32 %v457, %v544
        %v546 = vpop.f32.mrb[0].mxu0
        %547 = vdwg.mxu0
        %548 = vmatprep.subr.mxu0 0.0
        %549 = vmatpush1.msra.mxu0 %v434
        %550 = vmatprep.subr.mxu0 0.0
        %551 = vmatpush1.msra.mxu0 %v435
        %552 = vmatprep.subr.mxu0 0.0
        %553 = vmatpush1.msra.mxu0 %v436
        %554 = vmatprep.subr.mxu0 0.0
        %555 = vmatpush1.msra.mxu0 %v437
        %556 = vmatprep.subr.mxu0 0.0
        %557 = vmatpush1.msra.mxu0 0.0
        %558 = vmatprep.subr.mxu0 0.0
        %559 = vmatpush1.msra.mxu0 0.0
        %560 = vmatprep.subr.mxu0 0.0
        %561 = vmatpush1.msra.mxu0 0.0
        %562 = vmatprep.subr.mxu0 0.0
        %563 = vmatpush1.msra.mxu0 0.0
        %564 = vmatprep.subr.mxu0 0.0
        %565 = vmatpush1.msra.mxu0 0.0
        %566 = vmatprep.subr.mxu0 0.0
        %567 = vmatpush1.msra.mxu0 0.0
        %568 = vmatprep.subr.mxu0 0.0
        %569 = vmatpush1.msra.mxu0 0.0
        %570 = vmatprep.subr.mxu0 0.0
        %571 = vmatpush1.msra.mxu0 0.0
        %572 = vmatprep.subr.mxu0 0.0
        %573 = vmatpush1.msra.mxu0 0.0
        %574 = vmatprep.subr.mxu0 0.0
        %575 = vmatpush1.msra.mxu0 0.0
        %576 = vmatprep.subr.mxu0 0.0
        %577 = vmatpush1.msra.mxu0 0.0
        %578 = vmatprep.subr.mxu0 0.0
        %579 = vmatpush1.msra.mxu0 0.0
        %580 = vmatprep.subr.mxu0 0.0
        %581 = vmatpush1.msra.mxu0 0.0
        %582 = vmatprep.subr.mxu0 0.0
        %583 = vmatpush1.msra.mxu0 0.0
        %584 = vmatprep.subr.mxu0 0.0
        %585 = vmatpush1.msra.mxu0 0.0
        %586 = vmatprep.subr.mxu0 0.0
        %587 = vmatpush1.msra.mxu0 0.0
        %588 = vmatprep.subr.mxu0 0.0
        %589 = vmatpush1.msra.mxu0 0.0
        %590 = vmatprep.subr.mxu0 0.0
        %591 = vmatpush1.msra.mxu0 0.0
        %592 = vmatprep.subr.mxu0 0.0
        %593 = vmatpush1.msra.mxu0 0.0
        %594 = vmatprep.subr.mxu0 0.0
        %595 = vmatpush1.msra.mxu0 0.0
        %596 = vmatprep.subr.mxu0 0.0
        %597 = vmatpush1.msra.mxu0 0.0
        %598 = vmatprep.subr.mxu0 0.0
        %599 = vmatpush1.msra.mxu0 0.0
        %600 = vmatprep.subr.mxu0 0.0
        %601 = vmatpush1.msra.mxu0 0.0
        %602 = vmatprep.subr.mxu0 0.0
        %603 = vmatpush1.msra.mxu0 0.0
        %604 = vmatprep.subr.mxu0 0.0
        %605 = vmatpush1.msra.mxu0 0.0
        %606 = vmatprep.subr.mxu0 0.0
        %607 = vmatpush1.msra.mxu0 0.0
        %608 = vmatprep.subr.mxu0 0.0
        %609 = vmatpush1.msra.mxu0 0.0
        %610 = vmatprep.subr.mxu0 0.0
        %611 = vmatpush1.msra.mxu0 0.0
        %612 = vmatprep.mubr.f32.mxu0 0.0
        %613 = vmatmul.mubr.f32.gmra.mrb[0].mxu0 %v476
        %v614 = vpop.f32.mrb[0].mxu0
        %v615 = vadd.f32 %v461, %v614
        %v616 = vpop.f32.mrb[0].mxu0
        %617 = vdwg.mxu0
        %618 = vmatprep.subr.mxu0 0.0
        %619 = vmatpush1.msra.mxu0 %v438
        %620 = vmatprep.subr.mxu0 0.0
        %621 = vmatpush1.msra.mxu0 %v439
        %622 = vmatprep.subr.mxu0 0.0
        %623 = vmatpush1.msra.mxu0 %v440
        %624 = vmatprep.subr.mxu0 0.0
        %625 = vmatpush1.msra.mxu0 %v441
        %626 = vmatprep.subr.mxu0 0.0
        %627 = vmatpush1.msra.mxu0 0.0
        %628 = vmatprep.subr.mxu0 0.0
        %629 = vmatpush1.msra.mxu0 0.0
        %630 = vmatprep.subr.mxu0 0.0
        %631 = vmatpush1.msra.mxu0 0.0
        %632 = vmatprep.subr.mxu0 0.0
        %633 = vmatpush1.msra.mxu0 0.0
        %634 = vmatprep.subr.mxu0 0.0
        %635 = vmatpush1.msra.mxu0 0.0
        %636 = vmatprep.subr.mxu0 0.0
        %637 = vmatpush1.msra.mxu0 0.0
        %638 = vmatprep.subr.mxu0 0.0
        %639 = vmatpush1.msra.mxu0 0.0
        %640 = vmatprep.subr.mxu0 0.0
        %641 = vmatpush1.msra.mxu0 0.0
        %642 = vmatprep.subr.mxu0 0.0
        %643 = vmatpush1.msra.mxu0 0.0
        %644 = vmatprep.subr.mxu0 0.0
        %645 = vmatpush1.msra.mxu0 0.0
        %646 = vmatprep.subr.mxu0 0.0
        %647 = vmatpush1.msra.mxu0 0.0
        %648 = vmatprep.subr.mxu0 0.0
        %649 = vmatpush1.msra.mxu0 0.0
        %650 = vmatprep.subr.mxu0 0.0
        %651 = vmatpush1.msra.mxu0 0.0
        %652 = vmatprep.subr.mxu0 0.0
        %653 = vmatpush1.msra.mxu0 0.0
        %654 = vmatprep.subr.mxu0 0.0
        %655 = vmatpush1.msra.mxu0 0.0
        %656 = vmatprep.subr.mxu0 0.0
        %657 = vmatpush1.msra.mxu0 0.0
        %658 = vmatprep.subr.mxu0 0.0
        %659 = vmatpush1.msra.mxu0 0.0
        %660 = vmatprep.subr.mxu0 0.0
        %661 = vmatpush1.msra.mxu0 0.0
        %662 = vmatprep.subr.mxu0 0.0
        %663 = vmatpush1.msra.mxu0 0.0
        %664 = vmatprep.subr.mxu0 0.0
        %665 = vmatpush1.msra.mxu0 0.0
        %666 = vmatprep.subr.mxu0 0.0
        %667 = vmatpush1.msra.mxu0 0.0
        %668 = vmatprep.subr.mxu0 0.0
        %669 = vmatpush1.msra.mxu0 0.0
        %670 = vmatprep.subr.mxu0 0.0
        %671 = vmatpush1.msra.mxu0 0.0
        %672 = vmatprep.subr.mxu0 0.0
        %673 = vmatpush1.msra.mxu0 0.0
        %674 = vmatprep.subr.mxu0 0.0
        %675 = vmatpush1.msra.mxu0 0.0
        %676 = vmatprep.subr.mxu0 0.0
        %677 = vmatpush1.msra.mxu0 0.0
        %678 = vmatprep.subr.mxu0 0.0
        %679 = vmatpush1.msra.mxu0 0.0
        %680 = vmatprep.subr.mxu0 0.0
        %681 = vmatpush1.msra.mxu0 0.0
        %682 = vmatprep.mubr.f32.mxu0 0.0
        %683 = vmatmul.mubr.f32.gmra.mrb[0].mxu0 %v476
        %v684 = vpop.f32.mrb[0].mxu0
        %v685 = vadd.f32 %v465, %v684
        %v686 = vpop.f32.mrb[0].mxu0
        %687 = vdwg.mxu0
        %688 = vmatprep.subr.mxu0 0.0
        %689 = vmatpush1.msra.mxu0 %v442
        %690 = vmatprep.subr.mxu0 0.0
        %691 = vmatpush1.msra.mxu0 %v443
        %692 = vmatprep.subr.mxu0 0.0
        %693 = vmatpush1.msra.mxu0 %v444
        %694 = vmatprep.subr.mxu0 0.0
        %695 = vmatpush1.msra.mxu0 %v445
        %696 = vmatprep.subr.mxu0 0.0
        %697 = vmatpush1.msra.mxu0 0.0
        %698 = vmatprep.subr.mxu0 0.0
        %699 = vmatpush1.msra.mxu0 0.0
        %700 = vmatprep.subr.mxu0 0.0
        %701 = vmatpush1.msra.mxu0 0.0
        %702 = vmatprep.subr.mxu0 0.0
        %703 = vmatpush1.msra.mxu0 0.0
        %704 = vmatprep.subr.mxu0 0.0
        %705 = vmatpush1.msra.mxu0 0.0
        %706 = vmatprep.subr.mxu0 0.0
        %707 = vmatpush1.msra.mxu0 0.0
        %708 = vmatprep.subr.mxu0 0.0
        %709 = vmatpush1.msra.mxu0 0.0
        %710 = vmatprep.subr.mxu0 0.0
        %711 = vmatpush1.msra.mxu0 0.0
        %712 = vmatprep.subr.mxu0 0.0
        %713 = vmatpush1.msra.mxu0 0.0
        %714 = vmatprep.subr.mxu0 0.0
        %715 = vmatpush1.msra.mxu0 0.0
        %716 = vmatprep.subr.mxu0 0.0
        %717 = vmatpush1.msra.mxu0 0.0
        %718 = vmatprep.subr.mxu0 0.0
        %719 = vmatpush1.msra.mxu0 0.0
        %720 = vmatprep.subr.mxu0 0.0
        %721 = vmatpush1.msra.mxu0 0.0
        %722 = vmatprep.subr.mxu0 0.0
        %723 = vmatpush1.msra.mxu0 0.0
        %724 = vmatprep.subr.mxu0 0.0
        %725 = vmatpush1.msra.mxu0 0.0
        %726 = vmatprep.subr.mxu0 0.0
        %727 = vmatpush1.msra.mxu0 0.0
        %728 = vmatprep.subr.mxu0 0.0
        %729 = vmatpush1.msra.mxu0 0.0
        %730 = vmatprep.subr.mxu0 0.0
        %731 = vmatpush1.msra.mxu0 0.0
        %732 = vmatprep.subr.mxu0 0.0
        %733 = vmatpush1.msra.mxu0 0.0
        %734 = vmatprep.subr.mxu0 0.0
        %735 = vmatpush1.msra.mxu0 0.0
        %736 = vmatprep.subr.mxu0 0.0
        %737 = vmatpush1.msra.mxu0 0.0
        %738 = vmatprep.subr.mxu0 0.0
        %739 = vmatpush1.msra.mxu0 0.0
        %740 = vmatprep.subr.mxu0 0.0
        %741 = vmatpush1.msra.mxu0 0.0
        %742 = vmatprep.subr.mxu0 0.0
        %743 = vmatpush1.msra.mxu0 0.0
        %744 = vmatprep.subr.mxu0 0.0
        %745 = vmatpush1.msra.mxu0 0.0
        %746 = vmatprep.subr.mxu0 0.0
        %747 = vmatpush1.msra.mxu0 0.0
        %748 = vmatprep.subr.mxu0 0.0
        %749 = vmatpush1.msra.mxu0 0.0
        %750 = vmatprep.subr.mxu0 0.0
        %751 = vmatpush1.msra.mxu0 0.0
        %752 = vmatprep.mubr.f32.mxu0 0.0
        %753 = vmatmul.mubr.f32.gmra.mrb[0].mxu0 %v476
        %v754 = vpop.f32.mrb[0].mxu0
        %v755 = vadd.f32 %v469, %v754
        %v756 = vpop.f32.mrb[0].mxu0
        %757 = vdwg.mxu0
        %v758 = vld [vmem:[%s3] sm:$0xff]
        %v759 = vld [vmem:[%s3 + $0x8] sm:$0xff]
        %v760 = vld [vmem:[%s3 + $0x10] sm:$0xff]
        %v761 = vld [vmem:[%s3 + $0x18] sm:$0xff]
        %v762 = vld [vmem:[%s3 + $0x20] sm:$0xff]
        %v763 = vld [vmem:[%s3 + $0x28] sm:$0xff]
        %v764 = vld [vmem:[%s3 + $0x30] sm:$0xff]
        %v765 = vld [vmem:[%s3 + $0x38] sm:$0xff]
        %v766 = vld [vmem:[%s3 + $0x40] sm:$0xff]
        %v767 = vld [vmem:[%s3 + $0x48] sm:$0xff]
        %v768 = vld [vmem:[%s3 + $0x50] sm:$0xff]
        %v769 = vld [vmem:[%s3 + $0x58] sm:$0xff]
        %v770 = vld [vmem:[%s3 + $0x60] sm:$0xff]
        %v771 = vld [vmem:[%s3 + $0x68] sm:$0xff]
        %v772 = vld [vmem:[%s3 + $0x70] sm:$0xff]
        %v773 = vld [vmem:[%s3 + $0x78] sm:$0xff]
        %v774 = vld [vmem:[%s4] sm:$0x1]
        %v775 = vld [vmem:[%s4 + $0x1] sm:$0x1]
        %v776 = vld [vmem:[%s4 + $0x2] sm:$0x1]
        %v777 = vld [vmem:[%s4 + $0x3] sm:$0x1]
        %v782 = vlaneseq
        %v783 = vshrl.u32 %v782, 7
        %v784 = vsub.s32 0, %v783
        %v785 = vrot.slane %v774, %v784
        %v786 = vlaneseq
        %v787 = vshrl.u32 %v786, 7
        %v788 = vsub.s32 0, %v787
        %v789 = vrot.slane %v775, %v788
        %v790 = vlaneseq
        %v791 = vshrl.u32 %v790, 7
        %v792 = vsub.s32 0, %v791
        %v793 = vrot.slane %v776, %v792
        %v794 = vlaneseq
        %v795 = vshrl.u32 %v794, 7
        %v796 = vsub.s32 0, %v795
        %v797 = vrot.slane %v777, %v796
        %802 = vmatprep.subr.mxu0 0.0
        %803 = vmatpush1.msra.mxu0 %v758
        %804 = vmatprep.subr.mxu0 0.0
        %805 = vmatpush1.msra.mxu0 %v759
        %806 = vmatprep.subr.mxu0 0.0
        %807 = vmatpush1.msra.mxu0 %v760
        %808 = vmatprep.subr.mxu0 0.0
        %809 = vmatpush1.msra.mxu0 %v761
        %810 = vmatprep.subr.mxu0 0.0
        %811 = vmatpush1.msra.mxu0 0.0
        %812 = vmatprep.subr.mxu0 0.0
        %813 = vmatpush1.msra.mxu0 0.0
        %814 = vmatprep.subr.mxu0 0.0
        %815 = vmatpush1.msra.mxu0 0.0
        %816 = vmatprep.subr.mxu0 0.0
        %817 = vmatpush1.msra.mxu0 0.0
        %818 = vmatprep.subr.mxu0 0.0
        %819 = vmatpush1.msra.mxu0 0.0
        %820 = vmatprep.subr.mxu0 0.0
        %821 = vmatpush1.msra.mxu0 0.0
        %822 = vmatprep.subr.mxu0 0.0
        %823 = vmatpush1.msra.mxu0 0.0
        %824 = vmatprep.subr.mxu0 0.0
        %825 = vmatpush1.msra.mxu0 0.0
        %826 = vmatprep.subr.mxu0 0.0
        %827 = vmatpush1.msra.mxu0 0.0
        %828 = vmatprep.subr.mxu0 0.0
        %829 = vmatpush1.msra.mxu0 0.0
        %830 = vmatprep.subr.mxu0 0.0
        %831 = vmatpush1.msra.mxu0 0.0
        %832 = vmatprep.subr.mxu0 0.0
        %833 = vmatpush1.msra.mxu0 0.0
        %834 = vmatprep.subr.mxu0 0.0
        %835 = vmatpush1.msra.mxu0 0.0
        %836 = vmatprep.subr.mxu0 0.0
        %837 = vmatpush1.msra.mxu0 0.0
        %838 = vmatprep.subr.mxu0 0.0
        %839 = vmatpush1.msra.mxu0 0.0
        %840 = vmatprep.subr.mxu0 0.0
        %841 = vmatpush1.msra.mxu0 0.0
        %842 = vmatprep.subr.mxu0 0.0
        %843 = vmatpush1.msra.mxu0 0.0
        %844 = vmatprep.subr.mxu0 0.0
        %845 = vmatpush1.msra.mxu0 0.0
        %846 = vmatprep.subr.mxu0 0.0
        %847 = vmatpush1.msra.mxu0 0.0
        %848 = vmatprep.subr.mxu0 0.0
        %849 = vmatpush1.msra.mxu0 0.0
        %850 = vmatprep.subr.mxu0 0.0
        %851 = vmatpush1.msra.mxu0 0.0
        %852 = vmatprep.subr.mxu0 0.0
        %853 = vmatpush1.msra.mxu0 0.0
        %854 = vmatprep.subr.mxu0 0.0
        %855 = vmatpush1.msra.mxu0 0.0
        %856 = vmatprep.subr.mxu0 0.0
        %857 = vmatpush1.msra.mxu0 0.0
        %858 = vmatprep.subr.mxu0 0.0
        %859 = vmatpush1.msra.mxu0 0.0
        %860 = vmatprep.subr.mxu0 0.0
        %861 = vmatpush1.msra.mxu0 0.0
        %862 = vmatprep.subr.mxu0 0.0
        %863 = vmatpush1.msra.mxu0 0.0
        %864 = vmatprep.subr.mxu0 0.0
        %865 = vmatpush1.msra.mxu0 0.0
        %866 = vmatprep.mubr.f32.mxu0 0.0
        %867 = vmatmul.mubr.f32.gmra.mrb[0].mxu0 %v476
        %v868 = vpop.f32.mrb[0].mxu0
        %v869 = vadd.f32 %v785, %v868
        %v870 = vpop.f32.mrb[0].mxu0
        %871 = vdwg.mxu0
        %872 = vmatprep.subr.mxu0 0.0
        %873 = vmatpush1.msra.mxu0 %v762
        %874 = vmatprep.subr.mxu0 0.0
        %875 = vmatpush1.msra.mxu0 %v763
        %876 = vmatprep.subr.mxu0 0.0
        %877 = vmatpush1.msra.mxu0 %v764
        %878 = vmatprep.subr.mxu0 0.0
        %879 = vmatpush1.msra.mxu0 %v765
        %880 = vmatprep.subr.mxu0 0.0
        %881 = vmatpush1.msra.mxu0 0.0
        %882 = vmatprep.subr.mxu0 0.0
        %883 = vmatpush1.msra.mxu0 0.0
        %884 = vmatprep.subr.mxu0 0.0
        %885 = vmatpush1.msra.mxu0 0.0
        %886 = vmatprep.subr.mxu0 0.0
        %887 = vmatpush1.msra.mxu0 0.0
        %888 = vmatprep.subr.mxu0 0.0
        %889 = vmatpush1.msra.mxu0 0.0
        %890 = vmatprep.subr.mxu0 0.0
        %891 = vmatpush1.msra.mxu0 0.0
        %892 = vmatprep.subr.mxu0 0.0
        %893 = vmatpush1.msra.mxu0 0.0
        %894 = vmatprep.subr.mxu0 0.0
        %895 = vmatpush1.msra.mxu0 0.0
        %896 = vmatprep.subr.mxu0 0.0
        %897 = vmatpush1.msra.mxu0 0.0
        %898 = vmatprep.subr.mxu0 0.0
        %899 = vmatpush1.msra.mxu0 0.0
        %900 = vmatprep.subr.mxu0 0.0
        %901 = vmatpush1.msra.mxu0 0.0
        %902 = vmatprep.subr.mxu0 0.0
        %903 = vmatpush1.msra.mxu0 0.0
        %904 = vmatprep.subr.mxu0 0.0
        %905 = vmatpush1.msra.mxu0 0.0
        %906 = vmatprep.subr.mxu0 0.0
        %907 = vmatpush1.msra.mxu0 0.0
        %908 = vmatprep.subr.mxu0 0.0
        %909 = vmatpush1.msra.mxu0 0.0
        %910 = vmatprep.subr.mxu0 0.0
        %911 = vmatpush1.msra.mxu0 0.0
        %912 = vmatprep.subr.mxu0 0.0
        %913 = vmatpush1.msra.mxu0 0.0
        %914 = vmatprep.subr.mxu0 0.0
        %915 = vmatpush1.msra.mxu0 0.0
        %916 = vmatprep.subr.mxu0 0.0
        %917 = vmatpush1.msra.mxu0 0.0
        %918 = vmatprep.subr.mxu0 0.0
        %919 = vmatpush1.msra.mxu0 0.0
        %920 = vmatprep.subr.mxu0 0.0
        %921 = vmatpush1.msra.mxu0 0.0
        %922 = vmatprep.subr.mxu0 0.0
        %923 = vmatpush1.msra.mxu0 0.0
        %924 = vmatprep.subr.mxu0 0.0
        %925 = vmatpush1.msra.mxu0 0.0
        %926 = vmatprep.subr.mxu0 0.0
        %927 = vmatpush1.msra.mxu0 0.0
        %928 = vmatprep.subr.mxu0 0.0
        %929 = vmatpush1.msra.mxu0 0.0
        %930 = vmatprep.subr.mxu0 0.0
        %931 = vmatpush1.msra.mxu0 0.0
        %932 = vmatprep.subr.mxu0 0.0
        %933 = vmatpush1.msra.mxu0 0.0
        %934 = vmatprep.subr.mxu0 0.0
        %935 = vmatpush1.msra.mxu0 0.0
        %936 = vmatprep.mubr.f32.mxu0 0.0
        %937 = vmatmul.mubr.f32.gmra.mrb[0].mxu0 %v476
        %v938 = vpop.f32.mrb[0].mxu0
        %v939 = vadd.f32 %v789, %v938
        %v940 = vpop.f32.mrb[0].mxu0
        %941 = vdwg.mxu0
        %942 = vmatprep.subr.mxu0 0.0
        %943 = vmatpush1.msra.mxu0 %v766
        %944 = vmatprep.subr.mxu0 0.0
        %945 = vmatpush1.msra.mxu0 %v767
        %946 = vmatprep.subr.mxu0 0.0
        %947 = vmatpush1.msra.mxu0 %v768
        %948 = vmatprep.subr.mxu0 0.0
        %949 = vmatpush1.msra.mxu0 %v769
        %950 = vmatprep.subr.mxu0 0.0
        %951 = vmatpush1.msra.mxu0 0.0
        %952 = vmatprep.subr.mxu0 0.0
        %953 = vmatpush1.msra.mxu0 0.0
        %954 = vmatprep.subr.mxu0 0.0
        %955 = vmatpush1.msra.mxu0 0.0
        %956 = vmatprep.subr.mxu0 0.0
        %957 = vmatpush1.msra.mxu0 0.0
        %958 = vmatprep.subr.mxu0 0.0
        %959 = vmatpush1.msra.mxu0 0.0
        %960 = vmatprep.subr.mxu0 0.0
        %961 = vmatpush1.msra.mxu0 0.0
        %962 = vmatprep.subr.mxu0 0.0
        %963 = vmatpush1.msra.mxu0 0.0
        %964 = vmatprep.subr.mxu0 0.0
        %965 = vmatpush1.msra.mxu0 0.0
        %966 = vmatprep.subr.mxu0 0.0
        %967 = vmatpush1.msra.mxu0 0.0
        %968 = vmatprep.subr.mxu0 0.0
        %969 = vmatpush1.msra.mxu0 0.0
        %970 = vmatprep.subr.mxu0 0.0
        %971 = vmatpush1.msra.mxu0 0.0
        %972 = vmatprep.subr.mxu0 0.0
        %973 = vmatpush1.msra.mxu0 0.0
        %974 = vmatprep.subr.mxu0 0.0
        %975 = vmatpush1.msra.mxu0 0.0
        %976 = vmatprep.subr.mxu0 0.0
        %977 = vmatpush1.msra.mxu0 0.0
        %978 = vmatprep.subr.mxu0 0.0
        %979 = vmatpush1.msra.mxu0 0.0
        %980 = vmatprep.subr.mxu0 0.0
        %981 = vmatpush1.msra.mxu0 0.0
        %982 = vmatprep.subr.mxu0 0.0
        %983 = vmatpush1.msra.mxu0 0.0
        %984 = vmatprep.subr.mxu0 0.0
        %985 = vmatpush1.msra.mxu0 0.0
        %986 = vmatprep.subr.mxu0 0.0
        %987 = vmatpush1.msra.mxu0 0.0
        %988 = vmatprep.subr.mxu0 0.0
        %989 = vmatpush1.msra.mxu0 0.0
        %990 = vmatprep.subr.mxu0 0.0
        %991 = vmatpush1.msra.mxu0 0.0
        %992 = vmatprep.subr.mxu0 0.0
        %993 = vmatpush1.msra.mxu0 0.0
        %994 = vmatprep.subr.mxu0 0.0
        %995 = vmatpush1.msra.mxu0 0.0
        %996 = vmatprep.subr.mxu0 0.0
        %997 = vmatpush1.msra.mxu0 0.0
        %998 = vmatprep.subr.mxu0 0.0
        %999 = vmatpush1.msra.mxu0 0.0
        %1000 = vmatprep.subr.mxu0 0.0
        %1001 = vmatpush1.msra.mxu0 0.0
        %1002 = vmatprep.subr.mxu0 0.0
        %1003 = vmatpush1.msra.mxu0 0.0
        %1004 = vmatprep.subr.mxu0 0.0
        %1005 = vmatpush1.msra.mxu0 0.0
        %1006 = vmatprep.mubr.f32.mxu0 0.0
        %1007 = vmatmul.mubr.f32.gmra.mrb[0].mxu0 %v476
        %v1008 = vpop.f32.mrb[0].mxu0
        %v1009 = vadd.f32 %v793, %v1008
        %v1010 = vpop.f32.mrb[0].mxu0
        %1011 = vdwg.mxu0
        %1012 = vmatprep.subr.mxu0 0.0
        %1013 = vmatpush1.msra.mxu0 %v770
        %1014 = vmatprep.subr.mxu0 0.0
        %1015 = vmatpush1.msra.mxu0 %v771
        %1016 = vmatprep.subr.mxu0 0.0
        %1017 = vmatpush1.msra.mxu0 %v772
        %1018 = vmatprep.subr.mxu0 0.0
        %1019 = vmatpush1.msra.mxu0 %v773
        %1020 = vmatprep.subr.mxu0 0.0
        %1021 = vmatpush1.msra.mxu0 0.0
        %1022 = vmatprep.subr.mxu0 0.0
        %1023 = vmatpush1.msra.mxu0 0.0
        %1024 = vmatprep.subr.mxu0 0.0
        %1025 = vmatpush1.msra.mxu0 0.0
        %1026 = vmatprep.subr.mxu0 0.0
        %1027 = vmatpush1.msra.mxu0 0.0
        %1028 = vmatprep.subr.mxu0 0.0
        %1029 = vmatpush1.msra.mxu0 0.0
        %1030 = vmatprep.subr.mxu0 0.0
        %1031 = vmatpush1.msra.mxu0 0.0
        %1032 = vmatprep.subr.mxu0 0.0
        %1033 = vmatpush1.msra.mxu0 0.0
        %1034 = vmatprep.subr.mxu0 0.0
        %1035 = vmatpush1.msra.mxu0 0.0
        %1036 = vmatprep.subr.mxu0 0.0
        %1037 = vmatpush1.msra.mxu0 0.0
        %1038 = vmatprep.subr.mxu0 0.0
        %1039 = vmatpush1.msra.mxu0 0.0
        %1040 = vmatprep.subr.mxu0 0.0
        %1041 = vmatpush1.msra.mxu0 0.0
        %1042 = vmatprep.subr.mxu0 0.0
        %1043 = vmatpush1.msra.mxu0 0.0
        %1044 = vmatprep.subr.mxu0 0.0
        %1045 = vmatpush1.msra.mxu0 0.0
        %1046 = vmatprep.subr.mxu0 0.0
        %1047 = vmatpush1.msra.mxu0 0.0
        %1048 = vmatprep.subr.mxu0 0.0
        %1049 = vmatpush1.msra.mxu0 0.0
        %1050 = vmatprep.subr.mxu0 0.0
        %1051 = vmatpush1.msra.mxu0 0.0
        %1052 = vmatprep.subr.mxu0 0.0
        %1053 = vmatpush1.msra.mxu0 0.0
        %1054 = vmatprep.subr.mxu0 0.0
        %1055 = vmatpush1.msra.mxu0 0.0
        %1056 = vmatprep.subr.mxu0 0.0
        %1057 = vmatpush1.msra.mxu0 0.0
        %1058 = vmatprep.subr.mxu0 0.0
        %1059 = vmatpush1.msra.mxu0 0.0
        %1060 = vmatprep.subr.mxu0 0.0
        %1061 = vmatpush1.msra.mxu0 0.0
        %1062 = vmatprep.subr.mxu0 0.0
        %1063 = vmatpush1.msra.mxu0 0.0
        %1064 = vmatprep.subr.mxu0 0.0
        %1065 = vmatpush1.msra.mxu0 0.0
        %1066 = vmatprep.subr.mxu0 0.0
        %1067 = vmatpush1.msra.mxu0 0.0
        %1068 = vmatprep.subr.mxu0 0.0
        %1069 = vmatpush1.msra.mxu0 0.0
        %1070 = vmatprep.subr.mxu0 0.0
        %1071 = vmatpush1.msra.mxu0 0.0
        %1072 = vmatprep.subr.mxu0 0.0
        %1073 = vmatpush1.msra.mxu0 0.0
        %1074 = vmatprep.subr.mxu0 0.0
        %1075 = vmatpush1.msra.mxu0 0.0
        %1076 = vmatprep.mubr.f32.mxu0 0.0
        %1077 = vmatmul.mubr.f32.gmra.mrb[0].mxu0 %v476
        %v1078 = vpop.f32.mrb[0].mxu0
        %v1079 = vadd.f32 %v797, %v1078
        %v1080 = vpop.f32.mrb[0].mxu0
        %1081 = vdwg.mxu0
        %v1082 = vld [vmem:[%s5] sm:$0xff]
        %v1083 = vld [vmem:[%s5 + $0x8] sm:$0xff]
        %v1084 = vld [vmem:[%s5 + $0x10] sm:$0xff]
        %v1085 = vld [vmem:[%s5 + $0x18] sm:$0xff]
        %v1086 = vld [vmem:[%s5 + $0x20] sm:$0xff]
        %v1087 = vld [vmem:[%s5 + $0x28] sm:$0xff]
        %v1088 = vld [vmem:[%s5 + $0x30] sm:$0xff]
        %v1089 = vld [vmem:[%s5 + $0x38] sm:$0xff]
        %v1090 = vld [vmem:[%s5 + $0x40] sm:$0xff]
        %v1091 = vld [vmem:[%s5 + $0x48] sm:$0xff]
        %v1092 = vld [vmem:[%s5 + $0x50] sm:$0xff]
        %v1093 = vld [vmem:[%s5 + $0x58] sm:$0xff]
        %v1094 = vld [vmem:[%s5 + $0x60] sm:$0xff]
        %v1095 = vld [vmem:[%s5 + $0x68] sm:$0xff]
        %v1096 = vld [vmem:[%s5 + $0x70] sm:$0xff]
        %v1097 = vld [vmem:[%s5 + $0x78] sm:$0xff]
        %v1098 = vld [vmem:[%s6] sm:$0x1]
        %v1099 = vld [vmem:[%s6 + $0x1] sm:$0x1]
        %v1100 = vld [vmem:[%s6 + $0x2] sm:$0x1]
        %v1101 = vld [vmem:[%s6 + $0x3] sm:$0x1]
        %v1106 = vlaneseq
        %v1107 = vshrl.u32 %v1106, 7
        %v1108 = vsub.s32 0, %v1107
        %v1109 = vrot.slane %v1098, %v1108
        %v1110 = vlaneseq
        %v1111 = vshrl.u32 %v1110, 7
        %v1112 = vsub.s32 0, %v1111
        %v1113 = vrot.slane %v1099, %v1112
        %v1114 = vlaneseq
        %v1115 = vshrl.u32 %v1114, 7
        %v1116 = vsub.s32 0, %v1115
        %v1117 = vrot.slane %v1100, %v1116
        %v1118 = vlaneseq
        %v1119 = vshrl.u32 %v1118, 7
        %v1120 = vsub.s32 0, %v1119
        %v1121 = vrot.slane %v1101, %v1120
        %1126 = vmatprep.subr.mxu0 0.0
        %1127 = vmatpush1.msra.mxu0 %v1082
        %1128 = vmatprep.subr.mxu0 0.0
        %1129 = vmatpush1.msra.mxu0 %v1083
        %1130 = vmatprep.subr.mxu0 0.0
        %1131 = vmatpush1.msra.mxu0 %v1084
        %1132 = vmatprep.subr.mxu0 0.0
        %1133 = vmatpush1.msra.mxu0 %v1085
        %1134 = vmatprep.subr.mxu0 0.0
        %1135 = vmatpush1.msra.mxu0 0.0
        %1136 = vmatprep.subr.mxu0 0.0
        %1137 = vmatpush1.msra.mxu0 0.0
        %1138 = vmatprep.subr.mxu0 0.0
        %1139 = vmatpush1.msra.mxu0 0.0
        %1140 = vmatprep.subr.mxu0 0.0
        %1141 = vmatpush1.msra.mxu0 0.0
        %1142 = vmatprep.subr.mxu0 0.0
        %1143 = vmatpush1.msra.mxu0 0.0
        %1144 = vmatprep.subr.mxu0 0.0
        %1145 = vmatpush1.msra.mxu0 0.0
        %1146 = vmatprep.subr.mxu0 0.0
        %1147 = vmatpush1.msra.mxu0 0.0
        %1148 = vmatprep.subr.mxu0 0.0
        %1149 = vmatpush1.msra.mxu0 0.0
        %1150 = vmatprep.subr.mxu0 0.0
        %1151 = vmatpush1.msra.mxu0 0.0
        %1152 = vmatprep.subr.mxu0 0.0
        %1153 = vmatpush1.msra.mxu0 0.0
        %1154 = vmatprep.subr.mxu0 0.0
        %1155 = vmatpush1.msra.mxu0 0.0
        %1156 = vmatprep.subr.mxu0 0.0
        %1157 = vmatpush1.msra.mxu0 0.0
        %1158 = vmatprep.subr.mxu0 0.0
        %1159 = vmatpush1.msra.mxu0 0.0
        %1160 = vmatprep.subr.mxu0 0.0
        %1161 = vmatpush1.msra.mxu0 0.0
        %1162 = vmatprep.subr.mxu0 0.0
        %1163 = vmatpush1.msra.mxu0 0.0
        %1164 = vmatprep.subr.mxu0 0.0
        %1165 = vmatpush1.msra.mxu0 0.0
        %1166 = vmatprep.subr.mxu0 0.0
        %1167 = vmatpush1.msra.mxu0 0.0
        %1168 = vmatprep.subr.mxu0 0.0
        %1169 = vmatpush1.msra.mxu0 0.0
        %1170 = vmatprep.subr.mxu0 0.0
        %1171 = vmatpush1.msra.mxu0 0.0
        %1172 = vmatprep.subr.mxu0 0.0
        %1173 = vmatpush1.msra.mxu0 0.0
        %1174 = vmatprep.subr.mxu0 0.0
        %1175 = vmatpush1.msra.mxu0 0.0
        %1176 = vmatprep.subr.mxu0 0.0
        %1177 = vmatpush1.msra.mxu0 0.0
        %1178 = vmatprep.subr.mxu0 0.0
        %1179 = vmatpush1.msra.mxu0 0.0
        %1180 = vmatprep.subr.mxu0 0.0
        %1181 = vmatpush1.msra.mxu0 0.0
        %1182 = vmatprep.subr.mxu0 0.0
        %1183 = vmatpush1.msra.mxu0 0.0
        %1184 = vmatprep.subr.mxu0 0.0
        %1185 = vmatpush1.msra.mxu0 0.0
        %1186 = vmatprep.subr.mxu0 0.0
        %1187 = vmatpush1.msra.mxu0 0.0
        %1188 = vmatprep.subr.mxu0 0.0
        %1189 = vmatpush1.msra.mxu0 0.0
        %1190 = vmatprep.mubr.f32.mxu0 0.0
        %1191 = vmatmul.mubr.f32.gmra.mrb[0].mxu0 %v476
        %v1192 = vpop.f32.mrb[0].mxu0
        %v1193 = vadd.f32 %v1109, %v1192
        %v1194 = vpop.f32.mrb[0].mxu0
        %1195 = vdwg.mxu0
        %1196 = vmatprep.subr.mxu0 0.0
        %1197 = vmatpush1.msra.mxu0 %v1086
        %1198 = vmatprep.subr.mxu0 0.0
        %1199 = vmatpush1.msra.mxu0 %v1087
        %1200 = vmatprep.subr.mxu0 0.0
        %1201 = vmatpush1.msra.mxu0 %v1088
        %1202 = vmatprep.subr.mxu0 0.0
        %1203 = vmatpush1.msra.mxu0 %v1089
        %1204 = vmatprep.subr.mxu0 0.0
        %1205 = vmatpush1.msra.mxu0 0.0
        %1206 = vmatprep.subr.mxu0 0.0
        %1207 = vmatpush1.msra.mxu0 0.0
        %1208 = vmatprep.subr.mxu0 0.0
        %1209 = vmatpush1.msra.mxu0 0.0
        %1210 = vmatprep.subr.mxu0 0.0
        %1211 = vmatpush1.msra.mxu0 0.0
        %1212 = vmatprep.subr.mxu0 0.0
        %1213 = vmatpush1.msra.mxu0 0.0
        %1214 = vmatprep.subr.mxu0 0.0
        %1215 = vmatpush1.msra.mxu0 0.0
        %1216 = vmatprep.subr.mxu0 0.0
        %1217 = vmatpush1.msra.mxu0 0.0
        %1218 = vmatprep.subr.mxu0 0.0
        %1219 = vmatpush1.msra.mxu0 0.0
        %1220 = vmatprep.subr.mxu0 0.0
        %1221 = vmatpush1.msra.mxu0 0.0
        %1222 = vmatprep.subr.mxu0 0.0
        %1223 = vmatpush1.msra.mxu0 0.0
        %1224 = vmatprep.subr.mxu0 0.0
        %1225 = vmatpush1.msra.mxu0 0.0
        %1226 = vmatprep.subr.mxu0 0.0
        %1227 = vmatpush1.msra.mxu0 0.0
        %1228 = vmatprep.subr.mxu0 0.0
        %1229 = vmatpush1.msra.mxu0 0.0
        %1230 = vmatprep.subr.mxu0 0.0
        %1231 = vmatpush1.msra.mxu0 0.0
        %1232 = vmatprep.subr.mxu0 0.0
        %1233 = vmatpush1.msra.mxu0 0.0
        %1234 = vmatprep.subr.mxu0 0.0
        %1235 = vmatpush1.msra.mxu0 0.0
        %1236 = vmatprep.subr.mxu0 0.0
        %1237 = vmatpush1.msra.mxu0 0.0
        %1238 = vmatprep.subr.mxu0 0.0
        %1239 = vmatpush1.msra.mxu0 0.0
        %1240 = vmatprep.subr.mxu0 0.0
        %1241 = vmatpush1.msra.mxu0 0.0
        %1242 = vmatprep.subr.mxu0 0.0
        %1243 = vmatpush1.msra.mxu0 0.0
        %1244 = vmatprep.subr.mxu0 0.0
        %1245 = vmatpush1.msra.mxu0 0.0
        %1246 = vmatprep.subr.mxu0 0.0
        %1247 = vmatpush1.msra.mxu0 0.0
        %1248 = vmatprep.subr.mxu0 0.0
        %1249 = vmatpush1.msra.mxu0 0.0
        %1250 = vmatprep.subr.mxu0 0.0
        %1251 = vmatpush1.msra.mxu0 0.0
        %1252 = vmatprep.subr.mxu0 0.0
        %1253 = vmatpush1.msra.mxu0 0.0
        %1254 = vmatprep.subr.mxu0 0.0
        %1255 = vmatpush1.msra.mxu0 0.0
        %1256 = vmatprep.subr.mxu0 0.0
        %1257 = vmatpush1.msra.mxu0 0.0
        %1258 = vmatprep.subr.mxu0 0.0
        %1259 = vmatpush1.msra.mxu0 0.0
        %1260 = vmatprep.mubr.f32.mxu0 0.0
        %1261 = vmatmul.mubr.f32.gmra.mrb[0].mxu0 %v476
        %v1262 = vpop.f32.mrb[0].mxu0
        %v1263 = vadd.f32 %v1113, %v1262
        %v1264 = vpop.f32.mrb[0].mxu0
        %1265 = vdwg.mxu0
        %1266 = vmatprep.subr.mxu0 0.0
        %1267 = vmatpush1.msra.mxu0 %v1090
        %1268 = vmatprep.subr.mxu0 0.0
        %1269 = vmatpush1.msra.mxu0 %v1091
        %1270 = vmatprep.subr.mxu0 0.0
        %1271 = vmatpush1.msra.mxu0 %v1092
        %1272 = vmatprep.subr.mxu0 0.0
        %1273 = vmatpush1.msra.mxu0 %v1093
        %1274 = vmatprep.subr.mxu0 0.0
        %1275 = vmatpush1.msra.mxu0 0.0
        %1276 = vmatprep.subr.mxu0 0.0
        %1277 = vmatpush1.msra.mxu0 0.0
        %1278 = vmatprep.subr.mxu0 0.0
        %1279 = vmatpush1.msra.mxu0 0.0
        %1280 = vmatprep.subr.mxu0 0.0
        %1281 = vmatpush1.msra.mxu0 0.0
        %1282 = vmatprep.subr.mxu0 0.0
        %1283 = vmatpush1.msra.mxu0 0.0
        %1284 = vmatprep.subr.mxu0 0.0
        %1285 = vmatpush1.msra.mxu0 0.0
        %1286 = vmatprep.subr.mxu0 0.0
        %1287 = vmatpush1.msra.mxu0 0.0
        %1288 = vmatprep.subr.mxu0 0.0
        %1289 = vmatpush1.msra.mxu0 0.0
        %1290 = vmatprep.subr.mxu0 0.0
        %1291 = vmatpush1.msra.mxu0 0.0
        %1292 = vmatprep.subr.mxu0 0.0
        %1293 = vmatpush1.msra.mxu0 0.0
        %1294 = vmatprep.subr.mxu0 0.0
        %1295 = vmatpush1.msra.mxu0 0.0
        %1296 = vmatprep.subr.mxu0 0.0
        %1297 = vmatpush1.msra.mxu0 0.0
        %1298 = vmatprep.subr.mxu0 0.0
        %1299 = vmatpush1.msra.mxu0 0.0
        %1300 = vmatprep.subr.mxu0 0.0
        %1301 = vmatpush1.msra.mxu0 0.0
        %1302 = vmatprep.subr.mxu0 0.0
        %1303 = vmatpush1.msra.mxu0 0.0
        %1304 = vmatprep.subr.mxu0 0.0
        %1305 = vmatpush1.msra.mxu0 0.0
        %1306 = vmatprep.subr.mxu0 0.0
        %1307 = vmatpush1.msra.mxu0 0.0
        %1308 = vmatprep.subr.mxu0 0.0
        %1309 = vmatpush1.msra.mxu0 0.0
        %1310 = vmatprep.subr.mxu0 0.0
        %1311 = vmatpush1.msra.mxu0 0.0
        %1312 = vmatprep.subr.mxu0 0.0
        %1313 = vmatpush1.msra.mxu0 0.0
        %1314 = vmatprep.subr.mxu0 0.0
        %1315 = vmatpush1.msra.mxu0 0.0
        %1316 = vmatprep.subr.mxu0 0.0
        %1317 = vmatpush1.msra.mxu0 0.0
        %1318 = vmatprep.subr.mxu0 0.0
        %1319 = vmatpush1.msra.mxu0 0.0
        %1320 = vmatprep.subr.mxu0 0.0
        %1321 = vmatpush1.msra.mxu0 0.0
        %1322 = vmatprep.subr.mxu0 0.0
        %1323 = vmatpush1.msra.mxu0 0.0
        %1324 = vmatprep.subr.mxu0 0.0
        %1325 = vmatpush1.msra.mxu0 0.0
        %1326 = vmatprep.subr.mxu0 0.0
        %1327 = vmatpush1.msra.mxu0 0.0
        %1328 = vmatprep.subr.mxu0 0.0
        %1329 = vmatpush1.msra.mxu0 0.0
        %1330 = vmatprep.mubr.f32.mxu0 0.0
        %1331 = vmatmul.mubr.f32.gmra.mrb[0].mxu0 %v476
        %v1332 = vpop.f32.mrb[0].mxu0
        %v1333 = vadd.f32 %v1117, %v1332
        %v1334 = vpop.f32.mrb[0].mxu0
        %1335 = vdwg.mxu0
        %1336 = vmatprep.subr.mxu0 0.0
        %1337 = vmatpush1.msra.mxu0 %v1094
        %1338 = vmatprep.subr.mxu0 0.0
        %1339 = vmatpush1.msra.mxu0 %v1095
        %1340 = vmatprep.subr.mxu0 0.0
        %1341 = vmatpush1.msra.mxu0 %v1096
        %1342 = vmatprep.subr.mxu0 0.0
        %1343 = vmatpush1.msra.mxu0 %v1097
        %1344 = vmatprep.subr.mxu0 0.0
        %1345 = vmatpush1.msra.mxu0 0.0
        %1346 = vmatprep.subr.mxu0 0.0
        %1347 = vmatpush1.msra.mxu0 0.0
        %1348 = vmatprep.subr.mxu0 0.0
        %1349 = vmatpush1.msra.mxu0 0.0
        %1350 = vmatprep.subr.mxu0 0.0
        %1351 = vmatpush1.msra.mxu0 0.0
        %1352 = vmatprep.subr.mxu0 0.0
        %1353 = vmatpush1.msra.mxu0 0.0
        %1354 = vmatprep.subr.mxu0 0.0
        %1355 = vmatpush1.msra.mxu0 0.0
        %1356 = vmatprep.subr.mxu0 0.0
        %1357 = vmatpush1.msra.mxu0 0.0
        %1358 = vmatprep.subr.mxu0 0.0
        %1359 = vmatpush1.msra.mxu0 0.0
        %1360 = vmatprep.subr.mxu0 0.0
        %1361 = vmatpush1.msra.mxu0 0.0
        %1362 = vmatprep.subr.mxu0 0.0
        %1363 = vmatpush1.msra.mxu0 0.0
        %1364 = vmatprep.subr.mxu0 0.0
        %1365 = vmatpush1.msra.mxu0 0.0
        %1366 = vmatprep.subr.mxu0 0.0
        %1367 = vmatpush1.msra.mxu0 0.0
        %1368 = vmatprep.subr.mxu0 0.0
        %1369 = vmatpush1.msra.mxu0 0.0
        %1370 = vmatprep.subr.mxu0 0.0
        %1371 = vmatpush1.msra.mxu0 0.0
        %1372 = vmatprep.subr.mxu0 0.0
        %1373 = vmatpush1.msra.mxu0 0.0
        %1374 = vmatprep.subr.mxu0 0.0
        %1375 = vmatpush1.msra.mxu0 0.0
        %1376 = vmatprep.subr.mxu0 0.0
        %1377 = vmatpush1.msra.mxu0 0.0
        %1378 = vmatprep.subr.mxu0 0.0
        %1379 = vmatpush1.msra.mxu0 0.0
        %1380 = vmatprep.subr.mxu0 0.0
        %1381 = vmatpush1.msra.mxu0 0.0
        %1382 = vmatprep.subr.mxu0 0.0
        %1383 = vmatpush1.msra.mxu0 0.0
        %1384 = vmatprep.subr.mxu0 0.0
        %1385 = vmatpush1.msra.mxu0 0.0
        %1386 = vmatprep.subr.mxu0 0.0
        %1387 = vmatpush1.msra.mxu0 0.0
        %1388 = vmatprep.subr.mxu0 0.0
        %1389 = vmatpush1.msra.mxu0 0.0
        %1390 = vmatprep.subr.mxu0 0.0
        %1391 = vmatpush1.msra.mxu0 0.0
        %1392 = vmatprep.subr.mxu0 0.0
        %1393 = vmatpush1.msra.mxu0 0.0
        %1394 = vmatprep.subr.mxu0 0.0
        %1395 = vmatpush1.msra.mxu0 0.0
        %1396 = vmatprep.subr.mxu0 0.0
        %1397 = vmatpush1.msra.mxu0 0.0
        %1398 = vmatprep.subr.mxu0 0.0
        %1399 = vmatpush1.msra.mxu0 0.0
        %1400 = vmatprep.mubr.f32.mxu0 0.0
        %1401 = vmatmul.mubr.f32.gmra.mrb[0].mxu0 %v476
        %v1402 = vpop.f32.mrb[0].mxu0
        %v1403 = vadd.f32 %v1121, %v1402
        %v1404 = vpop.f32.mrb[0].mxu0
        %1405 = vdwg.mxu0
        %v1406 = vld [vmem:[%s9] sm:$0xff]
        %v1407 = vld [vmem:[%s9 + $0x8] sm:$0xff]
        %v1408 = vld [vmem:[%s9 + $0x10] sm:$0xff]
        %v1409 = vld [vmem:[%s9 + $0x18] sm:$0xff]
        %v1410 = vld [vmem:[%s9 + $0x20] sm:$0xff]
        %v1411 = vld [vmem:[%s9 + $0x28] sm:$0xff]
        %v1412 = vld [vmem:[%s9 + $0x30] sm:$0xff]
        %v1413 = vld [vmem:[%s9 + $0x38] sm:$0xff]
        %1414 = vxpose.xlu0.b32.start [1/16] %v545, 128
        %1415 = vxpose.xlu0.b32.cont [2/16] 0.0, 128
        %1416 = vxpose.xlu0.b32.cont [3/16] 0.0, 128
        %1417 = vxpose.xlu0.b32.cont [4/16] 0.0, 128
        %1418 = vxpose.xlu0.b32.cont [5/16] 0.0, 128
        %1419 = vxpose.xlu0.b32.cont [6/16] 0.0, 128
        %1420 = vxpose.xlu0.b32.cont [7/16] 0.0, 128
        %1421 = vxpose.xlu0.b32.cont [8/16] 0.0, 128
        %1422 = vxpose.xlu0.b32.cont [9/16] 0.0, 128
        %1423 = vxpose.xlu0.b32.cont [10/16] 0.0, 128
        %1424 = vxpose.xlu0.b32.cont [11/16] 0.0, 128
        %1425 = vxpose.xlu0.b32.cont [12/16] 0.0, 128
        %1426 = vxpose.xlu0.b32.cont [13/16] 0.0, 128
        %1427 = vxpose.xlu0.b32.cont [14/16] 0.0, 128
        %1428 = vxpose.xlu0.b32.cont [15/16] 0.0, 128
        %1429 = vxpose.xlu0.b32.end [16/16] 0.0, 128
        %v1430 = vpop.trf.xlu0
        %v1431 = vpop.trf.xlu0
        %v1432 = vpop.trf.xlu0
        %v1433 = vpop.trf.xlu0
        %v1434 = vpop.trf.xlu0
        %v1435 = vpop.trf.xlu0
        %v1436 = vpop.trf.xlu0
        %v1437 = vpop.trf.xlu0
        %v1438 = vpop.trf.xlu0
        %v1439 = vpop.trf.xlu0
        %v1440 = vpop.trf.xlu0
        %v1441 = vpop.trf.xlu0
        %v1442 = vpop.trf.xlu0
        %v1443 = vpop.trf.xlu0
        %v1444 = vpop.trf.xlu0
        %v1445 = vpop.trf.xlu0
        %1446 = vxpose.xlu0.b32.start [1/16] %v615, 128
        %1447 = vxpose.xlu0.b32.cont [2/16] 0.0, 128
        %1448 = vxpose.xlu0.b32.cont [3/16] 0.0, 128
        %1449 = vxpose.xlu0.b32.cont [4/16] 0.0, 128
        %1450 = vxpose.xlu0.b32.cont [5/16] 0.0, 128
        %1451 = vxpose.xlu0.b32.cont [6/16] 0.0, 128
        %1452 = vxpose.xlu0.b32.cont [7/16] 0.0, 128
        %1453 = vxpose.xlu0.b32.cont [8/16] 0.0, 128
        %1454 = vxpose.xlu0.b32.cont [9/16] 0.0, 128
        %1455 = vxpose.xlu0.b32.cont [10/16] 0.0, 128
        %1456 = vxpose.xlu0.b32.cont [11/16] 0.0, 128
        %1457 = vxpose.xlu0.b32.cont [12/16] 0.0, 128
        %1458 = vxpose.xlu0.b32.cont [13/16] 0.0, 128
        %1459 = vxpose.xlu0.b32.cont [14/16] 0.0, 128
        %1460 = vxpose.xlu0.b32.cont [15/16] 0.0, 128
        %1461 = vxpose.xlu0.b32.end [16/16] 0.0, 128
        %v1462 = vpop.trf.xlu0
        %v1463 = vpop.trf.xlu0
        %v1464 = vpop.trf.xlu0
        %v1465 = vpop.trf.xlu0
        %v1466 = vpop.trf.xlu0
        %v1467 = vpop.trf.xlu0
        %v1468 = vpop.trf.xlu0
        %v1469 = vpop.trf.xlu0
        %v1470 = vpop.trf.xlu0
        %v1471 = vpop.trf.xlu0
        %v1472 = vpop.trf.xlu0
        %v1473 = vpop.trf.xlu0
        %v1474 = vpop.trf.xlu0
        %v1475 = vpop.trf.xlu0
        %v1476 = vpop.trf.xlu0
        %v1477 = vpop.trf.xlu0
        %1478 = vxpose.xlu0.b32.start [1/16] %v685, 128
        %1479 = vxpose.xlu0.b32.cont [2/16] 0.0, 128
        %1480 = vxpose.xlu0.b32.cont [3/16] 0.0, 128
        %1481 = vxpose.xlu0.b32.cont [4/16] 0.0, 128
        %1482 = vxpose.xlu0.b32.cont [5/16] 0.0, 128
        %1483 = vxpose.xlu0.b32.cont [6/16] 0.0, 128
        %1484 = vxpose.xlu0.b32.cont [7/16] 0.0, 128
        %1485 = vxpose.xlu0.b32.cont [8/16] 0.0, 128
        %1486 = vxpose.xlu0.b32.cont [9/16] 0.0, 128
        %1487 = vxpose.xlu0.b32.cont [10/16] 0.0, 128
        %1488 = vxpose.xlu0.b32.cont [11/16] 0.0, 128
        %1489 = vxpose.xlu0.b32.cont [12/16] 0.0, 128
        %1490 = vxpose.xlu0.b32.cont [13/16] 0.0, 128
        %1491 = vxpose.xlu0.b32.cont [14/16] 0.0, 128
        %1492 = vxpose.xlu0.b32.cont [15/16] 0.0, 128
        %1493 = vxpose.xlu0.b32.end [16/16] 0.0, 128
        %v1494 = vpop.trf.xlu0
        %v1495 = vpop.trf.xlu0
        %v1496 = vpop.trf.xlu0
        %v1497 = vpop.trf.xlu0
        %v1498 = vpop.trf.xlu0
        %v1499 = vpop.trf.xlu0
        %v1500 = vpop.trf.xlu0
        %v1501 = vpop.trf.xlu0
        %v1502 = vpop.trf.xlu0
        %v1503 = vpop.trf.xlu0
        %v1504 = vpop.trf.xlu0
        %v1505 = vpop.trf.xlu0
        %v1506 = vpop.trf.xlu0
        %v1507 = vpop.trf.xlu0
        %v1508 = vpop.trf.xlu0
        %v1509 = vpop.trf.xlu0
        %1510 = vxpose.xlu0.b32.start [1/16] %v755, 128
        %1511 = vxpose.xlu0.b32.cont [2/16] 0.0, 128
        %1512 = vxpose.xlu0.b32.cont [3/16] 0.0, 128
        %1513 = vxpose.xlu0.b32.cont [4/16] 0.0, 128
        %1514 = vxpose.xlu0.b32.cont [5/16] 0.0, 128
        %1515 = vxpose.xlu0.b32.cont [6/16] 0.0, 128
        %1516 = vxpose.xlu0.b32.cont [7/16] 0.0, 128
        %1517 = vxpose.xlu0.b32.cont [8/16] 0.0, 128
        %1518 = vxpose.xlu0.b32.cont [9/16] 0.0, 128
        %1519 = vxpose.xlu0.b32.cont [10/16] 0.0, 128
        %1520 = vxpose.xlu0.b32.cont [11/16] 0.0, 128
        %1521 = vxpose.xlu0.b32.cont [12/16] 0.0, 128
        %1522 = vxpose.xlu0.b32.cont [13/16] 0.0, 128
        %1523 = vxpose.xlu0.b32.cont [14/16] 0.0, 128
        %1524 = vxpose.xlu0.b32.cont [15/16] 0.0, 128
        %1525 = vxpose.xlu0.b32.end [16/16] 0.0, 128
        %v1526 = vpop.trf.xlu0
        %v1527 = vpop.trf.xlu0
        %v1528 = vpop.trf.xlu0
        %v1529 = vpop.trf.xlu0
        %v1530 = vpop.trf.xlu0
        %v1531 = vpop.trf.xlu0
        %v1532 = vpop.trf.xlu0
        %v1533 = vpop.trf.xlu0
        %v1534 = vpop.trf.xlu0
        %v1535 = vpop.trf.xlu0
        %v1536 = vpop.trf.xlu0
        %v1537 = vpop.trf.xlu0
        %v1538 = vpop.trf.xlu0
        %v1539 = vpop.trf.xlu0
        %v1540 = vpop.trf.xlu0
        %v1541 = vpop.trf.xlu0
        %v1542 = vcombine.low %v1430, %v1494
        %v1543 = vcombine.high %v1430, %v1494
        %v1545 = vunpack.c.l.s4 1983009808
        %v1546 = vunpack.c.0.s8 %v1545
        %v1547 = vlaneseq
        %v1548 = vshrl.u32 %v1547, 7
        %v1549 = vsub.s32 %v1546, %v1548
        %v1550 = vrot.slane %v1542, %v1549
        %v1552 = vunpack.c.l.s4 1983009808
        %v1553 = vunpack.c.0.s8 %v1552
        %v1554 = vlaneseq
        %v1555 = vshrl.u32 %v1554, 7
        %v1556 = vsub.s32 %v1553, %v1555
        %v1557 = vrot.slane %v1543, %v1556
        %v1558 = vcombine.low %v1462, %v1526
        %v1559 = vcombine.high %v1462, %v1526
        %v1561 = vunpack.c.l.s4 1983009808
        %v1562 = vunpack.c.0.s8 %v1561
        %v1563 = vlaneseq
        %v1564 = vshrl.u32 %v1563, 7
        %v1565 = vsub.s32 %v1562, %v1564
        %v1566 = vrot.slane %v1558, %v1565
        %v1568 = vunpack.c.l.s4 1983009808
        %v1569 = vunpack.c.0.s8 %v1568
        %v1570 = vlaneseq
        %v1571 = vshrl.u32 %v1570, 7
        %v1572 = vsub.s32 %v1569, %v1571
        %v1573 = vrot.slane %v1559, %v1572
        %v1574 = vcombine.low %v1550, %v1566
        %v1575 = vcombine.high %v1550, %v1566
        %v1577 = vunpack.c.l.s4 1934713408
        %v1578 = vunpack.c.0.s8 %v1577
        %v1579 = vlaneseq
        %v1580 = vshrl.u32 %v1579, 7
        %v1581 = vsub.s32 %v1578, %v1580
        %v1582 = vrot.slane %v1574, %v1581
        %v1584 = vunpack.c.l.s4 1934713408
        %v1585 = vunpack.c.0.s8 %v1584
        %v1586 = vlaneseq
        %v1587 = vshrl.u32 %v1586, 7
        %v1588 = vsub.s32 %v1585, %v1587
        %v1589 = vrot.slane %v1575, %v1588
        %v1590 = vcombine.low %v1557, %v1573
        %v1591 = vcombine.high %v1557, %v1573
        %v1593 = vunpack.c.l.s4 1934713408
        %v1594 = vunpack.c.0.s8 %v1593
        %v1595 = vlaneseq
        %v1596 = vshrl.u32 %v1595, 7
        %v1597 = vsub.s32 %v1594, %v1596
        %v1598 = vrot.slane %v1590, %v1597
        %v1600 = vunpack.c.l.s4 1934713408
        %v1601 = vunpack.c.0.s8 %v1600
        %v1602 = vlaneseq
        %v1603 = vshrl.u32 %v1602, 7
        %v1604 = vsub.s32 %v1601, %v1603
        %v1605 = vrot.slane %v1591, %v1604
        %v1606 = vcombine.high %v1582, 0.0
        %v1607 = vcombine.high %v1589, 0.0
        %v1608 = vcombine.high %v1598, 0.0
        %v1609 = vcombine.high %v1605, 0.0
        %1610 = vxpose.xlu0.b32.start [1/16] %v1582, 128
        %1611 = vxpose.xlu0.b32.cont [2/16] 0.0, 128
        %1612 = vxpose.xlu0.b32.cont [3/16] 0.0, 128
        %1613 = vxpose.xlu0.b32.cont [4/16] 0.0, 128
        %1614 = vxpose.xlu0.b32.cont [5/16] 0.0, 128
        %1615 = vxpose.xlu0.b32.cont [6/16] 0.0, 128
        %1616 = vxpose.xlu0.b32.cont [7/16] 0.0, 128
        %1617 = vxpose.xlu0.b32.cont [8/16] 0.0, 128
        %1618 = vxpose.xlu0.b32.cont [9/16] 0.0, 128
        %1619 = vxpose.xlu0.b32.cont [10/16] 0.0, 128
        %1620 = vxpose.xlu0.b32.cont [11/16] 0.0, 128
        %1621 = vxpose.xlu0.b32.cont [12/16] 0.0, 128
        %1622 = vxpose.xlu0.b32.cont [13/16] 0.0, 128
        %1623 = vxpose.xlu0.b32.cont [14/16] 0.0, 128
        %1624 = vxpose.xlu0.b32.cont [15/16] 0.0, 128
        %1625 = vxpose.xlu0.b32.end [16/16] 0.0, 128
        %v1626 = vpop.trf.xlu0
        %v1627 = vpop.trf.xlu0
        %v1628 = vpop.trf.xlu0
        %v1629 = vpop.trf.xlu0
        %v1630 = vpop.trf.xlu0
        %v1631 = vpop.trf.xlu0
        %v1632 = vpop.trf.xlu0
        %v1633 = vpop.trf.xlu0
        %v1634 = vpop.trf.xlu0
        %v1635 = vpop.trf.xlu0
        %v1636 = vpop.trf.xlu0
        %v1637 = vpop.trf.xlu0
        %v1638 = vpop.trf.xlu0
        %v1639 = vpop.trf.xlu0
        %v1640 = vpop.trf.xlu0
        %v1641 = vpop.trf.xlu0
        %1642 = vxpose.xlu0.b32.start [1/16] %v1606, 128
        %1643 = vxpose.xlu0.b32.cont [2/16] 0.0, 128
        %1644 = vxpose.xlu0.b32.cont [3/16] 0.0, 128
        %1645 = vxpose.xlu0.b32.cont [4/16] 0.0, 128
        %1646 = vxpose.xlu0.b32.cont [5/16] 0.0, 128
        %1647 = vxpose.xlu0.b32.cont [6/16] 0.0, 128
        %1648 = vxpose.xlu0.b32.cont [7/16] 0.0, 128
        %1649 = vxpose.xlu0.b32.cont [8/16] 0.0, 128
        %1650 = vxpose.xlu0.b32.cont [9/16] 0.0, 128
        %1651 = vxpose.xlu0.b32.cont [10/16] 0.0, 128
        %1652 = vxpose.xlu0.b32.cont [11/16] 0.0, 128
        %1653 = vxpose.xlu0.b32.cont [12/16] 0.0, 128
        %1654 = vxpose.xlu0.b32.cont [13/16] 0.0, 128
        %1655 = vxpose.xlu0.b32.cont [14/16] 0.0, 128
        %1656 = vxpose.xlu0.b32.cont [15/16] 0.0, 128
        %1657 = vxpose.xlu0.b32.end [16/16] 0.0, 128
        %v1658 = vpop.trf.xlu0
        %v1659 = vpop.trf.xlu0
        %v1660 = vpop.trf.xlu0
        %v1661 = vpop.trf.xlu0
        %v1662 = vpop.trf.xlu0
        %v1663 = vpop.trf.xlu0
        %v1664 = vpop.trf.xlu0
        %v1665 = vpop.trf.xlu0
        %v1666 = vpop.trf.xlu0
        %v1667 = vpop.trf.xlu0
        %v1668 = vpop.trf.xlu0
        %v1669 = vpop.trf.xlu0
        %v1670 = vpop.trf.xlu0
        %v1671 = vpop.trf.xlu0
        %v1672 = vpop.trf.xlu0
        %v1673 = vpop.trf.xlu0
        %1674 = vxpose.xlu0.b32.start [1/16] %v1589, 128
        %1675 = vxpose.xlu0.b32.cont [2/16] 0.0, 128
        %1676 = vxpose.xlu0.b32.cont [3/16] 0.0, 128
        %1677 = vxpose.xlu0.b32.cont [4/16] 0.0, 128
        %1678 = vxpose.xlu0.b32.cont [5/16] 0.0, 128
        %1679 = vxpose.xlu0.b32.cont [6/16] 0.0, 128
        %1680 = vxpose.xlu0.b32.cont [7/16] 0.0, 128
        %1681 = vxpose.xlu0.b32.cont [8/16] 0.0, 128
        %1682 = vxpose.xlu0.b32.cont [9/16] 0.0, 128
        %1683 = vxpose.xlu0.b32.cont [10/16] 0.0, 128
        %1684 = vxpose.xlu0.b32.cont [11/16] 0.0, 128
        %1685 = vxpose.xlu0.b32.cont [12/16] 0.0, 128
        %1686 = vxpose.xlu0.b32.cont [13/16] 0.0, 128
        %1687 = vxpose.xlu0.b32.cont [14/16] 0.0, 128
        %1688 = vxpose.xlu0.b32.cont [15/16] 0.0, 128
        %1689 = vxpose.xlu0.b32.end [16/16] 0.0, 128
        %v1690 = vpop.trf.xlu0
        %v1691 = vpop.trf.xlu0
        %v1692 = vpop.trf.xlu0
        %v1693 = vpop.trf.xlu0
        %v1694 = vpop.trf.xlu0
        %v1695 = vpop.trf.xlu0
        %v1696 = vpop.trf.xlu0
        %v1697 = vpop.trf.xlu0
        %v1698 = vpop.trf.xlu0
        %v1699 = vpop.trf.xlu0
        %v1700 = vpop.trf.xlu0
        %v1701 = vpop.trf.xlu0
        %v1702 = vpop.trf.xlu0
        %v1703 = vpop.trf.xlu0
        %v1704 = vpop.trf.xlu0
        %v1705 = vpop.trf.xlu0
        %1706 = vxpose.xlu0.b32.start [1/16] %v1607, 128
        %1707 = vxpose.xlu0.b32.cont [2/16] 0.0, 128
        %1708 = vxpose.xlu0.b32.cont [3/16] 0.0, 128
        %1709 = vxpose.xlu0.b32.cont [4/16] 0.0, 128
        %1710 = vxpose.xlu0.b32.cont [5/16] 0.0, 128
        %1711 = vxpose.xlu0.b32.cont [6/16] 0.0, 128
        %1712 = vxpose.xlu0.b32.cont [7/16] 0.0, 128
        %1713 = vxpose.xlu0.b32.cont [8/16] 0.0, 128
        %1714 = vxpose.xlu0.b32.cont [9/16] 0.0, 128
        %1715 = vxpose.xlu0.b32.cont [10/16] 0.0, 128
        %1716 = vxpose.xlu0.b32.cont [11/16] 0.0, 128
        %1717 = vxpose.xlu0.b32.cont [12/16] 0.0, 128
        %1718 = vxpose.xlu0.b32.cont [13/16] 0.0, 128
        %1719 = vxpose.xlu0.b32.cont [14/16] 0.0, 128
        %1720 = vxpose.xlu0.b32.cont [15/16] 0.0, 128
        %1721 = vxpose.xlu0.b32.end [16/16] 0.0, 128
        %v1722 = vpop.trf.xlu0
        %v1723 = vpop.trf.xlu0
        %v1724 = vpop.trf.xlu0
        %v1725 = vpop.trf.xlu0
        %v1726 = vpop.trf.xlu0
        %v1727 = vpop.trf.xlu0
        %v1728 = vpop.trf.xlu0
        %v1729 = vpop.trf.xlu0
        %v1730 = vpop.trf.xlu0
        %v1731 = vpop.trf.xlu0
        %v1732 = vpop.trf.xlu0
        %v1733 = vpop.trf.xlu0
        %v1734 = vpop.trf.xlu0
        %v1735 = vpop.trf.xlu0
        %v1736 = vpop.trf.xlu0
        %v1737 = vpop.trf.xlu0
        %1738 = vxpose.xlu0.b32.start [1/16] %v1598, 128
        %1739 = vxpose.xlu0.b32.cont [2/16] 0.0, 128
        %1740 = vxpose.xlu0.b32.cont [3/16] 0.0, 128
        %1741 = vxpose.xlu0.b32.cont [4/16] 0.0, 128
        %1742 = vxpose.xlu0.b32.cont [5/16] 0.0, 128
        %1743 = vxpose.xlu0.b32.cont [6/16] 0.0, 128
        %1744 = vxpose.xlu0.b32.cont [7/16] 0.0, 128
        %1745 = vxpose.xlu0.b32.cont [8/16] 0.0, 128
        %1746 = vxpose.xlu0.b32.cont [9/16] 0.0, 128
        %1747 = vxpose.xlu0.b32.cont [10/16] 0.0, 128
        %1748 = vxpose.xlu0.b32.cont [11/16] 0.0, 128
        %1749 = vxpose.xlu0.b32.cont [12/16] 0.0, 128
        %1750 = vxpose.xlu0.b32.cont [13/16] 0.0, 128
        %1751 = vxpose.xlu0.b32.cont [14/16] 0.0, 128
        %1752 = vxpose.xlu0.b32.cont [15/16] 0.0, 128
        %1753 = vxpose.xlu0.b32.end [16/16] 0.0, 128
        %v1754 = vpop.trf.xlu0
        %v1755 = vpop.trf.xlu0
        %v1756 = vpop.trf.xlu0
        %v1757 = vpop.trf.xlu0
        %v1758 = vpop.trf.xlu0
        %v1759 = vpop.trf.xlu0
        %v1760 = vpop.trf.xlu0
        %v1761 = vpop.trf.xlu0
        %v1762 = vpop.trf.xlu0
        %v1763 = vpop.trf.xlu0
        %v1764 = vpop.trf.xlu0
        %v1765 = vpop.trf.xlu0
        %v1766 = vpop.trf.xlu0
        %v1767 = vpop.trf.xlu0
        %v1768 = vpop.trf.xlu0
        %v1769 = vpop.trf.xlu0
        %1770 = vxpose.xlu0.b32.start [1/16] %v1608, 128
        %1771 = vxpose.xlu0.b32.cont [2/16] 0.0, 128
        %1772 = vxpose.xlu0.b32.cont [3/16] 0.0, 128
        %1773 = vxpose.xlu0.b32.cont [4/16] 0.0, 128
        %1774 = vxpose.xlu0.b32.cont [5/16] 0.0, 128
        %1775 = vxpose.xlu0.b32.cont [6/16] 0.0, 128
        %1776 = vxpose.xlu0.b32.cont [7/16] 0.0, 128
        %1777 = vxpose.xlu0.b32.cont [8/16] 0.0, 128
        %1778 = vxpose.xlu0.b32.cont [9/16] 0.0, 128
        %1779 = vxpose.xlu0.b32.cont [10/16] 0.0, 128
        %1780 = vxpose.xlu0.b32.cont [11/16] 0.0, 128
        %1781 = vxpose.xlu0.b32.cont [12/16] 0.0, 128
        %1782 = vxpose.xlu0.b32.cont [13/16] 0.0, 128
        %1783 = vxpose.xlu0.b32.cont [14/16] 0.0, 128
        %1784 = vxpose.xlu0.b32.cont [15/16] 0.0, 128
        %1785 = vxpose.xlu0.b32.end [16/16] 0.0, 128
        %v1786 = vpop.trf.xlu0
        %v1787 = vpop.trf.xlu0
        %v1788 = vpop.trf.xlu0
        %v1789 = vpop.trf.xlu0
        %v1790 = vpop.trf.xlu0
        %v1791 = vpop.trf.xlu0
        %v1792 = vpop.trf.xlu0
        %v1793 = vpop.trf.xlu0
        %v1794 = vpop.trf.xlu0
        %v1795 = vpop.trf.xlu0
        %v1796 = vpop.trf.xlu0
        %v1797 = vpop.trf.xlu0
        %v1798 = vpop.trf.xlu0
        %v1799 = vpop.trf.xlu0
        %v1800 = vpop.trf.xlu0
        %v1801 = vpop.trf.xlu0
        %1802 = vxpose.xlu0.b32.start [1/16] %v1605, 128
        %1803 = vxpose.xlu0.b32.cont [2/16] 0.0, 128
        %1804 = vxpose.xlu0.b32.cont [3/16] 0.0, 128
        %1805 = vxpose.xlu0.b32.cont [4/16] 0.0, 128
        %1806 = vxpose.xlu0.b32.cont [5/16] 0.0, 128
        %1807 = vxpose.xlu0.b32.cont [6/16] 0.0, 128
        %1808 = vxpose.xlu0.b32.cont [7/16] 0.0, 128
        %1809 = vxpose.xlu0.b32.cont [8/16] 0.0, 128
        %1810 = vxpose.xlu0.b32.cont [9/16] 0.0, 128
        %1811 = vxpose.xlu0.b32.cont [10/16] 0.0, 128
        %1812 = vxpose.xlu0.b32.cont [11/16] 0.0, 128
        %1813 = vxpose.xlu0.b32.cont [12/16] 0.0, 128
        %1814 = vxpose.xlu0.b32.cont [13/16] 0.0, 128
        %1815 = vxpose.xlu0.b32.cont [14/16] 0.0, 128
        %1816 = vxpose.xlu0.b32.cont [15/16] 0.0, 128
        %1817 = vxpose.xlu0.b32.end [16/16] 0.0, 128
        %v1818 = vpop.trf.xlu0
        %v1819 = vpop.trf.xlu0
        %v1820 = vpop.trf.xlu0
        %v1821 = vpop.trf.xlu0
        %v1822 = vpop.trf.xlu0
        %v1823 = vpop.trf.xlu0
        %v1824 = vpop.trf.xlu0
        %v1825 = vpop.trf.xlu0
        %v1826 = vpop.trf.xlu0
        %v1827 = vpop.trf.xlu0
        %v1828 = vpop.trf.xlu0
        %v1829 = vpop.trf.xlu0
        %v1830 = vpop.trf.xlu0
        %v1831 = vpop.trf.xlu0
        %v1832 = vpop.trf.xlu0
        %v1833 = vpop.trf.xlu0
        %1834 = vxpose.xlu0.b32.start [1/16] %v1609, 128
        %1835 = vxpose.xlu0.b32.cont [2/16] 0.0, 128
        %1836 = vxpose.xlu0.b32.cont [3/16] 0.0, 128
        %1837 = vxpose.xlu0.b32.cont [4/16] 0.0, 128
        %1838 = vxpose.xlu0.b32.cont [5/16] 0.0, 128
        %1839 = vxpose.xlu0.b32.cont [6/16] 0.0, 128
        %1840 = vxpose.xlu0.b32.cont [7/16] 0.0, 128
        %1841 = vxpose.xlu0.b32.cont [8/16] 0.0, 128
        %1842 = vxpose.xlu0.b32.cont [9/16] 0.0, 128
        %1843 = vxpose.xlu0.b32.cont [10/16] 0.0, 128
        %1844 = vxpose.xlu0.b32.cont [11/16] 0.0, 128
        %1845 = vxpose.xlu0.b32.cont [12/16] 0.0, 128
        %1846 = vxpose.xlu0.b32.cont [13/16] 0.0, 128
        %1847 = vxpose.xlu0.b32.cont [14/16] 0.0, 128
        %1848 = vxpose.xlu0.b32.cont [15/16] 0.0, 128
        %1849 = vxpose.xlu0.b32.end [16/16] 0.0, 128
        %v1850 = vpop.trf.xlu0
        %v1851 = vpop.trf.xlu0
        %v1852 = vpop.trf.xlu0
        %v1853 = vpop.trf.xlu0
        %v1854 = vpop.trf.xlu0
        %v1855 = vpop.trf.xlu0
        %v1856 = vpop.trf.xlu0
        %v1857 = vpop.trf.xlu0
        %v1858 = vpop.trf.xlu0
        %v1859 = vpop.trf.xlu0
        %v1860 = vpop.trf.xlu0
        %v1861 = vpop.trf.xlu0
        %v1862 = vpop.trf.xlu0
        %v1863 = vpop.trf.xlu0
        %v1864 = vpop.trf.xlu0
        %v1865 = vpop.trf.xlu0
        %v1866 = vcombine.low %v1626, %v1690
        %v1867 = vcombine.high %v1626, %v1690
        %v1869 = vunpack.c.l.s4 1983009808
        %v1870 = vunpack.c.0.s8 %v1869
        %v1871 = vlaneseq
        %v1872 = vshrl.u32 %v1871, 7
        %v1873 = vsub.s32 %v1870, %v1872
        %v1874 = vrot.slane %v1866, %v1873
        %v1876 = vunpack.c.l.s4 1983009808
        %v1877 = vunpack.c.0.s8 %v1876
        %v1878 = vlaneseq
        %v1879 = vshrl.u32 %v1878, 7
        %v1880 = vsub.s32 %v1877, %v1879
        %v1881 = vrot.slane %v1867, %v1880
        %v1882 = vcombine.low %v1658, %v1722
        %v1883 = vcombine.high %v1658, %v1722
        %v1885 = vunpack.c.l.s4 1983009808
        %v1886 = vunpack.c.0.s8 %v1885
        %v1887 = vlaneseq
        %v1888 = vshrl.u32 %v1887, 7
        %v1889 = vsub.s32 %v1886, %v1888
        %v1890 = vrot.slane %v1882, %v1889
        %v1892 = vunpack.c.l.s4 1983009808
        %v1893 = vunpack.c.0.s8 %v1892
        %v1894 = vlaneseq
        %v1895 = vshrl.u32 %v1894, 7
        %v1896 = vsub.s32 %v1893, %v1895
        %v1897 = vrot.slane %v1883, %v1896
        %v1898 = vcombine.low %v1754, %v1818
        %v1899 = vcombine.high %v1754, %v1818
        %v1901 = vunpack.c.l.s4 1983009808
        %v1902 = vunpack.c.0.s8 %v1901
        %v1903 = vlaneseq
        %v1904 = vshrl.u32 %v1903, 7
        %v1905 = vsub.s32 %v1902, %v1904
        %v1906 = vrot.slane %v1898, %v1905
        %v1908 = vunpack.c.l.s4 1983009808
        %v1909 = vunpack.c.0.s8 %v1908
        %v1910 = vlaneseq
        %v1911 = vshrl.u32 %v1910, 7
        %v1912 = vsub.s32 %v1909, %v1911
        %v1913 = vrot.slane %v1899, %v1912
        %v1914 = vcombine.low %v1786, %v1850
        %v1915 = vcombine.high %v1786, %v1850
        %v1917 = vunpack.c.l.s4 1983009808
        %v1918 = vunpack.c.0.s8 %v1917
        %v1919 = vlaneseq
        %v1920 = vshrl.u32 %v1919, 7
        %v1921 = vsub.s32 %v1918, %v1920
        %v1922 = vrot.slane %v1914, %v1921
        %v1924 = vunpack.c.l.s4 1983009808
        %v1925 = vunpack.c.0.s8 %v1924
        %v1926 = vlaneseq
        %v1927 = vshrl.u32 %v1926, 7
        %v1928 = vsub.s32 %v1925, %v1927
        %v1929 = vrot.slane %v1915, %v1928
        %v1930 = vcombine.low %v1874, %v1890
        %v1931 = vcombine.high %v1874, %v1890
        %v1933 = vunpack.c.l.s4 1934713408
        %v1934 = vunpack.c.0.s8 %v1933
        %v1935 = vlaneseq
        %v1936 = vshrl.u32 %v1935, 7
        %v1937 = vsub.s32 %v1934, %v1936
        %v1938 = vrot.slane %v1930, %v1937
        %v1940 = vunpack.c.l.s4 1934713408
        %v1941 = vunpack.c.0.s8 %v1940
        %v1942 = vlaneseq
        %v1943 = vshrl.u32 %v1942, 7
        %v1944 = vsub.s32 %v1941, %v1943
        %v1945 = vrot.slane %v1931, %v1944
        %v1946 = vcombine.low %v1881, %v1897
        %v1947 = vcombine.high %v1881, %v1897
        %v1949 = vunpack.c.l.s4 1934713408
        %v1950 = vunpack.c.0.s8 %v1949
        %v1951 = vlaneseq
        %v1952 = vshrl.u32 %v1951, 7
        %v1953 = vsub.s32 %v1950, %v1952
        %v1954 = vrot.slane %v1946, %v1953
        %v1956 = vunpack.c.l.s4 1934713408
        %v1957 = vunpack.c.0.s8 %v1956
        %v1958 = vlaneseq
        %v1959 = vshrl.u32 %v1958, 7
        %v1960 = vsub.s32 %v1957, %v1959
        %v1961 = vrot.slane %v1947, %v1960
        %v1962 = vcombine.low %v1906, %v1922
        %v1963 = vcombine.high %v1906, %v1922
        %v1965 = vunpack.c.l.s4 1934713408
        %v1966 = vunpack.c.0.s8 %v1965
        %v1967 = vlaneseq
        %v1968 = vshrl.u32 %v1967, 7
        %v1969 = vsub.s32 %v1966, %v1968
        %v1970 = vrot.slane %v1962, %v1969
        %v1972 = vunpack.c.l.s4 1934713408
        %v1973 = vunpack.c.0.s8 %v1972
        %v1974 = vlaneseq
        %v1975 = vshrl.u32 %v1974, 7
        %v1976 = vsub.s32 %v1973, %v1975
        %v1977 = vrot.slane %v1963, %v1976
        %v1978 = vcombine.low %v1913, %v1929
        %v1979 = vcombine.high %v1913, %v1929
        %v1981 = vunpack.c.l.s4 1934713408
        %v1982 = vunpack.c.0.s8 %v1981
        %v1983 = vlaneseq
        %v1984 = vshrl.u32 %v1983, 7
        %v1985 = vsub.s32 %v1982, %v1984
        %v1986 = vrot.slane %v1978, %v1985
        %v1988 = vunpack.c.l.s4 1934713408
        %v1989 = vunpack.c.0.s8 %v1988
        %v1990 = vlaneseq
        %v1991 = vshrl.u32 %v1990, 7
        %v1992 = vsub.s32 %v1989, %v1991
        %v1993 = vrot.slane %v1979, %v1992
        %v1994 = vcombine.low %v1938, %v1970
        %v1995 = vcombine.high %v1938, %v1970
        %v1996 = vcombine.low %v1945, %v1977
        %v1997 = vcombine.high %v1945, %v1977
        %v1998 = vcombine.low %v1954, %v1986
        %v1999 = vcombine.high %v1954, %v1986
        %v2000 = vcombine.low %v1961, %v1993
        %v2001 = vcombine.high %v1961, %v1993
        %vm2002 = vcmask 64512
        %v2004 = vsel %vm2002, %v1406, 0
        %2006 = vmatprep.subr.mxu0 0.0
        %2007 = vmatpush1.msra.mxu0 %v1994
        %2008 = vmatprep.subr.mxu0 0.0
        %2009 = vmatpush1.msra.mxu0 0.0
        %2010 = vmatprep.subr.mxu0 0.0
        %2011 = vmatpush1.msra.mxu0 0.0
        %2012 = vmatprep.subr.mxu0 0.0
        %2013 = vmatpush1.msra.mxu0 0.0
        %2014 = vmatprep.subr.mxu0 0.0
        %2015 = vmatpush1.msra.mxu0 0.0
        %2016 = vmatprep.subr.mxu0 0.0
        %2017 = vmatpush1.msra.mxu0 0.0
        %2018 = vmatprep.subr.mxu0 0.0
        %2019 = vmatpush1.msra.mxu0 0.0
        %2020 = vmatprep.subr.mxu0 0.0
        %2021 = vmatpush1.msra.mxu0 0.0
        %2022 = vmatprep.subr.mxu0 0.0
        %2023 = vmatpush1.msra.mxu0 0.0
        %2024 = vmatprep.subr.mxu0 0.0
        %2025 = vmatpush1.msra.mxu0 0.0
        %2026 = vmatprep.subr.mxu0 0.0
        %2027 = vmatpush1.msra.mxu0 0.0
        %2028 = vmatprep.subr.mxu0 0.0
        %2029 = vmatpush1.msra.mxu0 0.0
        %2030 = vmatprep.subr.mxu0 0.0
        %2031 = vmatpush1.msra.mxu0 0.0
        %2032 = vmatprep.subr.mxu0 0.0
        %2033 = vmatpush1.msra.mxu0 0.0
        %2034 = vmatprep.subr.mxu0 0.0
        %2035 = vmatpush1.msra.mxu0 0.0
        %2036 = vmatprep.subr.mxu0 0.0
        %2037 = vmatpush1.msra.mxu0 0.0
        %2038 = vmatprep.subr.mxu0 0.0
        %2039 = vmatpush1.msra.mxu0 0.0
        %2040 = vmatprep.subr.mxu0 0.0
        %2041 = vmatpush1.msra.mxu0 0.0
        %2042 = vmatprep.subr.mxu0 0.0
        %2043 = vmatpush1.msra.mxu0 0.0
        %2044 = vmatprep.subr.mxu0 0.0
        %2045 = vmatpush1.msra.mxu0 0.0
        %2046 = vmatprep.subr.mxu0 0.0
        %2047 = vmatpush1.msra.mxu0 0.0
        %2048 = vmatprep.subr.mxu0 0.0
        %2049 = vmatpush1.msra.mxu0 0.0
        %2050 = vmatprep.subr.mxu0 0.0
        %2051 = vmatpush1.msra.mxu0 0.0
        %2052 = vmatprep.subr.mxu0 0.0
        %2053 = vmatpush1.msra.mxu0 0.0
        %2054 = vmatprep.subr.mxu0 0.0
        %2055 = vmatpush1.msra.mxu0 0.0
        %2056 = vmatprep.subr.mxu0 0.0
        %2057 = vmatpush1.msra.mxu0 0.0
        %2058 = vmatprep.subr.mxu0 0.0
        %2059 = vmatpush1.msra.mxu0 0.0
        %2060 = vmatprep.subr.mxu0 0.0
        %2061 = vmatpush1.msra.mxu0 0.0
        %2062 = vmatprep.subr.mxu0 0.0
        %2063 = vmatpush1.msra.mxu0 0.0
        %2064 = vmatprep.subr.mxu0 0.0
        %2065 = vmatpush1.msra.mxu0 0.0
        %2066 = vmatprep.subr.mxu0 0.0
        %2067 = vmatpush1.msra.mxu0 0.0
        %2068 = vmatprep.subr.mxu0 0.0
        %2069 = vmatpush1.msra.mxu0 0.0
        %2070 = vmatprep.mubr.f32.mxu0 0.0
        %2071 = vmatmul.mubr.f32.gmra.mrb[0].mxu0 %v2004
        %v2072 = vpop.f32.mrb[0].mxu0
        %v2073 = vadd.f32 0.0, %v2072
        %v2074 = vpop.f32.mrb[0].mxu0
        %2075 = vdwg.mxu0
        %v2077 = vsel %vm2002, %v1407, 0
        %2079 = vmatprep.subr.mxu0 0.0
        %2080 = vmatpush1.msra.mxu0 %v1995
        %2081 = vmatprep.subr.mxu0 0.0
        %2082 = vmatpush1.msra.mxu0 0.0
        %2083 = vmatprep.subr.mxu0 0.0
        %2084 = vmatpush1.msra.mxu0 0.0
        %2085 = vmatprep.subr.mxu0 0.0
        %2086 = vmatpush1.msra.mxu0 0.0
        %2087 = vmatprep.subr.mxu0 0.0
        %2088 = vmatpush1.msra.mxu0 0.0
        %2089 = vmatprep.subr.mxu0 0.0
        %2090 = vmatpush1.msra.mxu0 0.0
        %2091 = vmatprep.subr.mxu0 0.0
        %2092 = vmatpush1.msra.mxu0 0.0
        %2093 = vmatprep.subr.mxu0 0.0
        %2094 = vmatpush1.msra.mxu0 0.0
        %2095 = vmatprep.subr.mxu0 0.0
        %2096 = vmatpush1.msra.mxu0 0.0
        %2097 = vmatprep.subr.mxu0 0.0
        %2098 = vmatpush1.msra.mxu0 0.0
        %2099 = vmatprep.subr.mxu0 0.0
        %2100 = vmatpush1.msra.mxu0 0.0
        %2101 = vmatprep.subr.mxu0 0.0
        %2102 = vmatpush1.msra.mxu0 0.0
        %2103 = vmatprep.subr.mxu0 0.0
        %2104 = vmatpush1.msra.mxu0 0.0
        %2105 = vmatprep.subr.mxu0 0.0
        %2106 = vmatpush1.msra.mxu0 0.0
        %2107 = vmatprep.subr.mxu0 0.0
        %2108 = vmatpush1.msra.mxu0 0.0
        %2109 = vmatprep.subr.mxu0 0.0
        %2110 = vmatpush1.msra.mxu0 0.0
        %2111 = vmatprep.subr.mxu0 0.0
        %2112 = vmatpush1.msra.mxu0 0.0
        %2113 = vmatprep.subr.mxu0 0.0
        %2114 = vmatpush1.msra.mxu0 0.0
        %2115 = vmatprep.subr.mxu0 0.0
        %2116 = vmatpush1.msra.mxu0 0.0
        %2117 = vmatprep.subr.mxu0 0.0
        %2118 = vmatpush1.msra.mxu0 0.0
        %2119 = vmatprep.subr.mxu0 0.0
        %2120 = vmatpush1.msra.mxu0 0.0
        %2121 = vmatprep.subr.mxu0 0.0
        %2122 = vmatpush1.msra.mxu0 0.0
        %2123 = vmatprep.subr.mxu0 0.0
        %2124 = vmatpush1.msra.mxu0 0.0
        %2125 = vmatprep.subr.mxu0 0.0
        %2126 = vmatpush1.msra.mxu0 0.0
        %2127 = vmatprep.subr.mxu0 0.0
        %2128 = vmatpush1.msra.mxu0 0.0
        %2129 = vmatprep.subr.mxu0 0.0
        %2130 = vmatpush1.msra.mxu0 0.0
        %2131 = vmatprep.subr.mxu0 0.0
        %2132 = vmatpush1.msra.mxu0 0.0
        %2133 = vmatprep.subr.mxu0 0.0
        %2134 = vmatpush1.msra.mxu0 0.0
        %2135 = vmatprep.subr.mxu0 0.0
        %2136 = vmatpush1.msra.mxu0 0.0
        %2137 = vmatprep.subr.mxu0 0.0
        %2138 = vmatpush1.msra.mxu0 0.0
        %2139 = vmatprep.subr.mxu0 0.0
        %2140 = vmatpush1.msra.mxu0 0.0
        %2141 = vmatprep.subr.mxu0 0.0
        %2142 = vmatpush1.msra.mxu0 0.0
        %2143 = vmatprep.mubr.f32.mxu0 0.0
        %2144 = vmatmul.mubr.f32.gmra.mrb[0].mxu0 %v2077
        %v2145 = vpop.f32.mrb[0].mxu0
        %v2146 = vadd.f32 0.0, %v2145
        %v2147 = vpop.f32.mrb[0].mxu0
        %2148 = vdwg.mxu0
        %v2150 = vsel %vm2002, %v1408, 0
        %2152 = vmatprep.subr.mxu0 0.0
        %2153 = vmatpush1.msra.mxu0 %v1996
        %2154 = vmatprep.subr.mxu0 0.0
        %2155 = vmatpush1.msra.mxu0 0.0
        %2156 = vmatprep.subr.mxu0 0.0
        %2157 = vmatpush1.msra.mxu0 0.0
        %2158 = vmatprep.subr.mxu0 0.0
        %2159 = vmatpush1.msra.mxu0 0.0
        %2160 = vmatprep.subr.mxu0 0.0
        %2161 = vmatpush1.msra.mxu0 0.0
        %2162 = vmatprep.subr.mxu0 0.0
        %2163 = vmatpush1.msra.mxu0 0.0
        %2164 = vmatprep.subr.mxu0 0.0
        %2165 = vmatpush1.msra.mxu0 0.0
        %2166 = vmatprep.subr.mxu0 0.0
        %2167 = vmatpush1.msra.mxu0 0.0
        %2168 = vmatprep.subr.mxu0 0.0
        %2169 = vmatpush1.msra.mxu0 0.0
        %2170 = vmatprep.subr.mxu0 0.0
        %2171 = vmatpush1.msra.mxu0 0.0
        %2172 = vmatprep.subr.mxu0 0.0
        %2173 = vmatpush1.msra.mxu0 0.0
        %2174 = vmatprep.subr.mxu0 0.0
        %2175 = vmatpush1.msra.mxu0 0.0
        %2176 = vmatprep.subr.mxu0 0.0
        %2177 = vmatpush1.msra.mxu0 0.0
        %2178 = vmatprep.subr.mxu0 0.0
        %2179 = vmatpush1.msra.mxu0 0.0
        %2180 = vmatprep.subr.mxu0 0.0
        %2181 = vmatpush1.msra.mxu0 0.0
        %2182 = vmatprep.subr.mxu0 0.0
        %2183 = vmatpush1.msra.mxu0 0.0
        %2184 = vmatprep.subr.mxu0 0.0
        %2185 = vmatpush1.msra.mxu0 0.0
        %2186 = vmatprep.subr.mxu0 0.0
        %2187 = vmatpush1.msra.mxu0 0.0
        %2188 = vmatprep.subr.mxu0 0.0
        %2189 = vmatpush1.msra.mxu0 0.0
        %2190 = vmatprep.subr.mxu0 0.0
        %2191 = vmatpush1.msra.mxu0 0.0
        %2192 = vmatprep.subr.mxu0 0.0
        %2193 = vmatpush1.msra.mxu0 0.0
        %2194 = vmatprep.subr.mxu0 0.0
        %2195 = vmatpush1.msra.mxu0 0.0
        %2196 = vmatprep.subr.mxu0 0.0
        %2197 = vmatpush1.msra.mxu0 0.0
        %2198 = vmatprep.subr.mxu0 0.0
        %2199 = vmatpush1.msra.mxu0 0.0
        %2200 = vmatprep.subr.mxu0 0.0
        %2201 = vmatpush1.msra.mxu0 0.0
        %2202 = vmatprep.subr.mxu0 0.0
        %2203 = vmatpush1.msra.mxu0 0.0
        %2204 = vmatprep.subr.mxu0 0.0
        %2205 = vmatpush1.msra.mxu0 0.0
        %2206 = vmatprep.subr.mxu0 0.0
        %2207 = vmatpush1.msra.mxu0 0.0
        %2208 = vmatprep.subr.mxu0 0.0
        %2209 = vmatpush1.msra.mxu0 0.0
        %2210 = vmatprep.subr.mxu0 0.0
        %2211 = vmatpush1.msra.mxu0 0.0
        %2212 = vmatprep.subr.mxu0 0.0
        %2213 = vmatpush1.msra.mxu0 0.0
        %2214 = vmatprep.subr.mxu0 0.0
        %2215 = vmatpush1.msra.mxu0 0.0
        %2216 = vmatprep.mubr.f32.mxu0 0.0
        %2217 = vmatmul.mubr.f32.gmra.mrb[0].mxu0 %v2150
        %v2218 = vpop.f32.mrb[0].mxu0
        %v2219 = vadd.f32 0.0, %v2218
        %v2220 = vpop.f32.mrb[0].mxu0
        %2221 = vdwg.mxu0
        %v2223 = vsel %vm2002, %v1409, 0
        %2225 = vmatprep.subr.mxu0 0.0
        %2226 = vmatpush1.msra.mxu0 %v1997
        %2227 = vmatprep.subr.mxu0 0.0
        %2228 = vmatpush1.msra.mxu0 0.0
        %2229 = vmatprep.subr.mxu0 0.0
        %2230 = vmatpush1.msra.mxu0 0.0
        %2231 = vmatprep.subr.mxu0 0.0
        %2232 = vmatpush1.msra.mxu0 0.0
        %2233 = vmatprep.subr.mxu0 0.0
        %2234 = vmatpush1.msra.mxu0 0.0
        %2235 = vmatprep.subr.mxu0 0.0
        %2236 = vmatpush1.msra.mxu0 0.0
        %2237 = vmatprep.subr.mxu0 0.0
        %2238 = vmatpush1.msra.mxu0 0.0
        %2239 = vmatprep.subr.mxu0 0.0
        %2240 = vmatpush1.msra.mxu0 0.0
        %2241 = vmatprep.subr.mxu0 0.0
        %2242 = vmatpush1.msra.mxu0 0.0
        %2243 = vmatprep.subr.mxu0 0.0
        %2244 = vmatpush1.msra.mxu0 0.0
        %2245 = vmatprep.subr.mxu0 0.0
        %2246 = vmatpush1.msra.mxu0 0.0
        %2247 = vmatprep.subr.mxu0 0.0
        %2248 = vmatpush1.msra.mxu0 0.0
        %2249 = vmatprep.subr.mxu0 0.0
        %2250 = vmatpush1.msra.mxu0 0.0
        %2251 = vmatprep.subr.mxu0 0.0
        %2252 = vmatpush1.msra.mxu0 0.0
        %2253 = vmatprep.subr.mxu0 0.0
        %2254 = vmatpush1.msra.mxu0 0.0
        %2255 = vmatprep.subr.mxu0 0.0
        %2256 = vmatpush1.msra.mxu0 0.0
        %2257 = vmatprep.subr.mxu0 0.0
        %2258 = vmatpush1.msra.mxu0 0.0
        %2259 = vmatprep.subr.mxu0 0.0
        %2260 = vmatpush1.msra.mxu0 0.0
        %2261 = vmatprep.subr.mxu0 0.0
        %2262 = vmatpush1.msra.mxu0 0.0
        %2263 = vmatprep.subr.mxu0 0.0
        %2264 = vmatpush1.msra.mxu0 0.0
        %2265 = vmatprep.subr.mxu0 0.0
        %2266 = vmatpush1.msra.mxu0 0.0
        %2267 = vmatprep.subr.mxu0 0.0
        %2268 = vmatpush1.msra.mxu0 0.0
        %2269 = vmatprep.subr.mxu0 0.0
        %2270 = vmatpush1.msra.mxu0 0.0
        %2271 = vmatprep.subr.mxu0 0.0
        %2272 = vmatpush1.msra.mxu0 0.0
        %2273 = vmatprep.subr.mxu0 0.0
        %2274 = vmatpush1.msra.mxu0 0.0
        %2275 = vmatprep.subr.mxu0 0.0
        %2276 = vmatpush1.msra.mxu0 0.0
        %2277 = vmatprep.subr.mxu0 0.0
        %2278 = vmatpush1.msra.mxu0 0.0
        %2279 = vmatprep.subr.mxu0 0.0
        %2280 = vmatpush1.msra.mxu0 0.0
        %2281 = vmatprep.subr.mxu0 0.0
        %2282 = vmatpush1.msra.mxu0 0.0
        %2283 = vmatprep.subr.mxu0 0.0
        %2284 = vmatpush1.msra.mxu0 0.0
        %2285 = vmatprep.subr.mxu0 0.0
        %2286 = vmatpush1.msra.mxu0 0.0
        %2287 = vmatprep.subr.mxu0 0.0
        %2288 = vmatpush1.msra.mxu0 0.0
        %2289 = vmatprep.mubr.f32.mxu0 0.0
        %2290 = vmatmul.mubr.f32.gmra.mrb[0].mxu0 %v2223
        %v2291 = vpop.f32.mrb[0].mxu0
        %v2292 = vadd.f32 0.0, %v2291
        %v2293 = vpop.f32.mrb[0].mxu0
        %2294 = vdwg.mxu0
        %v2296 = vsel %vm2002, %v1410, 0
        %2298 = vmatprep.subr.mxu0 0.0
        %2299 = vmatpush1.msra.mxu0 %v1998
        %2300 = vmatprep.subr.mxu0 0.0
        %2301 = vmatpush1.msra.mxu0 0.0
        %2302 = vmatprep.subr.mxu0 0.0
        %2303 = vmatpush1.msra.mxu0 0.0
        %2304 = vmatprep.subr.mxu0 0.0
        %2305 = vmatpush1.msra.mxu0 0.0
        %2306 = vmatprep.subr.mxu0 0.0
        %2307 = vmatpush1.msra.mxu0 0.0
        %2308 = vmatprep.subr.mxu0 0.0
        %2309 = vmatpush1.msra.mxu0 0.0
        %2310 = vmatprep.subr.mxu0 0.0
        %2311 = vmatpush1.msra.mxu0 0.0
        %2312 = vmatprep.subr.mxu0 0.0
        %2313 = vmatpush1.msra.mxu0 0.0
        %2314 = vmatprep.subr.mxu0 0.0
        %2315 = vmatpush1.msra.mxu0 0.0
        %2316 = vmatprep.subr.mxu0 0.0
        %2317 = vmatpush1.msra.mxu0 0.0
        %2318 = vmatprep.subr.mxu0 0.0
        %2319 = vmatpush1.msra.mxu0 0.0
        %2320 = vmatprep.subr.mxu0 0.0
        %2321 = vmatpush1.msra.mxu0 0.0
        %2322 = vmatprep.subr.mxu0 0.0
        %2323 = vmatpush1.msra.mxu0 0.0
        %2324 = vmatprep.subr.mxu0 0.0
        %2325 = vmatpush1.msra.mxu0 0.0
        %2326 = vmatprep.subr.mxu0 0.0
        %2327 = vmatpush1.msra.mxu0 0.0
        %2328 = vmatprep.subr.mxu0 0.0
        %2329 = vmatpush1.msra.mxu0 0.0
        %2330 = vmatprep.subr.mxu0 0.0
        %2331 = vmatpush1.msra.mxu0 0.0
        %2332 = vmatprep.subr.mxu0 0.0
        %2333 = vmatpush1.msra.mxu0 0.0
        %2334 = vmatprep.subr.mxu0 0.0
        %2335 = vmatpush1.msra.mxu0 0.0
        %2336 = vmatprep.subr.mxu0 0.0
        %2337 = vmatpush1.msra.mxu0 0.0
        %2338 = vmatprep.subr.mxu0 0.0
        %2339 = vmatpush1.msra.mxu0 0.0
        %2340 = vmatprep.subr.mxu0 0.0
        %2341 = vmatpush1.msra.mxu0 0.0
        %2342 = vmatprep.subr.mxu0 0.0
        %2343 = vmatpush1.msra.mxu0 0.0
        %2344 = vmatprep.subr.mxu0 0.0
        %2345 = vmatpush1.msra.mxu0 0.0
        %2346 = vmatprep.subr.mxu0 0.0
        %2347 = vmatpush1.msra.mxu0 0.0
        %2348 = vmatprep.subr.mxu0 0.0
        %2349 = vmatpush1.msra.mxu0 0.0
        %2350 = vmatprep.subr.mxu0 0.0
        %2351 = vmatpush1.msra.mxu0 0.0
        %2352 = vmatprep.subr.mxu0 0.0
        %2353 = vmatpush1.msra.mxu0 0.0
        %2354 = vmatprep.subr.mxu0 0.0
        %2355 = vmatpush1.msra.mxu0 0.0
        %2356 = vmatprep.subr.mxu0 0.0
        %2357 = vmatpush1.msra.mxu0 0.0
        %2358 = vmatprep.subr.mxu0 0.0
        %2359 = vmatpush1.msra.mxu0 0.0
        %2360 = vmatprep.subr.mxu0 0.0
        %2361 = vmatpush1.msra.mxu0 0.0
        %2362 = vmatprep.mubr.f32.mxu0 0.0
        %2363 = vmatmul.mubr.f32.gmra.mrb[0].mxu0 %v2296
        %v2364 = vpop.f32.mrb[0].mxu0
        %v2365 = vadd.f32 0.0, %v2364
        %v2366 = vpop.f32.mrb[0].mxu0
        %2367 = vdwg.mxu0
        %v2369 = vsel %vm2002, %v1411, 0
        %2371 = vmatprep.subr.mxu0 0.0
        %2372 = vmatpush1.msra.mxu0 %v1999
        %2373 = vmatprep.subr.mxu0 0.0
        %2374 = vmatpush1.msra.mxu0 0.0
        %2375 = vmatprep.subr.mxu0 0.0
        %2376 = vmatpush1.msra.mxu0 0.0
        %2377 = vmatprep.subr.mxu0 0.0
        %2378 = vmatpush1.msra.mxu0 0.0
        %2379 = vmatprep.subr.mxu0 0.0
        %2380 = vmatpush1.msra.mxu0 0.0
        %2381 = vmatprep.subr.mxu0 0.0
        %2382 = vmatpush1.msra.mxu0 0.0
        %2383 = vmatprep.subr.mxu0 0.0
        %2384 = vmatpush1.msra.mxu0 0.0
        %2385 = vmatprep.subr.mxu0 0.0
        %2386 = vmatpush1.msra.mxu0 0.0
        %2387 = vmatprep.subr.mxu0 0.0
        %2388 = vmatpush1.msra.mxu0 0.0
        %2389 = vmatprep.subr.mxu0 0.0
        %2390 = vmatpush1.msra.mxu0 0.0
        %2391 = vmatprep.subr.mxu0 0.0
        %2392 = vmatpush1.msra.mxu0 0.0
        %2393 = vmatprep.subr.mxu0 0.0
        %2394 = vmatpush1.msra.mxu0 0.0
        %2395 = vmatprep.subr.mxu0 0.0
        %2396 = vmatpush1.msra.mxu0 0.0
        %2397 = vmatprep.subr.mxu0 0.0
        %2398 = vmatpush1.msra.mxu0 0.0
        %2399 = vmatprep.subr.mxu0 0.0
        %2400 = vmatpush1.msra.mxu0 0.0
        %2401 = vmatprep.subr.mxu0 0.0
        %2402 = vmatpush1.msra.mxu0 0.0
        %2403 = vmatprep.subr.mxu0 0.0
        %2404 = vmatpush1.msra.mxu0 0.0
        %2405 = vmatprep.subr.mxu0 0.0
        %2406 = vmatpush1.msra.mxu0 0.0
        %2407 = vmatprep.subr.mxu0 0.0
        %2408 = vmatpush1.msra.mxu0 0.0
        %2409 = vmatprep.subr.mxu0 0.0
        %2410 = vmatpush1.msra.mxu0 0.0
        %2411 = vmatprep.subr.mxu0 0.0
        %2412 = vmatpush1.msra.mxu0 0.0
        %2413 = vmatprep.subr.mxu0 0.0
        %2414 = vmatpush1.msra.mxu0 0.0
        %2415 = vmatprep.subr.mxu0 0.0
        %2416 = vmatpush1.msra.mxu0 0.0
        %2417 = vmatprep.subr.mxu0 0.0
        %2418 = vmatpush1.msra.mxu0 0.0
        %2419 = vmatprep.subr.mxu0 0.0
        %2420 = vmatpush1.msra.mxu0 0.0
        %2421 = vmatprep.subr.mxu0 0.0
        %2422 = vmatpush1.msra.mxu0 0.0
        %2423 = vmatprep.subr.mxu0 0.0
        %2424 = vmatpush1.msra.mxu0 0.0
        %2425 = vmatprep.subr.mxu0 0.0
        %2426 = vmatpush1.msra.mxu0 0.0
        %2427 = vmatprep.subr.mxu0 0.0
        %2428 = vmatpush1.msra.mxu0 0.0
        %2429 = vmatprep.subr.mxu0 0.0
        %2430 = vmatpush1.msra.mxu0 0.0
        %2431 = vmatprep.subr.mxu0 0.0
        %2432 = vmatpush1.msra.mxu0 0.0
        %2433 = vmatprep.subr.mxu0 0.0
        %2434 = vmatpush1.msra.mxu0 0.0
        %2435 = vmatprep.mubr.f32.mxu0 0.0
        %2436 = vmatmul.mubr.f32.gmra.mrb[0].mxu0 %v2369
        %v2437 = vpop.f32.mrb[0].mxu0
        %v2438 = vadd.f32 0.0, %v2437
        %v2439 = vpop.f32.mrb[0].mxu0
        %2440 = vdwg.mxu0
        %v2442 = vsel %vm2002, %v1412, 0
        %2444 = vmatprep.subr.mxu0 0.0
        %2445 = vmatpush1.msra.mxu0 %v2000
        %2446 = vmatprep.subr.mxu0 0.0
        %2447 = vmatpush1.msra.mxu0 0.0
        %2448 = vmatprep.subr.mxu0 0.0
        %2449 = vmatpush1.msra.mxu0 0.0
        %2450 = vmatprep.subr.mxu0 0.0
        %2451 = vmatpush1.msra.mxu0 0.0
        %2452 = vmatprep.subr.mxu0 0.0
        %2453 = vmatpush1.msra.mxu0 0.0
        %2454 = vmatprep.subr.mxu0 0.0
        %2455 = vmatpush1.msra.mxu0 0.0
        %2456 = vmatprep.subr.mxu0 0.0
        %2457 = vmatpush1.msra.mxu0 0.0
        %2458 = vmatprep.subr.mxu0 0.0
        %2459 = vmatpush1.msra.mxu0 0.0
        %2460 = vmatprep.subr.mxu0 0.0
        %2461 = vmatpush1.msra.mxu0 0.0
        %2462 = vmatprep.subr.mxu0 0.0
        %2463 = vmatpush1.msra.mxu0 0.0
        %2464 = vmatprep.subr.mxu0 0.0
        %2465 = vmatpush1.msra.mxu0 0.0
        %2466 = vmatprep.subr.mxu0 0.0
        %2467 = vmatpush1.msra.mxu0 0.0
        %2468 = vmatprep.subr.mxu0 0.0
        %2469 = vmatpush1.msra.mxu0 0.0
        %2470 = vmatprep.subr.mxu0 0.0
        %2471 = vmatpush1.msra.mxu0 0.0
        %2472 = vmatprep.subr.mxu0 0.0
        %2473 = vmatpush1.msra.mxu0 0.0
        %2474 = vmatprep.subr.mxu0 0.0
        %2475 = vmatpush1.msra.mxu0 0.0
        %2476 = vmatprep.subr.mxu0 0.0
        %2477 = vmatpush1.msra.mxu0 0.0
        %2478 = vmatprep.subr.mxu0 0.0
        %2479 = vmatpush1.msra.mxu0 0.0
        %2480 = vmatprep.subr.mxu0 0.0
        %2481 = vmatpush1.msra.mxu0 0.0
        %2482 = vmatprep.subr.mxu0 0.0
        %2483 = vmatpush1.msra.mxu0 0.0
        %2484 = vmatprep.subr.mxu0 0.0
        %2485 = vmatpush1.msra.mxu0 0.0
        %2486 = vmatprep.subr.mxu0 0.0
        %2487 = vmatpush1.msra.mxu0 0.0
        %2488 = vmatprep.subr.mxu0 0.0
        %2489 = vmatpush1.msra.mxu0 0.0
        %2490 = vmatprep.subr.mxu0 0.0
        %2491 = vmatpush1.msra.mxu0 0.0
        %2492 = vmatprep.subr.mxu0 0.0
        %2493 = vmatpush1.msra.mxu0 0.0
        %2494 = vmatprep.subr.mxu0 0.0
        %2495 = vmatpush1.msra.mxu0 0.0
        %2496 = vmatprep.subr.mxu0 0.0
        %2497 = vmatpush1.msra.mxu0 0.0
        %2498 = vmatprep.subr.mxu0 0.0
        %2499 = vmatpush1.msra.mxu0 0.0
        %2500 = vmatprep.subr.mxu0 0.0
        %2501 = vmatpush1.msra.mxu0 0.0
        %2502 = vmatprep.subr.mxu0 0.0
        %2503 = vmatpush1.msra.mxu0 0.0
        %2504 = vmatprep.subr.mxu0 0.0
        %2505 = vmatpush1.msra.mxu0 0.0
        %2506 = vmatprep.subr.mxu0 0.0
        %2507 = vmatpush1.msra.mxu0 0.0
        %2508 = vmatprep.mubr.f32.mxu0 0.0
        %2509 = vmatmul.mubr.f32.gmra.mrb[0].mxu0 %v2442
        %v2510 = vpop.f32.mrb[0].mxu0
        %v2511 = vadd.f32 0.0, %v2510
        %v2512 = vpop.f32.mrb[0].mxu0
        %2513 = vdwg.mxu0
        %v2515 = vsel %vm2002, %v1413, 0
        %2517 = vmatprep.subr.mxu0 0.0
        %2518 = vmatpush1.msra.mxu0 %v2001
        %2519 = vmatprep.subr.mxu0 0.0
        %2520 = vmatpush1.msra.mxu0 0.0
        %2521 = vmatprep.subr.mxu0 0.0
        %2522 = vmatpush1.msra.mxu0 0.0
        %2523 = vmatprep.subr.mxu0 0.0
        %2524 = vmatpush1.msra.mxu0 0.0
        %2525 = vmatprep.subr.mxu0 0.0
        %2526 = vmatpush1.msra.mxu0 0.0
        %2527 = vmatprep.subr.mxu0 0.0
        %2528 = vmatpush1.msra.mxu0 0.0
        %2529 = vmatprep.subr.mxu0 0.0
        %2530 = vmatpush1.msra.mxu0 0.0
        %2531 = vmatprep.subr.mxu0 0.0
        %2532 = vmatpush1.msra.mxu0 0.0
        %2533 = vmatprep.subr.mxu0 0.0
        %2534 = vmatpush1.msra.mxu0 0.0
        %2535 = vmatprep.subr.mxu0 0.0
        %2536 = vmatpush1.msra.mxu0 0.0
        %2537 = vmatprep.subr.mxu0 0.0
        %2538 = vmatpush1.msra.mxu0 0.0
        %2539 = vmatprep.subr.mxu0 0.0
        %2540 = vmatpush1.msra.mxu0 0.0
        %2541 = vmatprep.subr.mxu0 0.0
        %2542 = vmatpush1.msra.mxu0 0.0
        %2543 = vmatprep.subr.mxu0 0.0
        %2544 = vmatpush1.msra.mxu0 0.0
        %2545 = vmatprep.subr.mxu0 0.0
        %2546 = vmatpush1.msra.mxu0 0.0
        %2547 = vmatprep.subr.mxu0 0.0
        %2548 = vmatpush1.msra.mxu0 0.0
        %2549 = vmatprep.subr.mxu0 0.0
        %2550 = vmatpush1.msra.mxu0 0.0
        %2551 = vmatprep.subr.mxu0 0.0
        %2552 = vmatpush1.msra.mxu0 0.0
        %2553 = vmatprep.subr.mxu0 0.0
        %2554 = vmatpush1.msra.mxu0 0.0
        %2555 = vmatprep.subr.mxu0 0.0
        %2556 = vmatpush1.msra.mxu0 0.0
        %2557 = vmatprep.subr.mxu0 0.0
        %2558 = vmatpush1.msra.mxu0 0.0
        %2559 = vmatprep.subr.mxu0 0.0
        %2560 = vmatpush1.msra.mxu0 0.0
        %2561 = vmatprep.subr.mxu0 0.0
        %2562 = vmatpush1.msra.mxu0 0.0
        %2563 = vmatprep.subr.mxu0 0.0
        %2564 = vmatpush1.msra.mxu0 0.0
        %2565 = vmatprep.subr.mxu0 0.0
        %2566 = vmatpush1.msra.mxu0 0.0
        %2567 = vmatprep.subr.mxu0 0.0
        %2568 = vmatpush1.msra.mxu0 0.0
        %2569 = vmatprep.subr.mxu0 0.0
        %2570 = vmatpush1.msra.mxu0 0.0
        %2571 = vmatprep.subr.mxu0 0.0
        %2572 = vmatpush1.msra.mxu0 0.0
        %2573 = vmatprep.subr.mxu0 0.0
        %2574 = vmatpush1.msra.mxu0 0.0
        %2575 = vmatprep.subr.mxu0 0.0
        %2576 = vmatpush1.msra.mxu0 0.0
        %2577 = vmatprep.subr.mxu0 0.0
        %2578 = vmatpush1.msra.mxu0 0.0
        %2579 = vmatprep.subr.mxu0 0.0
        %2580 = vmatpush1.msra.mxu0 0.0
        %2581 = vmatprep.mubr.f32.mxu0 0.0
        %2582 = vmatmul.mubr.f32.gmra.mrb[0].mxu0 %v2515
        %v2583 = vpop.f32.mrb[0].mxu0
        %v2584 = vadd.f32 0.0, %v2583
        %v2585 = vpop.f32.mrb[0].mxu0
        %2586 = vdwg.mxu0
        %2587 = vxpose.xlu0.b32.start [1/16] %v2073, 128
        %2588 = vxpose.xlu0.b32.cont [2/16] 0.0, 128
        %2589 = vxpose.xlu0.b32.cont [3/16] 0.0, 128
        %2590 = vxpose.xlu0.b32.cont [4/16] 0.0, 128
        %2591 = vxpose.xlu0.b32.cont [5/16] 0.0, 128
        %2592 = vxpose.xlu0.b32.cont [6/16] 0.0, 128
        %2593 = vxpose.xlu0.b32.cont [7/16] 0.0, 128
        %2594 = vxpose.xlu0.b32.cont [8/16] 0.0, 128
        %2595 = vxpose.xlu0.b32.cont [9/16] 0.0, 128
        %2596 = vxpose.xlu0.b32.cont [10/16] 0.0, 128
        %2597 = vxpose.xlu0.b32.cont [11/16] 0.0, 128
        %2598 = vxpose.xlu0.b32.cont [12/16] 0.0, 128
        %2599 = vxpose.xlu0.b32.cont [13/16] 0.0, 128
        %2600 = vxpose.xlu0.b32.cont [14/16] 0.0, 128
        %2601 = vxpose.xlu0.b32.cont [15/16] 0.0, 128
        %2602 = vxpose.xlu0.b32.end [16/16] 0.0, 128
        %v2603 = vpop.trf.xlu0
        %v2604 = vpop.trf.xlu0
        %v2605 = vpop.trf.xlu0
        %v2606 = vpop.trf.xlu0
        %v2607 = vpop.trf.xlu0
        %v2608 = vpop.trf.xlu0
        %v2609 = vpop.trf.xlu0
        %v2610 = vpop.trf.xlu0
        %v2611 = vpop.trf.xlu0
        %v2612 = vpop.trf.xlu0
        %v2613 = vpop.trf.xlu0
        %v2614 = vpop.trf.xlu0
        %v2615 = vpop.trf.xlu0
        %v2616 = vpop.trf.xlu0
        %v2617 = vpop.trf.xlu0
        %v2618 = vpop.trf.xlu0
        %2619 = vxpose.xlu0.b32.start [1/16] %v2146, 128
        %2620 = vxpose.xlu0.b32.cont [2/16] 0.0, 128
        %2621 = vxpose.xlu0.b32.cont [3/16] 0.0, 128
        %2622 = vxpose.xlu0.b32.cont [4/16] 0.0, 128
        %2623 = vxpose.xlu0.b32.cont [5/16] 0.0, 128
        %2624 = vxpose.xlu0.b32.cont [6/16] 0.0, 128
        %2625 = vxpose.xlu0.b32.cont [7/16] 0.0, 128
        %2626 = vxpose.xlu0.b32.cont [8/16] 0.0, 128
        %2627 = vxpose.xlu0.b32.cont [9/16] 0.0, 128
        %2628 = vxpose.xlu0.b32.cont [10/16] 0.0, 128
        %2629 = vxpose.xlu0.b32.cont [11/16] 0.0, 128
        %2630 = vxpose.xlu0.b32.cont [12/16] 0.0, 128
        %2631 = vxpose.xlu0.b32.cont [13/16] 0.0, 128
        %2632 = vxpose.xlu0.b32.cont [14/16] 0.0, 128
        %2633 = vxpose.xlu0.b32.cont [15/16] 0.0, 128
        %2634 = vxpose.xlu0.b32.end [16/16] 0.0, 128
        %v2635 = vpop.trf.xlu0
        %v2636 = vpop.trf.xlu0
        %v2637 = vpop.trf.xlu0
        %v2638 = vpop.trf.xlu0
        %v2639 = vpop.trf.xlu0
        %v2640 = vpop.trf.xlu0
        %v2641 = vpop.trf.xlu0
        %v2642 = vpop.trf.xlu0
        %v2643 = vpop.trf.xlu0
        %v2644 = vpop.trf.xlu0
        %v2645 = vpop.trf.xlu0
        %v2646 = vpop.trf.xlu0
        %v2647 = vpop.trf.xlu0
        %v2648 = vpop.trf.xlu0
        %v2649 = vpop.trf.xlu0
        %v2650 = vpop.trf.xlu0
        %2651 = vxpose.xlu0.b32.start [1/16] %v2219, 128
        %2652 = vxpose.xlu0.b32.cont [2/16] 0.0, 128
        %2653 = vxpose.xlu0.b32.cont [3/16] 0.0, 128
        %2654 = vxpose.xlu0.b32.cont [4/16] 0.0, 128
        %2655 = vxpose.xlu0.b32.cont [5/16] 0.0, 128
        %2656 = vxpose.xlu0.b32.cont [6/16] 0.0, 128
        %2657 = vxpose.xlu0.b32.cont [7/16] 0.0, 128
        %2658 = vxpose.xlu0.b32.cont [8/16] 0.0, 128
        %2659 = vxpose.xlu0.b32.cont [9/16] 0.0, 128
        %2660 = vxpose.xlu0.b32.cont [10/16] 0.0, 128
        %2661 = vxpose.xlu0.b32.cont [11/16] 0.0, 128
        %2662 = vxpose.xlu0.b32.cont [12/16] 0.0, 128
        %2663 = vxpose.xlu0.b32.cont [13/16] 0.0, 128
        %2664 = vxpose.xlu0.b32.cont [14/16] 0.0, 128
        %2665 = vxpose.xlu0.b32.cont [15/16] 0.0, 128
        %2666 = vxpose.xlu0.b32.end [16/16] 0.0, 128
        %v2667 = vpop.trf.xlu0
        %v2668 = vpop.trf.xlu0
        %v2669 = vpop.trf.xlu0
        %v2670 = vpop.trf.xlu0
        %v2671 = vpop.trf.xlu0
        %v2672 = vpop.trf.xlu0
        %v2673 = vpop.trf.xlu0
        %v2674 = vpop.trf.xlu0
        %v2675 = vpop.trf.xlu0
        %v2676 = vpop.trf.xlu0
        %v2677 = vpop.trf.xlu0
        %v2678 = vpop.trf.xlu0
        %v2679 = vpop.trf.xlu0
        %v2680 = vpop.trf.xlu0
        %v2681 = vpop.trf.xlu0
        %v2682 = vpop.trf.xlu0
        %2683 = vxpose.xlu0.b32.start [1/16] %v2292, 128
        %2684 = vxpose.xlu0.b32.cont [2/16] 0.0, 128
        %2685 = vxpose.xlu0.b32.cont [3/16] 0.0, 128
        %2686 = vxpose.xlu0.b32.cont [4/16] 0.0, 128
        %2687 = vxpose.xlu0.b32.cont [5/16] 0.0, 128
        %2688 = vxpose.xlu0.b32.cont [6/16] 0.0, 128
        %2689 = vxpose.xlu0.b32.cont [7/16] 0.0, 128
        %2690 = vxpose.xlu0.b32.cont [8/16] 0.0, 128
        %2691 = vxpose.xlu0.b32.cont [9/16] 0.0, 128
        %2692 = vxpose.xlu0.b32.cont [10/16] 0.0, 128
        %2693 = vxpose.xlu0.b32.cont [11/16] 0.0, 128
        %2694 = vxpose.xlu0.b32.cont [12/16] 0.0, 128
        %2695 = vxpose.xlu0.b32.cont [13/16] 0.0, 128
        %2696 = vxpose.xlu0.b32.cont [14/16] 0.0, 128
        %2697 = vxpose.xlu0.b32.cont [15/16] 0.0, 128
        %2698 = vxpose.xlu0.b32.end [16/16] 0.0, 128
        %v2699 = vpop.trf.xlu0
        %v2700 = vpop.trf.xlu0
        %v2701 = vpop.trf.xlu0
        %v2702 = vpop.trf.xlu0
        %v2703 = vpop.trf.xlu0
        %v2704 = vpop.trf.xlu0
        %v2705 = vpop.trf.xlu0
        %v2706 = vpop.trf.xlu0
        %v2707 = vpop.trf.xlu0
        %v2708 = vpop.trf.xlu0
        %v2709 = vpop.trf.xlu0
        %v2710 = vpop.trf.xlu0
        %v2711 = vpop.trf.xlu0
        %v2712 = vpop.trf.xlu0
        %v2713 = vpop.trf.xlu0
        %v2714 = vpop.trf.xlu0
        %2715 = vxpose.xlu0.b32.start [1/16] %v2365, 128
        %2716 = vxpose.xlu0.b32.cont [2/16] 0.0, 128
        %2717 = vxpose.xlu0.b32.cont [3/16] 0.0, 128
        %2718 = vxpose.xlu0.b32.cont [4/16] 0.0, 128
        %2719 = vxpose.xlu0.b32.cont [5/16] 0.0, 128
        %2720 = vxpose.xlu0.b32.cont [6/16] 0.0, 128
        %2721 = vxpose.xlu0.b32.cont [7/16] 0.0, 128
        %2722 = vxpose.xlu0.b32.cont [8/16] 0.0, 128
        %2723 = vxpose.xlu0.b32.cont [9/16] 0.0, 128
        %2724 = vxpose.xlu0.b32.cont [10/16] 0.0, 128
        %2725 = vxpose.xlu0.b32.cont [11/16] 0.0, 128
        %2726 = vxpose.xlu0.b32.cont [12/16] 0.0, 128
        %2727 = vxpose.xlu0.b32.cont [13/16] 0.0, 128
        %2728 = vxpose.xlu0.b32.cont [14/16] 0.0, 128
        %2729 = vxpose.xlu0.b32.cont [15/16] 0.0, 128
        %2730 = vxpose.xlu0.b32.end [16/16] 0.0, 128
        %v2731 = vpop.trf.xlu0
        %v2732 = vpop.trf.xlu0
        %v2733 = vpop.trf.xlu0
        %v2734 = vpop.trf.xlu0
        %v2735 = vpop.trf.xlu0
        %v2736 = vpop.trf.xlu0
        %v2737 = vpop.trf.xlu0
        %v2738 = vpop.trf.xlu0
        %v2739 = vpop.trf.xlu0
        %v2740 = vpop.trf.xlu0
        %v2741 = vpop.trf.xlu0
        %v2742 = vpop.trf.xlu0
        %v2743 = vpop.trf.xlu0
        %v2744 = vpop.trf.xlu0
        %v2745 = vpop.trf.xlu0
        %v2746 = vpop.trf.xlu0
        %2747 = vxpose.xlu0.b32.start [1/16] %v2438, 128
        %2748 = vxpose.xlu0.b32.cont [2/16] 0.0, 128
        %2749 = vxpose.xlu0.b32.cont [3/16] 0.0, 128
        %2750 = vxpose.xlu0.b32.cont [4/16] 0.0, 128
        %2751 = vxpose.xlu0.b32.cont [5/16] 0.0, 128
        %2752 = vxpose.xlu0.b32.cont [6/16] 0.0, 128
        %2753 = vxpose.xlu0.b32.cont [7/16] 0.0, 128
        %2754 = vxpose.xlu0.b32.cont [8/16] 0.0, 128
        %2755 = vxpose.xlu0.b32.cont [9/16] 0.0, 128
        %2756 = vxpose.xlu0.b32.cont [10/16] 0.0, 128
        %2757 = vxpose.xlu0.b32.cont [11/16] 0.0, 128
        %2758 = vxpose.xlu0.b32.cont [12/16] 0.0, 128
        %2759 = vxpose.xlu0.b32.cont [13/16] 0.0, 128
        %2760 = vxpose.xlu0.b32.cont [14/16] 0.0, 128
        %2761 = vxpose.xlu0.b32.cont [15/16] 0.0, 128
        %2762 = vxpose.xlu0.b32.end [16/16] 0.0, 128
        %v2763 = vpop.trf.xlu0
        %v2764 = vpop.trf.xlu0
        %v2765 = vpop.trf.xlu0
        %v2766 = vpop.trf.xlu0
        %v2767 = vpop.trf.xlu0
        %v2768 = vpop.trf.xlu0
        %v2769 = vpop.trf.xlu0
        %v2770 = vpop.trf.xlu0
        %v2771 = vpop.trf.xlu0
        %v2772 = vpop.trf.xlu0
        %v2773 = vpop.trf.xlu0
        %v2774 = vpop.trf.xlu0
        %v2775 = vpop.trf.xlu0
        %v2776 = vpop.trf.xlu0
        %v2777 = vpop.trf.xlu0
        %v2778 = vpop.trf.xlu0
        %2779 = vxpose.xlu0.b32.start [1/16] %v2511, 128
        %2780 = vxpose.xlu0.b32.cont [2/16] 0.0, 128
        %2781 = vxpose.xlu0.b32.cont [3/16] 0.0, 128
        %2782 = vxpose.xlu0.b32.cont [4/16] 0.0, 128
        %2783 = vxpose.xlu0.b32.cont [5/16] 0.0, 128
        %2784 = vxpose.xlu0.b32.cont [6/16] 0.0, 128
        %2785 = vxpose.xlu0.b32.cont [7/16] 0.0, 128
        %2786 = vxpose.xlu0.b32.cont [8/16] 0.0, 128
        %2787 = vxpose.xlu0.b32.cont [9/16] 0.0, 128
        %2788 = vxpose.xlu0.b32.cont [10/16] 0.0, 128
        %2789 = vxpose.xlu0.b32.cont [11/16] 0.0, 128
        %2790 = vxpose.xlu0.b32.cont [12/16] 0.0, 128
        %2791 = vxpose.xlu0.b32.cont [13/16] 0.0, 128
        %2792 = vxpose.xlu0.b32.cont [14/16] 0.0, 128
        %2793 = vxpose.xlu0.b32.cont [15/16] 0.0, 128
        %2794 = vxpose.xlu0.b32.end [16/16] 0.0, 128
        %v2795 = vpop.trf.xlu0
        %v2796 = vpop.trf.xlu0
        %v2797 = vpop.trf.xlu0
        %v2798 = vpop.trf.xlu0
        %v2799 = vpop.trf.xlu0
        %v2800 = vpop.trf.xlu0
        %v2801 = vpop.trf.xlu0
        %v2802 = vpop.trf.xlu0
        %v2803 = vpop.trf.xlu0
        %v2804 = vpop.trf.xlu0
        %v2805 = vpop.trf.xlu0
        %v2806 = vpop.trf.xlu0
        %v2807 = vpop.trf.xlu0
        %v2808 = vpop.trf.xlu0
        %v2809 = vpop.trf.xlu0
        %v2810 = vpop.trf.xlu0
        %2811 = vxpose.xlu0.b32.start [1/16] %v2584, 128
        %2812 = vxpose.xlu0.b32.cont [2/16] 0.0, 128
        %2813 = vxpose.xlu0.b32.cont [3/16] 0.0, 128
        %2814 = vxpose.xlu0.b32.cont [4/16] 0.0, 128
        %2815 = vxpose.xlu0.b32.cont [5/16] 0.0, 128
        %2816 = vxpose.xlu0.b32.cont [6/16] 0.0, 128
        %2817 = vxpose.xlu0.b32.cont [7/16] 0.0, 128
        %2818 = vxpose.xlu0.b32.cont [8/16] 0.0, 128
        %2819 = vxpose.xlu0.b32.cont [9/16] 0.0, 128
        %2820 = vxpose.xlu0.b32.cont [10/16] 0.0, 128
        %2821 = vxpose.xlu0.b32.cont [11/16] 0.0, 128
        %2822 = vxpose.xlu0.b32.cont [12/16] 0.0, 128
        %2823 = vxpose.xlu0.b32.cont [13/16] 0.0, 128
        %2824 = vxpose.xlu0.b32.cont [14/16] 0.0, 128
        %2825 = vxpose.xlu0.b32.cont [15/16] 0.0, 128
        %2826 = vxpose.xlu0.b32.end [16/16] 0.0, 128
        %v2827 = vpop.trf.xlu0
        %v2828 = vpop.trf.xlu0
        %v2829 = vpop.trf.xlu0
        %v2830 = vpop.trf.xlu0
        %v2831 = vpop.trf.xlu0
        %v2832 = vpop.trf.xlu0
        %v2833 = vpop.trf.xlu0
        %v2834 = vpop.trf.xlu0
        %v2835 = vpop.trf.xlu0
        %v2836 = vpop.trf.xlu0
        %v2837 = vpop.trf.xlu0
        %v2838 = vpop.trf.xlu0
        %v2839 = vpop.trf.xlu0
        %v2840 = vpop.trf.xlu0
        %v2841 = vpop.trf.xlu0
        %v2842 = vpop.trf.xlu0
        %v2843 = vcombine.low %v2603, %v2667
        %v2845 = vunpack.c.l.s4 1983009808
        %v2846 = vunpack.c.0.s8 %v2845
        %v2847 = vlaneseq
        %v2848 = vshrl.u32 %v2847, 7
        %v2849 = vsub.s32 %v2846, %v2848
        %v2850 = vrot.slane %v2843, %v2849
        %v2851 = vcombine.low %v2635, %v2699
        %v2853 = vunpack.c.l.s4 1983009808
        %v2854 = vunpack.c.0.s8 %v2853
        %v2855 = vlaneseq
        %v2856 = vshrl.u32 %v2855, 7
        %v2857 = vsub.s32 %v2854, %v2856
        %v2858 = vrot.slane %v2851, %v2857
        %v2859 = vcombine.low %v2731, %v2795
        %v2861 = vunpack.c.l.s4 1983009808
        %v2862 = vunpack.c.0.s8 %v2861
        %v2863 = vlaneseq
        %v2864 = vshrl.u32 %v2863, 7
        %v2865 = vsub.s32 %v2862, %v2864
        %v2866 = vrot.slane %v2859, %v2865
        %v2867 = vcombine.low %v2763, %v2827
        %v2869 = vunpack.c.l.s4 1983009808
        %v2870 = vunpack.c.0.s8 %v2869
        %v2871 = vlaneseq
        %v2872 = vshrl.u32 %v2871, 7
        %v2873 = vsub.s32 %v2870, %v2872
        %v2874 = vrot.slane %v2867, %v2873
        %v2875 = vcombine.low %v2850, %v2858
        %v2876 = vcombine.high %v2850, %v2858
        %v2878 = vunpack.c.l.s4 1934713408
        %v2879 = vunpack.c.0.s8 %v2878
        %v2880 = vlaneseq
        %v2881 = vshrl.u32 %v2880, 7
        %v2882 = vsub.s32 %v2879, %v2881
        %v2883 = vrot.slane %v2875, %v2882
        %v2885 = vunpack.c.l.s4 1934713408
        %v2886 = vunpack.c.0.s8 %v2885
        %v2887 = vlaneseq
        %v2888 = vshrl.u32 %v2887, 7
        %v2889 = vsub.s32 %v2886, %v2888
        %v2890 = vrot.slane %v2876, %v2889
        %v2891 = vcombine.low %v2866, %v2874
        %v2892 = vcombine.high %v2866, %v2874
        %v2894 = vunpack.c.l.s4 1934713408
        %v2895 = vunpack.c.0.s8 %v2894
        %v2896 = vlaneseq
        %v2897 = vshrl.u32 %v2896, 7
        %v2898 = vsub.s32 %v2895, %v2897
        %v2899 = vrot.slane %v2891, %v2898
        %v2901 = vunpack.c.l.s4 1934713408
        %v2902 = vunpack.c.0.s8 %v2901
        %v2903 = vlaneseq
        %v2904 = vshrl.u32 %v2903, 7
        %v2905 = vsub.s32 %v2902, %v2904
        %v2906 = vrot.slane %v2892, %v2905
        %v2907 = vcombine.low %v2883, %v2899
        %v2908 = vcombine.high %v2883, %v2899
        %v2909 = vcombine.low %v2890, %v2906
        %v2910 = vcombine.high %v2890, %v2906
        %v2912 = vsel %vm2002, %v545, 0
        %v2915 = vsel %vm2002, %v869, 0
        %2917 = vmatprep.subr.mxu0 0.0
        %2918 = vmatpush1.xpose.msra.mxu0 %v2915
        %2919 = vmatprep.subr.mxu0 0.0
        %2920 = vmatpush1.xpose.msra.mxu0 0.0
        %2921 = vmatprep.subr.mxu0 0.0
        %2922 = vmatpush1.xpose.msra.mxu0 0.0
        %2923 = vmatprep.subr.mxu0 0.0
        %2924 = vmatpush1.xpose.msra.mxu0 0.0
        %2925 = vmatprep.subr.mxu0 0.0
        %2926 = vmatpush1.xpose.msra.mxu0 0.0
        %2927 = vmatprep.subr.mxu0 0.0
        %2928 = vmatpush1.xpose.msra.mxu0 0.0
        %2929 = vmatprep.subr.mxu0 0.0
        %2930 = vmatpush1.xpose.msra.mxu0 0.0
        %2931 = vmatprep.subr.mxu0 0.0
        %2932 = vmatpush1.xpose.msra.mxu0 0.0
        %2933 = vmatprep.subr.mxu0 0.0
        %2934 = vmatpush1.xpose.msra.mxu0 0.0
        %2935 = vmatprep.subr.mxu0 0.0
        %2936 = vmatpush1.xpose.msra.mxu0 0.0
        %2937 = vmatprep.subr.mxu0 0.0
        %2938 = vmatpush1.xpose.msra.mxu0 0.0
        %2939 = vmatprep.subr.mxu0 0.0
        %2940 = vmatpush1.xpose.msra.mxu0 0.0
        %2941 = vmatprep.subr.mxu0 0.0
        %2942 = vmatpush1.xpose.msra.mxu0 0.0
        %2943 = vmatprep.subr.mxu0 0.0
        %2944 = vmatpush1.xpose.msra.mxu0 0.0
        %2945 = vmatprep.subr.mxu0 0.0
        %2946 = vmatpush1.xpose.msra.mxu0 0.0
        %2947 = vmatprep.subr.mxu0 0.0
        %2948 = vmatpush1.xpose.msra.mxu0 0.0
        %2949 = vmatprep.subr.mxu0 0.0
        %2950 = vmatpush1.xpose.msra.mxu0 0.0
        %2951 = vmatprep.subr.mxu0 0.0
        %2952 = vmatpush1.xpose.msra.mxu0 0.0
        %2953 = vmatprep.subr.mxu0 0.0
        %2954 = vmatpush1.xpose.msra.mxu0 0.0
        %2955 = vmatprep.subr.mxu0 0.0
        %2956 = vmatpush1.xpose.msra.mxu0 0.0
        %2957 = vmatprep.subr.mxu0 0.0
        %2958 = vmatpush1.xpose.msra.mxu0 0.0
        %2959 = vmatprep.subr.mxu0 0.0
        %2960 = vmatpush1.xpose.msra.mxu0 0.0
        %2961 = vmatprep.subr.mxu0 0.0
        %2962 = vmatpush1.xpose.msra.mxu0 0.0
        %2963 = vmatprep.subr.mxu0 0.0
        %2964 = vmatpush1.xpose.msra.mxu0 0.0
        %2965 = vmatprep.subr.mxu0 0.0
        %2966 = vmatpush1.xpose.msra.mxu0 0.0
        %2967 = vmatprep.subr.mxu0 0.0
        %2968 = vmatpush1.xpose.msra.mxu0 0.0
        %2969 = vmatprep.subr.mxu0 0.0
        %2970 = vmatpush1.xpose.msra.mxu0 0.0
        %2971 = vmatprep.subr.mxu0 0.0
        %2972 = vmatpush1.xpose.msra.mxu0 0.0
        %2973 = vmatprep.subr.mxu0 0.0
        %2974 = vmatpush1.xpose.msra.mxu0 0.0
        %2975 = vmatprep.subr.mxu0 0.0
        %2976 = vmatpush1.xpose.msra.mxu0 0.0
        %2977 = vmatprep.subr.mxu0 0.0
        %2978 = vmatpush1.xpose.msra.mxu0 0.0
        %2979 = vmatprep.subr.mxu0 0.0
        %2980 = vmatpush1.xpose.msra.mxu0 0.0
        %2981 = vmatprep.mubr.f32.mxu0 0.0
        %2982 = vmatmul.mubr.f32.gmra.mrb[0].mxu0 %v2912
        %v2983 = vpop.f32.mrb[0].mxu0
        %v2984 = vadd.f32 %v2907, %v2983
        %v2985 = vpop.f32.mrb[0].mxu0
        %2986 = vdwg.mxu0
        %v2988 = vsel %vm2002, %v615, 0
        %v2991 = vsel %vm2002, %v939, 0
        %2993 = vmatprep.subr.mxu0 0.0
        %2994 = vmatpush1.xpose.msra.mxu0 %v2991
        %2995 = vmatprep.subr.mxu0 0.0
        %2996 = vmatpush1.xpose.msra.mxu0 0.0
        %2997 = vmatprep.subr.mxu0 0.0
        %2998 = vmatpush1.xpose.msra.mxu0 0.0
        %2999 = vmatprep.subr.mxu0 0.0
        %3000 = vmatpush1.xpose.msra.mxu0 0.0
        %3001 = vmatprep.subr.mxu0 0.0
        %3002 = vmatpush1.xpose.msra.mxu0 0.0
        %3003 = vmatprep.subr.mxu0 0.0
        %3004 = vmatpush1.xpose.msra.mxu0 0.0
        %3005 = vmatprep.subr.mxu0 0.0
        %3006 = vmatpush1.xpose.msra.mxu0 0.0
        %3007 = vmatprep.subr.mxu0 0.0
        %3008 = vmatpush1.xpose.msra.mxu0 0.0
        %3009 = vmatprep.subr.mxu0 0.0
        %3010 = vmatpush1.xpose.msra.mxu0 0.0
        %3011 = vmatprep.subr.mxu0 0.0
        %3012 = vmatpush1.xpose.msra.mxu0 0.0
        %3013 = vmatprep.subr.mxu0 0.0
        %3014 = vmatpush1.xpose.msra.mxu0 0.0
        %3015 = vmatprep.subr.mxu0 0.0
        %3016 = vmatpush1.xpose.msra.mxu0 0.0
        %3017 = vmatprep.subr.mxu0 0.0
        %3018 = vmatpush1.xpose.msra.mxu0 0.0
        %3019 = vmatprep.subr.mxu0 0.0
        %3020 = vmatpush1.xpose.msra.mxu0 0.0
        %3021 = vmatprep.subr.mxu0 0.0
        %3022 = vmatpush1.xpose.msra.mxu0 0.0
        %3023 = vmatprep.subr.mxu0 0.0
        %3024 = vmatpush1.xpose.msra.mxu0 0.0
        %3025 = vmatprep.subr.mxu0 0.0
        %3026 = vmatpush1.xpose.msra.mxu0 0.0
        %3027 = vmatprep.subr.mxu0 0.0
        %3028 = vmatpush1.xpose.msra.mxu0 0.0
        %3029 = vmatprep.subr.mxu0 0.0
        %3030 = vmatpush1.xpose.msra.mxu0 0.0
        %3031 = vmatprep.subr.mxu0 0.0
        %3032 = vmatpush1.xpose.msra.mxu0 0.0
        %3033 = vmatprep.subr.mxu0 0.0
        %3034 = vmatpush1.xpose.msra.mxu0 0.0
        %3035 = vmatprep.subr.mxu0 0.0
        %3036 = vmatpush1.xpose.msra.mxu0 0.0
        %3037 = vmatprep.subr.mxu0 0.0
        %3038 = vmatpush1.xpose.msra.mxu0 0.0
        %3039 = vmatprep.subr.mxu0 0.0
        %3040 = vmatpush1.xpose.msra.mxu0 0.0
        %3041 = vmatprep.subr.mxu0 0.0
        %3042 = vmatpush1.xpose.msra.mxu0 0.0
        %3043 = vmatprep.subr.mxu0 0.0
        %3044 = vmatpush1.xpose.msra.mxu0 0.0
        %3045 = vmatprep.subr.mxu0 0.0
        %3046 = vmatpush1.xpose.msra.mxu0 0.0
        %3047 = vmatprep.subr.mxu0 0.0
        %3048 = vmatpush1.xpose.msra.mxu0 0.0
        %3049 = vmatprep.subr.mxu0 0.0
        %3050 = vmatpush1.xpose.msra.mxu0 0.0
        %3051 = vmatprep.subr.mxu0 0.0
        %3052 = vmatpush1.xpose.msra.mxu0 0.0
        %3053 = vmatprep.subr.mxu0 0.0
        %3054 = vmatpush1.xpose.msra.mxu0 0.0
        %3055 = vmatprep.subr.mxu0 0.0
        %3056 = vmatpush1.xpose.msra.mxu0 0.0
        %3057 = vmatprep.mubr.f32.mxu0 0.0
        %3058 = vmatmul.mubr.f32.gmra.mrb[0].mxu0 %v2988
        %v3059 = vpop.f32.mrb[0].mxu0
        %v3060 = vadd.f32 %v2908, %v3059
        %v3061 = vpop.f32.mrb[0].mxu0
        %3062 = vdwg.mxu0
        %v3064 = vsel %vm2002, %v685, 0
        %v3067 = vsel %vm2002, %v1009, 0
        %3069 = vmatprep.subr.mxu0 0.0
        %3070 = vmatpush1.xpose.msra.mxu0 %v3067
        %3071 = vmatprep.subr.mxu0 0.0
        %3072 = vmatpush1.xpose.msra.mxu0 0.0
        %3073 = vmatprep.subr.mxu0 0.0
        %3074 = vmatpush1.xpose.msra.mxu0 0.0
        %3075 = vmatprep.subr.mxu0 0.0
        %3076 = vmatpush1.xpose.msra.mxu0 0.0
        %3077 = vmatprep.subr.mxu0 0.0
        %3078 = vmatpush1.xpose.msra.mxu0 0.0
        %3079 = vmatprep.subr.mxu0 0.0
        %3080 = vmatpush1.xpose.msra.mxu0 0.0
        %3081 = vmatprep.subr.mxu0 0.0
        %3082 = vmatpush1.xpose.msra.mxu0 0.0
        %3083 = vmatprep.subr.mxu0 0.0
        %3084 = vmatpush1.xpose.msra.mxu0 0.0
        %3085 = vmatprep.subr.mxu0 0.0
        %3086 = vmatpush1.xpose.msra.mxu0 0.0
        %3087 = vmatprep.subr.mxu0 0.0
        %3088 = vmatpush1.xpose.msra.mxu0 0.0
        %3089 = vmatprep.subr.mxu0 0.0
        %3090 = vmatpush1.xpose.msra.mxu0 0.0
        %3091 = vmatprep.subr.mxu0 0.0
        %3092 = vmatpush1.xpose.msra.mxu0 0.0
        %3093 = vmatprep.subr.mxu0 0.0
        %3094 = vmatpush1.xpose.msra.mxu0 0.0
        %3095 = vmatprep.subr.mxu0 0.0
        %3096 = vmatpush1.xpose.msra.mxu0 0.0
        %3097 = vmatprep.subr.mxu0 0.0
        %3098 = vmatpush1.xpose.msra.mxu0 0.0
        %3099 = vmatprep.subr.mxu0 0.0
        %3100 = vmatpush1.xpose.msra.mxu0 0.0
        %3101 = vmatprep.subr.mxu0 0.0
        %3102 = vmatpush1.xpose.msra.mxu0 0.0
        %3103 = vmatprep.subr.mxu0 0.0
        %3104 = vmatpush1.xpose.msra.mxu0 0.0
        %3105 = vmatprep.subr.mxu0 0.0
        %3106 = vmatpush1.xpose.msra.mxu0 0.0
        %3107 = vmatprep.subr.mxu0 0.0
        %3108 = vmatpush1.xpose.msra.mxu0 0.0
        %3109 = vmatprep.subr.mxu0 0.0
        %3110 = vmatpush1.xpose.msra.mxu0 0.0
        %3111 = vmatprep.subr.mxu0 0.0
        %3112 = vmatpush1.xpose.msra.mxu0 0.0
        %3113 = vmatprep.subr.mxu0 0.0
        %3114 = vmatpush1.xpose.msra.mxu0 0.0
        %3115 = vmatprep.subr.mxu0 0.0
        %3116 = vmatpush1.xpose.msra.mxu0 0.0
        %3117 = vmatprep.subr.mxu0 0.0
        %3118 = vmatpush1.xpose.msra.mxu0 0.0
        %3119 = vmatprep.subr.mxu0 0.0
        %3120 = vmatpush1.xpose.msra.mxu0 0.0
        %3121 = vmatprep.subr.mxu0 0.0
        %3122 = vmatpush1.xpose.msra.mxu0 0.0
        %3123 = vmatprep.subr.mxu0 0.0
        %3124 = vmatpush1.xpose.msra.mxu0 0.0
        %3125 = vmatprep.subr.mxu0 0.0
        %3126 = vmatpush1.xpose.msra.mxu0 0.0
        %3127 = vmatprep.subr.mxu0 0.0
        %3128 = vmatpush1.xpose.msra.mxu0 0.0
        %3129 = vmatprep.subr.mxu0 0.0
        %3130 = vmatpush1.xpose.msra.mxu0 0.0
        %3131 = vmatprep.subr.mxu0 0.0
        %3132 = vmatpush1.xpose.msra.mxu0 0.0
        %3133 = vmatprep.mubr.f32.mxu0 0.0
        %3134 = vmatmul.mubr.f32.gmra.mrb[0].mxu0 %v3064
        %v3135 = vpop.f32.mrb[0].mxu0
        %v3136 = vadd.f32 %v2909, %v3135
        %v3137 = vpop.f32.mrb[0].mxu0
        %3138 = vdwg.mxu0
        %v3140 = vsel %vm2002, %v755, 0
        %v3143 = vsel %vm2002, %v1079, 0
        %3145 = vmatprep.subr.mxu0 0.0
        %3146 = vmatpush1.xpose.msra.mxu0 %v3143
        %3147 = vmatprep.subr.mxu0 0.0
        %3148 = vmatpush1.xpose.msra.mxu0 0.0
        %3149 = vmatprep.subr.mxu0 0.0
        %3150 = vmatpush1.xpose.msra.mxu0 0.0
        %3151 = vmatprep.subr.mxu0 0.0
        %3152 = vmatpush1.xpose.msra.mxu0 0.0
        %3153 = vmatprep.subr.mxu0 0.0
        %3154 = vmatpush1.xpose.msra.mxu0 0.0
        %3155 = vmatprep.subr.mxu0 0.0
        %3156 = vmatpush1.xpose.msra.mxu0 0.0
        %3157 = vmatprep.subr.mxu0 0.0
        %3158 = vmatpush1.xpose.msra.mxu0 0.0
        %3159 = vmatprep.subr.mxu0 0.0
        %3160 = vmatpush1.xpose.msra.mxu0 0.0
        %3161 = vmatprep.subr.mxu0 0.0
        %3162 = vmatpush1.xpose.msra.mxu0 0.0
        %3163 = vmatprep.subr.mxu0 0.0
        %3164 = vmatpush1.xpose.msra.mxu0 0.0
        %3165 = vmatprep.subr.mxu0 0.0
        %3166 = vmatpush1.xpose.msra.mxu0 0.0
        %3167 = vmatprep.subr.mxu0 0.0
        %3168 = vmatpush1.xpose.msra.mxu0 0.0
        %3169 = vmatprep.subr.mxu0 0.0
        %3170 = vmatpush1.xpose.msra.mxu0 0.0
        %3171 = vmatprep.subr.mxu0 0.0
        %3172 = vmatpush1.xpose.msra.mxu0 0.0
        %3173 = vmatprep.subr.mxu0 0.0
        %3174 = vmatpush1.xpose.msra.mxu0 0.0
        %3175 = vmatprep.subr.mxu0 0.0
        %3176 = vmatpush1.xpose.msra.mxu0 0.0
        %3177 = vmatprep.subr.mxu0 0.0
        %3178 = vmatpush1.xpose.msra.mxu0 0.0
        %3179 = vmatprep.subr.mxu0 0.0
        %3180 = vmatpush1.xpose.msra.mxu0 0.0
        %3181 = vmatprep.subr.mxu0 0.0
        %3182 = vmatpush1.xpose.msra.mxu0 0.0
        %3183 = vmatprep.subr.mxu0 0.0
        %3184 = vmatpush1.xpose.msra.mxu0 0.0
        %3185 = vmatprep.subr.mxu0 0.0
        %3186 = vmatpush1.xpose.msra.mxu0 0.0
        %3187 = vmatprep.subr.mxu0 0.0
        %3188 = vmatpush1.xpose.msra.mxu0 0.0
        %3189 = vmatprep.subr.mxu0 0.0
        %3190 = vmatpush1.xpose.msra.mxu0 0.0
        %3191 = vmatprep.subr.mxu0 0.0
        %3192 = vmatpush1.xpose.msra.mxu0 0.0
        %3193 = vmatprep.subr.mxu0 0.0
        %3194 = vmatpush1.xpose.msra.mxu0 0.0
        %3195 = vmatprep.subr.mxu0 0.0
        %3196 = vmatpush1.xpose.msra.mxu0 0.0
        %3197 = vmatprep.subr.mxu0 0.0
        %3198 = vmatpush1.xpose.msra.mxu0 0.0
        %3199 = vmatprep.subr.mxu0 0.0
        %3200 = vmatpush1.xpose.msra.mxu0 0.0
        %3201 = vmatprep.subr.mxu0 0.0
        %3202 = vmatpush1.xpose.msra.mxu0 0.0
        %3203 = vmatprep.subr.mxu0 0.0
        %3204 = vmatpush1.xpose.msra.mxu0 0.0
        %3205 = vmatprep.subr.mxu0 0.0
        %3206 = vmatpush1.xpose.msra.mxu0 0.0
        %3207 = vmatprep.subr.mxu0 0.0
        %3208 = vmatpush1.xpose.msra.mxu0 0.0
        %3209 = vmatprep.mubr.f32.mxu0 0.0
        %3210 = vmatmul.mubr.f32.gmra.mrb[0].mxu0 %v3140
        %v3211 = vpop.f32.mrb[0].mxu0
        %v3212 = vadd.f32 %v2910, %v3211
        %v3213 = vpop.f32.mrb[0].mxu0
        %3214 = vdwg.mxu0
        %v3215 = vmul.f32 %v2984, 0.35355338
        %v3216 = vmul.f32 %v3060, 0.35355338
        %v3217 = vmul.f32 %v3136, 0.35355338
        %v3218 = vmul.f32 %v3212, 0.35355338
        %v3219 = vld [vmem:[%s428] sm:$0xff]
        %v3220 = vld [vmem:[%s428 + $0x8] sm:$0xff]
        %v3221 = vld [vmem:[%s428 + $0x10] sm:$0xff]
        %v3222 = vld [vmem:[%s428 + $0x18] sm:$0xff]
        %v3223 = vadd.f32 %v3215, %v3219
        %v3224 = vadd.f32 %v3216, %v3220
        %v3225 = vadd.f32 %v3217, %v3221
        %v3226 = vadd.f32 %v3218, %v3222
        %v3227 = vsel %vm2002, %v3223, -inf
        %3228 = vmax.xlane.f32.xlu0 %v3227
        %v3229 = vpop.xlane.xlu0 %3228
        %v3230 = vsel %vm2002, %v3224, -inf
        %3231 = vmax.xlane.f32.xlu0 %v3230
        %v3232 = vpop.xlane.xlu0 %3231
        %v3233 = vsel %vm2002, %v3225, -inf
        %3234 = vmax.xlane.f32.xlu0 %v3233
        %v3235 = vpop.xlane.xlu0 %3234
        %v3236 = vsel %vm2002, %v3226, -inf
        %3237 = vmax.xlane.f32.xlu0 %v3236
        %v3238 = vpop.xlane.xlu0 %3237
        %v3239 = vsub.f32 %v3223, %v3229
        %v3240 = vsub.f32 %v3224, %v3232
        %v3241 = vsub.f32 %v3225, %v3235
        %v3242 = vsub.f32 %v3226, %v3238
        %v3243 = vmul.f32 %v3239, 1.442695
        %v3244 = vpow.pop %v3243
        %v3245 = vmul.f32 %v3240, 1.442695
        %v3246 = vpow.pop %v3245
        %v3247 = vmul.f32 %v3241, 1.442695
        %v3248 = vpow.pop %v3247
        %v3249 = vmul.f32 %v3242, 1.442695
        %v3250 = vpow.pop %v3249
        %v3251 = vsel %vm2002, %v3244, 0.0
        %3252 = vadd.xlane.f32.xlu0 %v3251
        %v3253 = vpop.xlane.xlu0 %3252
        %v3254 = vsel %vm2002, %v3246, 0.0
        %3255 = vadd.xlane.f32.xlu0 %v3254
        %v3256 = vpop.xlane.xlu0 %3255
        %v3257 = vsel %vm2002, %v3248, 0.0
        %3258 = vadd.xlane.f32.xlu0 %v3257
        %v3259 = vpop.xlane.xlu0 %3258
        %v3260 = vsel %vm2002, %v3250, 0.0
        %3261 = vadd.xlane.f32.xlu0 %v3260
        %v3262 = vpop.xlane.xlu0 %3261
        %v3263 = vrcp.pop %v3253
        %v3264 = vrcp.pop %v3256
        %v3265 = vrcp.pop %v3259
        %v3266 = vrcp.pop %v3262
        %v3267 = vmul.f32 %v3244, %v3263
        %v3268 = vmul.f32 %v3246, %v3264
        %v3269 = vmul.f32 %v3248, %v3265
        %v3270 = vmul.f32 %v3250, %v3266
        %v3271 = vld [vmem:[%s10] sm:$0xff]
        %v3272 = vld [vmem:[%s10 + $0x8] sm:$0xff]
        %v3273 = vld [vmem:[%s10 + $0x10] sm:$0xff]
        %v3274 = vld [vmem:[%s10 + $0x18] sm:$0xff]
        %v3275 = vld [vmem:[%s10 + $0x20] sm:$0xff]
        %v3276 = vld [vmem:[%s10 + $0x28] sm:$0xff]
        %v3277 = vld [vmem:[%s10 + $0x30] sm:$0xff]
        %v3278 = vld [vmem:[%s10 + $0x38] sm:$0xff]
        %3279 = vxpose.xlu0.b32.start [1/16] %v3267, 128
        %3280 = vxpose.xlu0.b32.cont [2/16] 0.0, 128
        %3281 = vxpose.xlu0.b32.cont [3/16] 0.0, 128
        %3282 = vxpose.xlu0.b32.cont [4/16] 0.0, 128
        %3283 = vxpose.xlu0.b32.cont [5/16] 0.0, 128
        %3284 = vxpose.xlu0.b32.cont [6/16] 0.0, 128
        %3285 = vxpose.xlu0.b32.cont [7/16] 0.0, 128
        %3286 = vxpose.xlu0.b32.cont [8/16] 0.0, 128
        %3287 = vxpose.xlu0.b32.cont [9/16] 0.0, 128
        %3288 = vxpose.xlu0.b32.cont [10/16] 0.0, 128
        %3289 = vxpose.xlu0.b32.cont [11/16] 0.0, 128
        %3290 = vxpose.xlu0.b32.cont [12/16] 0.0, 128
        %3291 = vxpose.xlu0.b32.cont [13/16] 0.0, 128
        %3292 = vxpose.xlu0.b32.cont [14/16] 0.0, 128
        %3293 = vxpose.xlu0.b32.cont [15/16] 0.0, 128
        %3294 = vxpose.xlu0.b32.end [16/16] 0.0, 128
        %v3295 = vpop.trf.xlu0
        %v3296 = vpop.trf.xlu0
        %v3297 = vpop.trf.xlu0
        %v3298 = vpop.trf.xlu0
        %v3299 = vpop.trf.xlu0
        %v3300 = vpop.trf.xlu0
        %v3301 = vpop.trf.xlu0
        %v3302 = vpop.trf.xlu0
        %v3303 = vpop.trf.xlu0
        %v3304 = vpop.trf.xlu0
        %v3305 = vpop.trf.xlu0
        %v3306 = vpop.trf.xlu0
        %v3307 = vpop.trf.xlu0
        %v3308 = vpop.trf.xlu0
        %v3309 = vpop.trf.xlu0
        %v3310 = vpop.trf.xlu0
        %3311 = vxpose.xlu0.b32.start [1/16] %v3268, 128
        %3312 = vxpose.xlu0.b32.cont [2/16] 0.0, 128
        %3313 = vxpose.xlu0.b32.cont [3/16] 0.0, 128
        %3314 = vxpose.xlu0.b32.cont [4/16] 0.0, 128
        %3315 = vxpose.xlu0.b32.cont [5/16] 0.0, 128
        %3316 = vxpose.xlu0.b32.cont [6/16] 0.0, 128
        %3317 = vxpose.xlu0.b32.cont [7/16] 0.0, 128
        %3318 = vxpose.xlu0.b32.cont [8/16] 0.0, 128
        %3319 = vxpose.xlu0.b32.cont [9/16] 0.0, 128
        %3320 = vxpose.xlu0.b32.cont [10/16] 0.0, 128
        %3321 = vxpose.xlu0.b32.cont [11/16] 0.0, 128
        %3322 = vxpose.xlu0.b32.cont [12/16] 0.0, 128
        %3323 = vxpose.xlu0.b32.cont [13/16] 0.0, 128
        %3324 = vxpose.xlu0.b32.cont [14/16] 0.0, 128
        %3325 = vxpose.xlu0.b32.cont [15/16] 0.0, 128
        %3326 = vxpose.xlu0.b32.end [16/16] 0.0, 128
        %v3327 = vpop.trf.xlu0
        %v3328 = vpop.trf.xlu0
        %v3329 = vpop.trf.xlu0
        %v3330 = vpop.trf.xlu0
        %v3331 = vpop.trf.xlu0
        %v3332 = vpop.trf.xlu0
        %v3333 = vpop.trf.xlu0
        %v3334 = vpop.trf.xlu0
        %v3335 = vpop.trf.xlu0
        %v3336 = vpop.trf.xlu0
        %v3337 = vpop.trf.xlu0
        %v3338 = vpop.trf.xlu0
        %v3339 = vpop.trf.xlu0
        %v3340 = vpop.trf.xlu0
        %v3341 = vpop.trf.xlu0
        %v3342 = vpop.trf.xlu0
        %3343 = vxpose.xlu0.b32.start [1/16] %v3269, 128
        %3344 = vxpose.xlu0.b32.cont [2/16] 0.0, 128
        %3345 = vxpose.xlu0.b32.cont [3/16] 0.0, 128
        %3346 = vxpose.xlu0.b32.cont [4/16] 0.0, 128
        %3347 = vxpose.xlu0.b32.cont [5/16] 0.0, 128
        %3348 = vxpose.xlu0.b32.cont [6/16] 0.0, 128
        %3349 = vxpose.xlu0.b32.cont [7/16] 0.0, 128
        %3350 = vxpose.xlu0.b32.cont [8/16] 0.0, 128
        %3351 = vxpose.xlu0.b32.cont [9/16] 0.0, 128
        %3352 = vxpose.xlu0.b32.cont [10/16] 0.0, 128
        %3353 = vxpose.xlu0.b32.cont [11/16] 0.0, 128
        %3354 = vxpose.xlu0.b32.cont [12/16] 0.0, 128
        %3355 = vxpose.xlu0.b32.cont [13/16] 0.0, 128
        %3356 = vxpose.xlu0.b32.cont [14/16] 0.0, 128
        %3357 = vxpose.xlu0.b32.cont [15/16] 0.0, 128
        %3358 = vxpose.xlu0.b32.end [16/16] 0.0, 128
        %v3359 = vpop.trf.xlu0
        %v3360 = vpop.trf.xlu0
        %v3361 = vpop.trf.xlu0
        %v3362 = vpop.trf.xlu0
        %v3363 = vpop.trf.xlu0
        %v3364 = vpop.trf.xlu0
        %v3365 = vpop.trf.xlu0
        %v3366 = vpop.trf.xlu0
        %v3367 = vpop.trf.xlu0
        %v3368 = vpop.trf.xlu0
        %v3369 = vpop.trf.xlu0
        %v3370 = vpop.trf.xlu0
        %v3371 = vpop.trf.xlu0
        %v3372 = vpop.trf.xlu0
        %v3373 = vpop.trf.xlu0
        %v3374 = vpop.trf.xlu0
        %3375 = vxpose.xlu0.b32.start [1/16] %v3270, 128
        %3376 = vxpose.xlu0.b32.cont [2/16] 0.0, 128
        %3377 = vxpose.xlu0.b32.cont [3/16] 0.0, 128
        %3378 = vxpose.xlu0.b32.cont [4/16] 0.0, 128
        %3379 = vxpose.xlu0.b32.cont [5/16] 0.0, 128
        %3380 = vxpose.xlu0.b32.cont [6/16] 0.0, 128
        %3381 = vxpose.xlu0.b32.cont [7/16] 0.0, 128
        %3382 = vxpose.xlu0.b32.cont [8/16] 0.0, 128
        %3383 = vxpose.xlu0.b32.cont [9/16] 0.0, 128
        %3384 = vxpose.xlu0.b32.cont [10/16] 0.0, 128
        %3385 = vxpose.xlu0.b32.cont [11/16] 0.0, 128
        %3386 = vxpose.xlu0.b32.cont [12/16] 0.0, 128
        %3387 = vxpose.xlu0.b32.cont [13/16] 0.0, 128
        %3388 = vxpose.xlu0.b32.cont [14/16] 0.0, 128
        %3389 = vxpose.xlu0.b32.cont [15/16] 0.0, 128
        %3390 = vxpose.xlu0.b32.end [16/16] 0.0, 128
        %v3391 = vpop.trf.xlu0
        %v3392 = vpop.trf.xlu0
        %v3393 = vpop.trf.xlu0
        %v3394 = vpop.trf.xlu0
        %v3395 = vpop.trf.xlu0
        %v3396 = vpop.trf.xlu0
        %v3397 = vpop.trf.xlu0
        %v3398 = vpop.trf.xlu0
        %v3399 = vpop.trf.xlu0
        %v3400 = vpop.trf.xlu0
        %v3401 = vpop.trf.xlu0
        %v3402 = vpop.trf.xlu0
        %v3403 = vpop.trf.xlu0
        %v3404 = vpop.trf.xlu0
        %v3405 = vpop.trf.xlu0
        %v3406 = vpop.trf.xlu0
        %v3407 = vcombine.low %v3295, %v3359
        %v3408 = vcombine.high %v3295, %v3359
        %v3410 = vunpack.c.l.s4 1983009808
        %v3411 = vunpack.c.0.s8 %v3410
        %v3412 = vlaneseq
        %v3413 = vshrl.u32 %v3412, 7
        %v3414 = vsub.s32 %v3411, %v3413
        %v3415 = vrot.slane %v3407, %v3414
        %v3417 = vunpack.c.l.s4 1983009808
        %v3418 = vunpack.c.0.s8 %v3417
        %v3419 = vlaneseq
        %v3420 = vshrl.u32 %v3419, 7
        %v3421 = vsub.s32 %v3418, %v3420
        %v3422 = vrot.slane %v3408, %v3421
        %v3423 = vcombine.low %v3327, %v3391
        %v3424 = vcombine.high %v3327, %v3391
        %v3426 = vunpack.c.l.s4 1983009808
        %v3427 = vunpack.c.0.s8 %v3426
        %v3428 = vlaneseq
        %v3429 = vshrl.u32 %v3428, 7
        %v3430 = vsub.s32 %v3427, %v3429
        %v3431 = vrot.slane %v3423, %v3430
        %v3433 = vunpack.c.l.s4 1983009808
        %v3434 = vunpack.c.0.s8 %v3433
        %v3435 = vlaneseq
        %v3436 = vshrl.u32 %v3435, 7
        %v3437 = vsub.s32 %v3434, %v3436
        %v3438 = vrot.slane %v3424, %v3437
        %v3439 = vcombine.low %v3415, %v3431
        %v3440 = vcombine.high %v3415, %v3431
        %v3442 = vunpack.c.l.s4 1934713408
        %v3443 = vunpack.c.0.s8 %v3442
        %v3444 = vlaneseq
        %v3445 = vshrl.u32 %v3444, 7
        %v3446 = vsub.s32 %v3443, %v3445
        %v3447 = vrot.slane %v3439, %v3446
        %v3449 = vunpack.c.l.s4 1934713408
        %v3450 = vunpack.c.0.s8 %v3449
        %v3451 = vlaneseq
        %v3452 = vshrl.u32 %v3451, 7
        %v3453 = vsub.s32 %v3450, %v3452
        %v3454 = vrot.slane %v3440, %v3453
        %v3455 = vcombine.low %v3422, %v3438
        %v3456 = vcombine.high %v3422, %v3438
        %v3458 = vunpack.c.l.s4 1934713408
        %v3459 = vunpack.c.0.s8 %v3458
        %v3460 = vlaneseq
        %v3461 = vshrl.u32 %v3460, 7
        %v3462 = vsub.s32 %v3459, %v3461
        %v3463 = vrot.slane %v3455, %v3462
        %v3465 = vunpack.c.l.s4 1934713408
        %v3466 = vunpack.c.0.s8 %v3465
        %v3467 = vlaneseq
        %v3468 = vshrl.u32 %v3467, 7
        %v3469 = vsub.s32 %v3466, %v3468
        %v3470 = vrot.slane %v3456, %v3469
        %v3471 = vcombine.high %v3447, 0.0
        %v3472 = vcombine.high %v3454, 0.0
        %v3473 = vcombine.high %v3463, 0.0
        %v3474 = vcombine.high %v3470, 0.0
        %3475 = vxpose.xlu0.b32.start [1/16] %v3447, 128
        %3476 = vxpose.xlu0.b32.cont [2/16] 0.0, 128
        %3477 = vxpose.xlu0.b32.cont [3/16] 0.0, 128
        %3478 = vxpose.xlu0.b32.cont [4/16] 0.0, 128
        %3479 = vxpose.xlu0.b32.cont [5/16] 0.0, 128
        %3480 = vxpose.xlu0.b32.cont [6/16] 0.0, 128
        %3481 = vxpose.xlu0.b32.cont [7/16] 0.0, 128
        %3482 = vxpose.xlu0.b32.cont [8/16] 0.0, 128
        %3483 = vxpose.xlu0.b32.cont [9/16] 0.0, 128
        %3484 = vxpose.xlu0.b32.cont [10/16] 0.0, 128
        %3485 = vxpose.xlu0.b32.cont [11/16] 0.0, 128
        %3486 = vxpose.xlu0.b32.cont [12/16] 0.0, 128
        %3487 = vxpose.xlu0.b32.cont [13/16] 0.0, 128
        %3488 = vxpose.xlu0.b32.cont [14/16] 0.0, 128
        %3489 = vxpose.xlu0.b32.cont [15/16] 0.0, 128
        %3490 = vxpose.xlu0.b32.end [16/16] 0.0, 128
        %v3491 = vpop.trf.xlu0
        %v3492 = vpop.trf.xlu0
        %v3493 = vpop.trf.xlu0
        %v3494 = vpop.trf.xlu0
        %v3495 = vpop.trf.xlu0
        %v3496 = vpop.trf.xlu0
        %v3497 = vpop.trf.xlu0
        %v3498 = vpop.trf.xlu0
        %v3499 = vpop.trf.xlu0
        %v3500 = vpop.trf.xlu0
        %v3501 = vpop.trf.xlu0
        %v3502 = vpop.trf.xlu0
        %v3503 = vpop.trf.xlu0
        %v3504 = vpop.trf.xlu0
        %v3505 = vpop.trf.xlu0
        %v3506 = vpop.trf.xlu0
        %3507 = vxpose.xlu0.b32.start [1/16] %v3471, 128
        %3508 = vxpose.xlu0.b32.cont [2/16] 0.0, 128
        %3509 = vxpose.xlu0.b32.cont [3/16] 0.0, 128
        %3510 = vxpose.xlu0.b32.cont [4/16] 0.0, 128
        %3511 = vxpose.xlu0.b32.cont [5/16] 0.0, 128
        %3512 = vxpose.xlu0.b32.cont [6/16] 0.0, 128
        %3513 = vxpose.xlu0.b32.cont [7/16] 0.0, 128
        %3514 = vxpose.xlu0.b32.cont [8/16] 0.0, 128
        %3515 = vxpose.xlu0.b32.cont [9/16] 0.0, 128
        %3516 = vxpose.xlu0.b32.cont [10/16] 0.0, 128
        %3517 = vxpose.xlu0.b32.cont [11/16] 0.0, 128
        %3518 = vxpose.xlu0.b32.cont [12/16] 0.0, 128
        %3519 = vxpose.xlu0.b32.cont [13/16] 0.0, 128
        %3520 = vxpose.xlu0.b32.cont [14/16] 0.0, 128
        %3521 = vxpose.xlu0.b32.cont [15/16] 0.0, 128
        %3522 = vxpose.xlu0.b32.end [16/16] 0.0, 128
        %v3523 = vpop.trf.xlu0
        %v3524 = vpop.trf.xlu0
        %v3525 = vpop.trf.xlu0
        %v3526 = vpop.trf.xlu0
        %v3527 = vpop.trf.xlu0
        %v3528 = vpop.trf.xlu0
        %v3529 = vpop.trf.xlu0
        %v3530 = vpop.trf.xlu0
        %v3531 = vpop.trf.xlu0
        %v3532 = vpop.trf.xlu0
        %v3533 = vpop.trf.xlu0
        %v3534 = vpop.trf.xlu0
        %v3535 = vpop.trf.xlu0
        %v3536 = vpop.trf.xlu0
        %v3537 = vpop.trf.xlu0
        %v3538 = vpop.trf.xlu0
        %3539 = vxpose.xlu0.b32.start [1/16] %v3454, 128
        %3540 = vxpose.xlu0.b32.cont [2/16] 0.0, 128
        %3541 = vxpose.xlu0.b32.cont [3/16] 0.0, 128
        %3542 = vxpose.xlu0.b32.cont [4/16] 0.0, 128
        %3543 = vxpose.xlu0.b32.cont [5/16] 0.0, 128
        %3544 = vxpose.xlu0.b32.cont [6/16] 0.0, 128
        %3545 = vxpose.xlu0.b32.cont [7/16] 0.0, 128
        %3546 = vxpose.xlu0.b32.cont [8/16] 0.0, 128
        %3547 = vxpose.xlu0.b32.cont [9/16] 0.0, 128
        %3548 = vxpose.xlu0.b32.cont [10/16] 0.0, 128
        %3549 = vxpose.xlu0.b32.cont [11/16] 0.0, 128
        %3550 = vxpose.xlu0.b32.cont [12/16] 0.0, 128
        %3551 = vxpose.xlu0.b32.cont [13/16] 0.0, 128
        %3552 = vxpose.xlu0.b32.cont [14/16] 0.0, 128
        %3553 = vxpose.xlu0.b32.cont [15/16] 0.0, 128
        %3554 = vxpose.xlu0.b32.end [16/16] 0.0, 128
        %v3555 = vpop.trf.xlu0
        %v3556 = vpop.trf.xlu0
        %v3557 = vpop.trf.xlu0
        %v3558 = vpop.trf.xlu0
        %v3559 = vpop.trf.xlu0
        %v3560 = vpop.trf.xlu0
        %v3561 = vpop.trf.xlu0
        %v3562 = vpop.trf.xlu0
        %v3563 = vpop.trf.xlu0
        %v3564 = vpop.trf.xlu0
        %v3565 = vpop.trf.xlu0
        %v3566 = vpop.trf.xlu0
        %v3567 = vpop.trf.xlu0
        %v3568 = vpop.trf.xlu0
        %v3569 = vpop.trf.xlu0
        %v3570 = vpop.trf.xlu0
        %3571 = vxpose.xlu0.b32.start [1/16] %v3472, 128
        %3572 = vxpose.xlu0.b32.cont [2/16] 0.0, 128
        %3573 = vxpose.xlu0.b32.cont [3/16] 0.0, 128
        %3574 = vxpose.xlu0.b32.cont [4/16] 0.0, 128
        %3575 = vxpose.xlu0.b32.cont [5/16] 0.0, 128
        %3576 = vxpose.xlu0.b32.cont [6/16] 0.0, 128
        %3577 = vxpose.xlu0.b32.cont [7/16] 0.0, 128
        %3578 = vxpose.xlu0.b32.cont [8/16] 0.0, 128
        %3579 = vxpose.xlu0.b32.cont [9/16] 0.0, 128
        %3580 = vxpose.xlu0.b32.cont [10/16] 0.0, 128
        %3581 = vxpose.xlu0.b32.cont [11/16] 0.0, 128
        %3582 = vxpose.xlu0.b32.cont [12/16] 0.0, 128
        %3583 = vxpose.xlu0.b32.cont [13/16] 0.0, 128
        %3584 = vxpose.xlu0.b32.cont [14/16] 0.0, 128
        %3585 = vxpose.xlu0.b32.cont [15/16] 0.0, 128
        %3586 = vxpose.xlu0.b32.end [16/16] 0.0, 128
        %v3587 = vpop.trf.xlu0
        %v3588 = vpop.trf.xlu0
        %v3589 = vpop.trf.xlu0
        %v3590 = vpop.trf.xlu0
        %v3591 = vpop.trf.xlu0
        %v3592 = vpop.trf.xlu0
        %v3593 = vpop.trf.xlu0
        %v3594 = vpop.trf.xlu0
        %v3595 = vpop.trf.xlu0
        %v3596 = vpop.trf.xlu0
        %v3597 = vpop.trf.xlu0
        %v3598 = vpop.trf.xlu0
        %v3599 = vpop.trf.xlu0
        %v3600 = vpop.trf.xlu0
        %v3601 = vpop.trf.xlu0
        %v3602 = vpop.trf.xlu0
        %3603 = vxpose.xlu0.b32.start [1/16] %v3463, 128
        %3604 = vxpose.xlu0.b32.cont [2/16] 0.0, 128
        %3605 = vxpose.xlu0.b32.cont [3/16] 0.0, 128
        %3606 = vxpose.xlu0.b32.cont [4/16] 0.0, 128
        %3607 = vxpose.xlu0.b32.cont [5/16] 0.0, 128
        %3608 = vxpose.xlu0.b32.cont [6/16] 0.0, 128
        %3609 = vxpose.xlu0.b32.cont [7/16] 0.0, 128
        %3610 = vxpose.xlu0.b32.cont [8/16] 0.0, 128
        %3611 = vxpose.xlu0.b32.cont [9/16] 0.0, 128
        %3612 = vxpose.xlu0.b32.cont [10/16] 0.0, 128
        %3613 = vxpose.xlu0.b32.cont [11/16] 0.0, 128
        %3614 = vxpose.xlu0.b32.cont [12/16] 0.0, 128
        %3615 = vxpose.xlu0.b32.cont [13/16] 0.0, 128
        %3616 = vxpose.xlu0.b32.cont [14/16] 0.0, 128
        %3617 = vxpose.xlu0.b32.cont [15/16] 0.0, 128
        %3618 = vxpose.xlu0.b32.end [16/16] 0.0, 128
        %v3619 = vpop.trf.xlu0
        %v3620 = vpop.trf.xlu0
        %v3621 = vpop.trf.xlu0
        %v3622 = vpop.trf.xlu0
        %v3623 = vpop.trf.xlu0
        %v3624 = vpop.trf.xlu0
        %v3625 = vpop.trf.xlu0
        %v3626 = vpop.trf.xlu0
        %v3627 = vpop.trf.xlu0
        %v3628 = vpop.trf.xlu0
        %v3629 = vpop.trf.xlu0
        %v3630 = vpop.trf.xlu0
        %v3631 = vpop.trf.xlu0
        %v3632 = vpop.trf.xlu0
        %v3633 = vpop.trf.xlu0
        %v3634 = vpop.trf.xlu0
        %3635 = vxpose.xlu0.b32.start [1/16] %v3473, 128
        %3636 = vxpose.xlu0.b32.cont [2/16] 0.0, 128
        %3637 = vxpose.xlu0.b32.cont [3/16] 0.0, 128
        %3638 = vxpose.xlu0.b32.cont [4/16] 0.0, 128
        %3639 = vxpose.xlu0.b32.cont [5/16] 0.0, 128
        %3640 = vxpose.xlu0.b32.cont [6/16] 0.0, 128
        %3641 = vxpose.xlu0.b32.cont [7/16] 0.0, 128
        %3642 = vxpose.xlu0.b32.cont [8/16] 0.0, 128
        %3643 = vxpose.xlu0.b32.cont [9/16] 0.0, 128
        %3644 = vxpose.xlu0.b32.cont [10/16] 0.0, 128
        %3645 = vxpose.xlu0.b32.cont [11/16] 0.0, 128
        %3646 = vxpose.xlu0.b32.cont [12/16] 0.0, 128
        %3647 = vxpose.xlu0.b32.cont [13/16] 0.0, 128
        %3648 = vxpose.xlu0.b32.cont [14/16] 0.0, 128
        %3649 = vxpose.xlu0.b32.cont [15/16] 0.0, 128
        %3650 = vxpose.xlu0.b32.end [16/16] 0.0, 128
        %v3651 = vpop.trf.xlu0
        %v3652 = vpop.trf.xlu0
        %v3653 = vpop.trf.xlu0
        %v3654 = vpop.trf.xlu0
        %v3655 = vpop.trf.xlu0
        %v3656 = vpop.trf.xlu0
        %v3657 = vpop.trf.xlu0
        %v3658 = vpop.trf.xlu0
        %v3659 = vpop.trf.xlu0
        %v3660 = vpop.trf.xlu0
        %v3661 = vpop.trf.xlu0
        %v3662 = vpop.trf.xlu0
        %v3663 = vpop.trf.xlu0
        %v3664 = vpop.trf.xlu0
        %v3665 = vpop.trf.xlu0
        %v3666 = vpop.trf.xlu0
        %3667 = vxpose.xlu0.b32.start [1/16] %v3470, 128
        %3668 = vxpose.xlu0.b32.cont [2/16] 0.0, 128
        %3669 = vxpose.xlu0.b32.cont [3/16] 0.0, 128
        %3670 = vxpose.xlu0.b32.cont [4/16] 0.0, 128
        %3671 = vxpose.xlu0.b32.cont [5/16] 0.0, 128
        %3672 = vxpose.xlu0.b32.cont [6/16] 0.0, 128
        %3673 = vxpose.xlu0.b32.cont [7/16] 0.0, 128
        %3674 = vxpose.xlu0.b32.cont [8/16] 0.0, 128
        %3675 = vxpose.xlu0.b32.cont [9/16] 0.0, 128
        %3676 = vxpose.xlu0.b32.cont [10/16] 0.0, 128
        %3677 = vxpose.xlu0.b32.cont [11/16] 0.0, 128
        %3678 = vxpose.xlu0.b32.cont [12/16] 0.0, 128
        %3679 = vxpose.xlu0.b32.cont [13/16] 0.0, 128
        %3680 = vxpose.xlu0.b32.cont [14/16] 0.0, 128
        %3681 = vxpose.xlu0.b32.cont [15/16] 0.0, 128
        %3682 = vxpose.xlu0.b32.end [16/16] 0.0, 128
        %v3683 = vpop.trf.xlu0
        %v3684 = vpop.trf.xlu0
        %v3685 = vpop.trf.xlu0
        %v3686 = vpop.trf.xlu0
        %v3687 = vpop.trf.xlu0
        %v3688 = vpop.trf.xlu0
        %v3689 = vpop.trf.xlu0
        %v3690 = vpop.trf.xlu0
        %v3691 = vpop.trf.xlu0
        %v3692 = vpop.trf.xlu0
        %v3693 = vpop.trf.xlu0
        %v3694 = vpop.trf.xlu0
        %v3695 = vpop.trf.xlu0
        %v3696 = vpop.trf.xlu0
        %v3697 = vpop.trf.xlu0
        %v3698 = vpop.trf.xlu0
        %3699 = vxpose.xlu0.b32.start [1/16] %v3474, 128
        %3700 = vxpose.xlu0.b32.cont [2/16] 0.0, 128
        %3701 = vxpose.xlu0.b32.cont [3/16] 0.0, 128
        %3702 = vxpose.xlu0.b32.cont [4/16] 0.0, 128
        %3703 = vxpose.xlu0.b32.cont [5/16] 0.0, 128
        %3704 = vxpose.xlu0.b32.cont [6/16] 0.0, 128
        %3705 = vxpose.xlu0.b32.cont [7/16] 0.0, 128
        %3706 = vxpose.xlu0.b32.cont [8/16] 0.0, 128
        %3707 = vxpose.xlu0.b32.cont [9/16] 0.0, 128
        %3708 = vxpose.xlu0.b32.cont [10/16] 0.0, 128
        %3709 = vxpose.xlu0.b32.cont [11/16] 0.0, 128
        %3710 = vxpose.xlu0.b32.cont [12/16] 0.0, 128
        %3711 = vxpose.xlu0.b32.cont [13/16] 0.0, 128
        %3712 = vxpose.xlu0.b32.cont [14/16] 0.0, 128
        %3713 = vxpose.xlu0.b32.cont [15/16] 0.0, 128
        %3714 = vxpose.xlu0.b32.end [16/16] 0.0, 128
        %v3715 = vpop.trf.xlu0
        %v3716 = vpop.trf.xlu0
        %v3717 = vpop.trf.xlu0
        %v3718 = vpop.trf.xlu0
        %v3719 = vpop.trf.xlu0
        %v3720 = vpop.trf.xlu0
        %v3721 = vpop.trf.xlu0
        %v3722 = vpop.trf.xlu0
        %v3723 = vpop.trf.xlu0
        %v3724 = vpop.trf.xlu0
        %v3725 = vpop.trf.xlu0
        %v3726 = vpop.trf.xlu0
        %v3727 = vpop.trf.xlu0
        %v3728 = vpop.trf.xlu0
        %v3729 = vpop.trf.xlu0
        %v3730 = vpop.trf.xlu0
        %v3731 = vcombine.low %v3491, %v3555
        %v3732 = vcombine.high %v3491, %v3555
        %v3734 = vunpack.c.l.s4 1983009808
        %v3735 = vunpack.c.0.s8 %v3734
        %v3736 = vlaneseq
        %v3737 = vshrl.u32 %v3736, 7
        %v3738 = vsub.s32 %v3735, %v3737
        %v3739 = vrot.slane %v3731, %v3738
        %v3741 = vunpack.c.l.s4 1983009808
        %v3742 = vunpack.c.0.s8 %v3741
        %v3743 = vlaneseq
        %v3744 = vshrl.u32 %v3743, 7
        %v3745 = vsub.s32 %v3742, %v3744
        %v3746 = vrot.slane %v3732, %v3745
        %v3747 = vcombine.low %v3523, %v3587
        %v3748 = vcombine.high %v3523, %v3587
        %v3750 = vunpack.c.l.s4 1983009808
        %v3751 = vunpack.c.0.s8 %v3750
        %v3752 = vlaneseq
        %v3753 = vshrl.u32 %v3752, 7
        %v3754 = vsub.s32 %v3751, %v3753
        %v3755 = vrot.slane %v3747, %v3754
        %v3757 = vunpack.c.l.s4 1983009808
        %v3758 = vunpack.c.0.s8 %v3757
        %v3759 = vlaneseq
        %v3760 = vshrl.u32 %v3759, 7
        %v3761 = vsub.s32 %v3758, %v3760
        %v3762 = vrot.slane %v3748, %v3761
        %v3763 = vcombine.low %v3619, %v3683
        %v3764 = vcombine.high %v3619, %v3683
        %v3766 = vunpack.c.l.s4 1983009808
        %v3767 = vunpack.c.0.s8 %v3766
        %v3768 = vlaneseq
        %v3769 = vshrl.u32 %v3768, 7
        %v3770 = vsub.s32 %v3767, %v3769
        %v3771 = vrot.slane %v3763, %v3770
        %v3773 = vunpack.c.l.s4 1983009808
        %v3774 = vunpack.c.0.s8 %v3773
        %v3775 = vlaneseq
        %v3776 = vshrl.u32 %v3775, 7
        %v3777 = vsub.s32 %v3774, %v3776
        %v3778 = vrot.slane %v3764, %v3777
        %v3779 = vcombine.low %v3651, %v3715
        %v3780 = vcombine.high %v3651, %v3715
        %v3782 = vunpack.c.l.s4 1983009808
        %v3783 = vunpack.c.0.s8 %v3782
        %v3784 = vlaneseq
        %v3785 = vshrl.u32 %v3784, 7
        %v3786 = vsub.s32 %v3783, %v3785
        %v3787 = vrot.slane %v3779, %v3786
        %v3789 = vunpack.c.l.s4 1983009808
        %v3790 = vunpack.c.0.s8 %v3789
        %v3791 = vlaneseq
        %v3792 = vshrl.u32 %v3791, 7
        %v3793 = vsub.s32 %v3790, %v3792
        %v3794 = vrot.slane %v3780, %v3793
        %v3795 = vcombine.low %v3739, %v3755
        %v3796 = vcombine.high %v3739, %v3755
        %v3798 = vunpack.c.l.s4 1934713408
        %v3799 = vunpack.c.0.s8 %v3798
        %v3800 = vlaneseq
        %v3801 = vshrl.u32 %v3800, 7
        %v3802 = vsub.s32 %v3799, %v3801
        %v3803 = vrot.slane %v3795, %v3802
        %v3805 = vunpack.c.l.s4 1934713408
        %v3806 = vunpack.c.0.s8 %v3805
        %v3807 = vlaneseq
        %v3808 = vshrl.u32 %v3807, 7
        %v3809 = vsub.s32 %v3806, %v3808
        %v3810 = vrot.slane %v3796, %v3809
        %v3811 = vcombine.low %v3746, %v3762
        %v3812 = vcombine.high %v3746, %v3762
        %v3814 = vunpack.c.l.s4 1934713408
        %v3815 = vunpack.c.0.s8 %v3814
        %v3816 = vlaneseq
        %v3817 = vshrl.u32 %v3816, 7
        %v3818 = vsub.s32 %v3815, %v3817
        %v3819 = vrot.slane %v3811, %v3818
        %v3821 = vunpack.c.l.s4 1934713408
        %v3822 = vunpack.c.0.s8 %v3821
        %v3823 = vlaneseq
        %v3824 = vshrl.u32 %v3823, 7
        %v3825 = vsub.s32 %v3822, %v3824
        %v3826 = vrot.slane %v3812, %v3825
        %v3827 = vcombine.low %v3771, %v3787
        %v3828 = vcombine.high %v3771, %v3787
        %v3830 = vunpack.c.l.s4 1934713408
        %v3831 = vunpack.c.0.s8 %v3830
        %v3832 = vlaneseq
        %v3833 = vshrl.u32 %v3832, 7
        %v3834 = vsub.s32 %v3831, %v3833
        %v3835 = vrot.slane %v3827, %v3834
        %v3837 = vunpack.c.l.s4 1934713408
        %v3838 = vunpack.c.0.s8 %v3837
        %v3839 = vlaneseq
        %v3840 = vshrl.u32 %v3839, 7
        %v3841 = vsub.s32 %v3838, %v3840
        %v3842 = vrot.slane %v3828, %v3841
        %v3843 = vcombine.low %v3778, %v3794
        %v3844 = vcombine.high %v3778, %v3794
        %v3846 = vunpack.c.l.s4 1934713408
        %v3847 = vunpack.c.0.s8 %v3846
        %v3848 = vlaneseq
        %v3849 = vshrl.u32 %v3848, 7
        %v3850 = vsub.s32 %v3847, %v3849
        %v3851 = vrot.slane %v3843, %v3850
        %v3853 = vunpack.c.l.s4 1934713408
        %v3854 = vunpack.c.0.s8 %v3853
        %v3855 = vlaneseq
        %v3856 = vshrl.u32 %v3855, 7
        %v3857 = vsub.s32 %v3854, %v3856
        %v3858 = vrot.slane %v3844, %v3857
        %v3859 = vcombine.low %v3803, %v3835
        %v3860 = vcombine.high %v3803, %v3835
        %v3861 = vcombine.low %v3810, %v3842
        %v3862 = vcombine.high %v3810, %v3842
        %v3863 = vcombine.low %v3819, %v3851
        %v3864 = vcombine.high %v3819, %v3851
        %v3865 = vcombine.low %v3826, %v3858
        %v3866 = vcombine.high %v3826, %v3858
        %3867 = vxpose.xlu0.b32.start [1/16] %v3271, 128
        %3868 = vxpose.xlu0.b32.cont [2/16] 0.0, 128
        %3869 = vxpose.xlu0.b32.cont [3/16] 0.0, 128
        %3870 = vxpose.xlu0.b32.cont [4/16] 0.0, 128
        %3871 = vxpose.xlu0.b32.cont [5/16] 0.0, 128
        %3872 = vxpose.xlu0.b32.cont [6/16] 0.0, 128
        %3873 = vxpose.xlu0.b32.cont [7/16] 0.0, 128
        %3874 = vxpose.xlu0.b32.cont [8/16] 0.0, 128
        %3875 = vxpose.xlu0.b32.cont [9/16] 0.0, 128
        %3876 = vxpose.xlu0.b32.cont [10/16] 0.0, 128
        %3877 = vxpose.xlu0.b32.cont [11/16] 0.0, 128
        %3878 = vxpose.xlu0.b32.cont [12/16] 0.0, 128
        %3879 = vxpose.xlu0.b32.cont [13/16] 0.0, 128
        %3880 = vxpose.xlu0.b32.cont [14/16] 0.0, 128
        %3881 = vxpose.xlu0.b32.cont [15/16] 0.0, 128
        %3882 = vxpose.xlu0.b32.end [16/16] 0.0, 128
        %v3883 = vpop.trf.xlu0
        %v3884 = vpop.trf.xlu0
        %v3885 = vpop.trf.xlu0
        %v3886 = vpop.trf.xlu0
        %v3887 = vpop.trf.xlu0
        %v3888 = vpop.trf.xlu0
        %v3889 = vpop.trf.xlu0
        %v3890 = vpop.trf.xlu0
        %v3891 = vpop.trf.xlu0
        %v3892 = vpop.trf.xlu0
        %v3893 = vpop.trf.xlu0
        %v3894 = vpop.trf.xlu0
        %v3895 = vpop.trf.xlu0
        %v3896 = vpop.trf.xlu0
        %v3897 = vpop.trf.xlu0
        %v3898 = vpop.trf.xlu0
        %v3900 = vsel %vm2002, %v3883, 0
        %3902 = vmatprep.subr.mxu0 0.0
        %3903 = vmatpush1.msra.mxu0 %v3859
        %3904 = vmatprep.subr.mxu0 0.0
        %3905 = vmatpush1.msra.mxu0 0.0
        %3906 = vmatprep.subr.mxu0 0.0
        %3907 = vmatpush1.msra.mxu0 0.0
        %3908 = vmatprep.subr.mxu0 0.0
        %3909 = vmatpush1.msra.mxu0 0.0
        %3910 = vmatprep.subr.mxu0 0.0
        %3911 = vmatpush1.msra.mxu0 0.0
        %3912 = vmatprep.subr.mxu0 0.0
        %3913 = vmatpush1.msra.mxu0 0.0
        %3914 = vmatprep.subr.mxu0 0.0
        %3915 = vmatpush1.msra.mxu0 0.0
        %3916 = vmatprep.subr.mxu0 0.0
        %3917 = vmatpush1.msra.mxu0 0.0
        %3918 = vmatprep.subr.mxu0 0.0
        %3919 = vmatpush1.msra.mxu0 0.0
        %3920 = vmatprep.subr.mxu0 0.0
        %3921 = vmatpush1.msra.mxu0 0.0
        %3922 = vmatprep.subr.mxu0 0.0
        %3923 = vmatpush1.msra.mxu0 0.0
        %3924 = vmatprep.subr.mxu0 0.0
        %3925 = vmatpush1.msra.mxu0 0.0
        %3926 = vmatprep.subr.mxu0 0.0
        %3927 = vmatpush1.msra.mxu0 0.0
        %3928 = vmatprep.subr.mxu0 0.0
        %3929 = vmatpush1.msra.mxu0 0.0
        %3930 = vmatprep.subr.mxu0 0.0
        %3931 = vmatpush1.msra.mxu0 0.0
        %3932 = vmatprep.subr.mxu0 0.0
        %3933 = vmatpush1.msra.mxu0 0.0
        %3934 = vmatprep.subr.mxu0 0.0
        %3935 = vmatpush1.msra.mxu0 0.0
        %3936 = vmatprep.subr.mxu0 0.0
        %3937 = vmatpush1.msra.mxu0 0.0
        %3938 = vmatprep.subr.mxu0 0.0
        %3939 = vmatpush1.msra.mxu0 0.0
        %3940 = vmatprep.subr.mxu0 0.0
        %3941 = vmatpush1.msra.mxu0 0.0
        %3942 = vmatprep.subr.mxu0 0.0
        %3943 = vmatpush1.msra.mxu0 0.0
        %3944 = vmatprep.subr.mxu0 0.0
        %3945 = vmatpush1.msra.mxu0 0.0
        %3946 = vmatprep.subr.mxu0 0.0
        %3947 = vmatpush1.msra.mxu0 0.0
        %3948 = vmatprep.subr.mxu0 0.0
        %3949 = vmatpush1.msra.mxu0 0.0
        %3950 = vmatprep.subr.mxu0 0.0
        %3951 = vmatpush1.msra.mxu0 0.0
        %3952 = vmatprep.subr.mxu0 0.0
        %3953 = vmatpush1.msra.mxu0 0.0
        %3954 = vmatprep.subr.mxu0 0.0
        %3955 = vmatpush1.msra.mxu0 0.0
        %3956 = vmatprep.subr.mxu0 0.0
        %3957 = vmatpush1.msra.mxu0 0.0
        %3958 = vmatprep.subr.mxu0 0.0
        %3959 = vmatpush1.msra.mxu0 0.0
        %3960 = vmatprep.subr.mxu0 0.0
        %3961 = vmatpush1.msra.mxu0 0.0
        %3962 = vmatprep.subr.mxu0 0.0
        %3963 = vmatpush1.msra.mxu0 0.0
        %3964 = vmatprep.subr.mxu0 0.0
        %3965 = vmatpush1.msra.mxu0 0.0
        %3966 = vmatprep.mubr.f32.mxu0 0.0
        %3967 = vmatmul.mubr.f32.gmra.mrb[0].mxu0 %v3900
        %v3968 = vpop.f32.mrb[0].mxu0
        %v3969 = vadd.f32 0.0, %v3968
        %v3970 = vpop.f32.mrb[0].mxu0
        %3971 = vdwg.mxu0
        %3972 = vxpose.xlu0.b32.start [1/16] %v3272, 128
        %3973 = vxpose.xlu0.b32.cont [2/16] 0.0, 128
        %3974 = vxpose.xlu0.b32.cont [3/16] 0.0, 128
        %3975 = vxpose.xlu0.b32.cont [4/16] 0.0, 128
        %3976 = vxpose.xlu0.b32.cont [5/16] 0.0, 128
        %3977 = vxpose.xlu0.b32.cont [6/16] 0.0, 128
        %3978 = vxpose.xlu0.b32.cont [7/16] 0.0, 128
        %3979 = vxpose.xlu0.b32.cont [8/16] 0.0, 128
        %3980 = vxpose.xlu0.b32.cont [9/16] 0.0, 128
        %3981 = vxpose.xlu0.b32.cont [10/16] 0.0, 128
        %3982 = vxpose.xlu0.b32.cont [11/16] 0.0, 128
        %3983 = vxpose.xlu0.b32.cont [12/16] 0.0, 128
        %3984 = vxpose.xlu0.b32.cont [13/16] 0.0, 128
        %3985 = vxpose.xlu0.b32.cont [14/16] 0.0, 128
        %3986 = vxpose.xlu0.b32.cont [15/16] 0.0, 128
        %3987 = vxpose.xlu0.b32.end [16/16] 0.0, 128
        %v3988 = vpop.trf.xlu0
        %v3989 = vpop.trf.xlu0
        %v3990 = vpop.trf.xlu0
        %v3991 = vpop.trf.xlu0
        %v3992 = vpop.trf.xlu0
        %v3993 = vpop.trf.xlu0
        %v3994 = vpop.trf.xlu0
        %v3995 = vpop.trf.xlu0
        %v3996 = vpop.trf.xlu0
        %v3997 = vpop.trf.xlu0
        %v3998 = vpop.trf.xlu0
        %v3999 = vpop.trf.xlu0
        %v4000 = vpop.trf.xlu0
        %v4001 = vpop.trf.xlu0
        %v4002 = vpop.trf.xlu0
        %v4003 = vpop.trf.xlu0
        %v4005 = vsel %vm2002, %v3988, 0
        %4007 = vmatprep.subr.mxu0 0.0
        %4008 = vmatpush1.msra.mxu0 %v3860
        %4009 = vmatprep.subr.mxu0 0.0
        %4010 = vmatpush1.msra.mxu0 0.0
        %4011 = vmatprep.subr.mxu0 0.0
        %4012 = vmatpush1.msra.mxu0 0.0
        %4013 = vmatprep.subr.mxu0 0.0
        %4014 = vmatpush1.msra.mxu0 0.0
        %4015 = vmatprep.subr.mxu0 0.0
        %4016 = vmatpush1.msra.mxu0 0.0
        %4017 = vmatprep.subr.mxu0 0.0
        %4018 = vmatpush1.msra.mxu0 0.0
        %4019 = vmatprep.subr.mxu0 0.0
        %4020 = vmatpush1.msra.mxu0 0.0
        %4021 = vmatprep.subr.mxu0 0.0
        %4022 = vmatpush1.msra.mxu0 0.0
        %4023 = vmatprep.subr.mxu0 0.0
        %4024 = vmatpush1.msra.mxu0 0.0
        %4025 = vmatprep.subr.mxu0 0.0
        %4026 = vmatpush1.msra.mxu0 0.0
        %4027 = vmatprep.subr.mxu0 0.0
        %4028 = vmatpush1.msra.mxu0 0.0
        %4029 = vmatprep.subr.mxu0 0.0
        %4030 = vmatpush1.msra.mxu0 0.0
        %4031 = vmatprep.subr.mxu0 0.0
        %4032 = vmatpush1.msra.mxu0 0.0
        %4033 = vmatprep.subr.mxu0 0.0
        %4034 = vmatpush1.msra.mxu0 0.0
        %4035 = vmatprep.subr.mxu0 0.0
        %4036 = vmatpush1.msra.mxu0 0.0
        %4037 = vmatprep.subr.mxu0 0.0
        %4038 = vmatpush1.msra.mxu0 0.0
        %4039 = vmatprep.subr.mxu0 0.0
        %4040 = vmatpush1.msra.mxu0 0.0
        %4041 = vmatprep.subr.mxu0 0.0
        %4042 = vmatpush1.msra.mxu0 0.0
        %4043 = vmatprep.subr.mxu0 0.0
        %4044 = vmatpush1.msra.mxu0 0.0
        %4045 = vmatprep.subr.mxu0 0.0
        %4046 = vmatpush1.msra.mxu0 0.0
        %4047 = vmatprep.subr.mxu0 0.0
        %4048 = vmatpush1.msra.mxu0 0.0
        %4049 = vmatprep.subr.mxu0 0.0
        %4050 = vmatpush1.msra.mxu0 0.0
        %4051 = vmatprep.subr.mxu0 0.0
        %4052 = vmatpush1.msra.mxu0 0.0
        %4053 = vmatprep.subr.mxu0 0.0
        %4054 = vmatpush1.msra.mxu0 0.0
        %4055 = vmatprep.subr.mxu0 0.0
        %4056 = vmatpush1.msra.mxu0 0.0
        %4057 = vmatprep.subr.mxu0 0.0
        %4058 = vmatpush1.msra.mxu0 0.0
        %4059 = vmatprep.subr.mxu0 0.0
        %4060 = vmatpush1.msra.mxu0 0.0
        %4061 = vmatprep.subr.mxu0 0.0
        %4062 = vmatpush1.msra.mxu0 0.0
        %4063 = vmatprep.subr.mxu0 0.0
        %4064 = vmatpush1.msra.mxu0 0.0
        %4065 = vmatprep.subr.mxu0 0.0
        %4066 = vmatpush1.msra.mxu0 0.0
        %4067 = vmatprep.subr.mxu0 0.0
        %4068 = vmatpush1.msra.mxu0 0.0
        %4069 = vmatprep.subr.mxu0 0.0
        %4070 = vmatpush1.msra.mxu0 0.0
        %4071 = vmatprep.mubr.f32.mxu0 0.0
        %4072 = vmatmul.mubr.f32.gmra.mrb[0].mxu0 %v4005
        %v4073 = vpop.f32.mrb[0].mxu0
        %v4074 = vadd.f32 0.0, %v4073
        %v4075 = vpop.f32.mrb[0].mxu0
        %4076 = vdwg.mxu0
        %4077 = vxpose.xlu0.b32.start [1/16] %v3273, 128
        %4078 = vxpose.xlu0.b32.cont [2/16] 0.0, 128
        %4079 = vxpose.xlu0.b32.cont [3/16] 0.0, 128
        %4080 = vxpose.xlu0.b32.cont [4/16] 0.0, 128
        %4081 = vxpose.xlu0.b32.cont [5/16] 0.0, 128
        %4082 = vxpose.xlu0.b32.cont [6/16] 0.0, 128
        %4083 = vxpose.xlu0.b32.cont [7/16] 0.0, 128
        %4084 = vxpose.xlu0.b32.cont [8/16] 0.0, 128
        %4085 = vxpose.xlu0.b32.cont [9/16] 0.0, 128
        %4086 = vxpose.xlu0.b32.cont [10/16] 0.0, 128
        %4087 = vxpose.xlu0.b32.cont [11/16] 0.0, 128
        %4088 = vxpose.xlu0.b32.cont [12/16] 0.0, 128
        %4089 = vxpose.xlu0.b32.cont [13/16] 0.0, 128
        %4090 = vxpose.xlu0.b32.cont [14/16] 0.0, 128
        %4091 = vxpose.xlu0.b32.cont [15/16] 0.0, 128
        %4092 = vxpose.xlu0.b32.end [16/16] 0.0, 128
        %v4093 = vpop.trf.xlu0
        %v4094 = vpop.trf.xlu0
        %v4095 = vpop.trf.xlu0
        %v4096 = vpop.trf.xlu0
        %v4097 = vpop.trf.xlu0
        %v4098 = vpop.trf.xlu0
        %v4099 = vpop.trf.xlu0
        %v4100 = vpop.trf.xlu0
        %v4101 = vpop.trf.xlu0
        %v4102 = vpop.trf.xlu0
        %v4103 = vpop.trf.xlu0
        %v4104 = vpop.trf.xlu0
        %v4105 = vpop.trf.xlu0
        %v4106 = vpop.trf.xlu0
        %v4107 = vpop.trf.xlu0
        %v4108 = vpop.trf.xlu0
        %v4110 = vsel %vm2002, %v4093, 0
        %4112 = vmatprep.subr.mxu0 0.0
        %4113 = vmatpush1.msra.mxu0 %v3861
        %4114 = vmatprep.subr.mxu0 0.0
        %4115 = vmatpush1.msra.mxu0 0.0
        %4116 = vmatprep.subr.mxu0 0.0
        %4117 = vmatpush1.msra.mxu0 0.0
        %4118 = vmatprep.subr.mxu0 0.0
        %4119 = vmatpush1.msra.mxu0 0.0
        %4120 = vmatprep.subr.mxu0 0.0
        %4121 = vmatpush1.msra.mxu0 0.0
        %4122 = vmatprep.subr.mxu0 0.0
        %4123 = vmatpush1.msra.mxu0 0.0
        %4124 = vmatprep.subr.mxu0 0.0
        %4125 = vmatpush1.msra.mxu0 0.0
        %4126 = vmatprep.subr.mxu0 0.0
        %4127 = vmatpush1.msra.mxu0 0.0
        %4128 = vmatprep.subr.mxu0 0.0
        %4129 = vmatpush1.msra.mxu0 0.0
        %4130 = vmatprep.subr.mxu0 0.0
        %4131 = vmatpush1.msra.mxu0 0.0
        %4132 = vmatprep.subr.mxu0 0.0
        %4133 = vmatpush1.msra.mxu0 0.0
        %4134 = vmatprep.subr.mxu0 0.0
        %4135 = vmatpush1.msra.mxu0 0.0
        %4136 = vmatprep.subr.mxu0 0.0
        %4137 = vmatpush1.msra.mxu0 0.0
        %4138 = vmatprep.subr.mxu0 0.0
        %4139 = vmatpush1.msra.mxu0 0.0
        %4140 = vmatprep.subr.mxu0 0.0
        %4141 = vmatpush1.msra.mxu0 0.0
        %4142 = vmatprep.subr.mxu0 0.0
        %4143 = vmatpush1.msra.mxu0 0.0
        %4144 = vmatprep.subr.mxu0 0.0
        %4145 = vmatpush1.msra.mxu0 0.0
        %4146 = vmatprep.subr.mxu0 0.0
        %4147 = vmatpush1.msra.mxu0 0.0
        %4148 = vmatprep.subr.mxu0 0.0
        %4149 = vmatpush1.msra.mxu0 0.0
        %4150 = vmatprep.subr.mxu0 0.0
        %4151 = vmatpush1.msra.mxu0 0.0
        %4152 = vmatprep.subr.mxu0 0.0
        %4153 = vmatpush1.msra.mxu0 0.0
        %4154 = vmatprep.subr.mxu0 0.0
        %4155 = vmatpush1.msra.mxu0 0.0
        %4156 = vmatprep.subr.mxu0 0.0
        %4157 = vmatpush1.msra.mxu0 0.0
        %4158 = vmatprep.subr.mxu0 0.0
        %4159 = vmatpush1.msra.mxu0 0.0
        %4160 = vmatprep.subr.mxu0 0.0
        %4161 = vmatpush1.msra.mxu0 0.0
        %4162 = vmatprep.subr.mxu0 0.0
        %4163 = vmatpush1.msra.mxu0 0.0
        %4164 = vmatprep.subr.mxu0 0.0
        %4165 = vmatpush1.msra.mxu0 0.0
        %4166 = vmatprep.subr.mxu0 0.0
        %4167 = vmatpush1.msra.mxu0 0.0
        %4168 = vmatprep.subr.mxu0 0.0
        %4169 = vmatpush1.msra.mxu0 0.0
        %4170 = vmatprep.subr.mxu0 0.0
        %4171 = vmatpush1.msra.mxu0 0.0
        %4172 = vmatprep.subr.mxu0 0.0
        %4173 = vmatpush1.msra.mxu0 0.0
        %4174 = vmatprep.subr.mxu0 0.0
        %4175 = vmatpush1.msra.mxu0 0.0
        %4176 = vmatprep.mubr.f32.mxu0 0.0
        %4177 = vmatmul.mubr.f32.gmra.mrb[0].mxu0 %v4110
        %v4178 = vpop.f32.mrb[0].mxu0
        %v4179 = vadd.f32 0.0, %v4178
        %v4180 = vpop.f32.mrb[0].mxu0
        %4181 = vdwg.mxu0
        %4182 = vxpose.xlu0.b32.start [1/16] %v3274, 128
        %4183 = vxpose.xlu0.b32.cont [2/16] 0.0, 128
        %4184 = vxpose.xlu0.b32.cont [3/16] 0.0, 128
        %4185 = vxpose.xlu0.b32.cont [4/16] 0.0, 128
        %4186 = vxpose.xlu0.b32.cont [5/16] 0.0, 128
        %4187 = vxpose.xlu0.b32.cont [6/16] 0.0, 128
        %4188 = vxpose.xlu0.b32.cont [7/16] 0.0, 128
        %4189 = vxpose.xlu0.b32.cont [8/16] 0.0, 128
        %4190 = vxpose.xlu0.b32.cont [9/16] 0.0, 128
        %4191 = vxpose.xlu0.b32.cont [10/16] 0.0, 128
        %4192 = vxpose.xlu0.b32.cont [11/16] 0.0, 128
        %4193 = vxpose.xlu0.b32.cont [12/16] 0.0, 128
        %4194 = vxpose.xlu0.b32.cont [13/16] 0.0, 128
        %4195 = vxpose.xlu0.b32.cont [14/16] 0.0, 128
        %4196 = vxpose.xlu0.b32.cont [15/16] 0.0, 128
        %4197 = vxpose.xlu0.b32.end [16/16] 0.0, 128
        %v4198 = vpop.trf.xlu0
        %v4199 = vpop.trf.xlu0
        %v4200 = vpop.trf.xlu0
        %v4201 = vpop.trf.xlu0
        %v4202 = vpop.trf.xlu0
        %v4203 = vpop.trf.xlu0
        %v4204 = vpop.trf.xlu0
        %v4205 = vpop.trf.xlu0
        %v4206 = vpop.trf.xlu0
        %v4207 = vpop.trf.xlu0
        %v4208 = vpop.trf.xlu0
        %v4209 = vpop.trf.xlu0
        %v4210 = vpop.trf.xlu0
        %v4211 = vpop.trf.xlu0
        %v4212 = vpop.trf.xlu0
        %v4213 = vpop.trf.xlu0
        %v4215 = vsel %vm2002, %v4198, 0
        %4217 = vmatprep.subr.mxu0 0.0
        %4218 = vmatpush1.msra.mxu0 %v3862
        %4219 = vmatprep.subr.mxu0 0.0
        %4220 = vmatpush1.msra.mxu0 0.0
        %4221 = vmatprep.subr.mxu0 0.0
        %4222 = vmatpush1.msra.mxu0 0.0
        %4223 = vmatprep.subr.mxu0 0.0
        %4224 = vmatpush1.msra.mxu0 0.0
        %4225 = vmatprep.subr.mxu0 0.0
        %4226 = vmatpush1.msra.mxu0 0.0
        %4227 = vmatprep.subr.mxu0 0.0
        %4228 = vmatpush1.msra.mxu0 0.0
        %4229 = vmatprep.subr.mxu0 0.0
        %4230 = vmatpush1.msra.mxu0 0.0
        %4231 = vmatprep.subr.mxu0 0.0
        %4232 = vmatpush1.msra.mxu0 0.0
        %4233 = vmatprep.subr.mxu0 0.0
        %4234 = vmatpush1.msra.mxu0 0.0
        %4235 = vmatprep.subr.mxu0 0.0
        %4236 = vmatpush1.msra.mxu0 0.0
        %4237 = vmatprep.subr.mxu0 0.0
        %4238 = vmatpush1.msra.mxu0 0.0
        %4239 = vmatprep.subr.mxu0 0.0
        %4240 = vmatpush1.msra.mxu0 0.0
        %4241 = vmatprep.subr.mxu0 0.0
        %4242 = vmatpush1.msra.mxu0 0.0
        %4243 = vmatprep.subr.mxu0 0.0
        %4244 = vmatpush1.msra.mxu0 0.0
        %4245 = vmatprep.subr.mxu0 0.0
        %4246 = vmatpush1.msra.mxu0 0.0
        %4247 = vmatprep.subr.mxu0 0.0
        %4248 = vmatpush1.msra.mxu0 0.0
        %4249 = vmatprep.subr.mxu0 0.0
        %4250 = vmatpush1.msra.mxu0 0.0
        %4251 = vmatprep.subr.mxu0 0.0
        %4252 = vmatpush1.msra.mxu0 0.0
        %4253 = vmatprep.subr.mxu0 0.0
        %4254 = vmatpush1.msra.mxu0 0.0
        %4255 = vmatprep.subr.mxu0 0.0
        %4256 = vmatpush1.msra.mxu0 0.0
        %4257 = vmatprep.subr.mxu0 0.0
        %4258 = vmatpush1.msra.mxu0 0.0
        %4259 = vmatprep.subr.mxu0 0.0
        %4260 = vmatpush1.msra.mxu0 0.0
        %4261 = vmatprep.subr.mxu0 0.0
        %4262 = vmatpush1.msra.mxu0 0.0
        %4263 = vmatprep.subr.mxu0 0.0
        %4264 = vmatpush1.msra.mxu0 0.0
        %4265 = vmatprep.subr.mxu0 0.0
        %4266 = vmatpush1.msra.mxu0 0.0
        %4267 = vmatprep.subr.mxu0 0.0
        %4268 = vmatpush1.msra.mxu0 0.0
        %4269 = vmatprep.subr.mxu0 0.0
        %4270 = vmatpush1.msra.mxu0 0.0
        %4271 = vmatprep.subr.mxu0 0.0
        %4272 = vmatpush1.msra.mxu0 0.0
        %4273 = vmatprep.subr.mxu0 0.0
        %4274 = vmatpush1.msra.mxu0 0.0
        %4275 = vmatprep.subr.mxu0 0.0
        %4276 = vmatpush1.msra.mxu0 0.0
        %4277 = vmatprep.subr.mxu0 0.0
        %4278 = vmatpush1.msra.mxu0 0.0
        %4279 = vmatprep.subr.mxu0 0.0
        %4280 = vmatpush1.msra.mxu0 0.0
        %4281 = vmatprep.mubr.f32.mxu0 0.0
        %4282 = vmatmul.mubr.f32.gmra.mrb[0].mxu0 %v4215
        %v4283 = vpop.f32.mrb[0].mxu0
        %v4284 = vadd.f32 0.0, %v4283
        %v4285 = vpop.f32.mrb[0].mxu0
        %4286 = vdwg.mxu0
        %4287 = vxpose.xlu0.b32.start [1/16] %v3275, 128
        %4288 = vxpose.xlu0.b32.cont [2/16] 0.0, 128
        %4289 = vxpose.xlu0.b32.cont [3/16] 0.0, 128
        %4290 = vxpose.xlu0.b32.cont [4/16] 0.0, 128
        %4291 = vxpose.xlu0.b32.cont [5/16] 0.0, 128
        %4292 = vxpose.xlu0.b32.cont [6/16] 0.0, 128
        %4293 = vxpose.xlu0.b32.cont [7/16] 0.0, 128
        %4294 = vxpose.xlu0.b32.cont [8/16] 0.0, 128
        %4295 = vxpose.xlu0.b32.cont [9/16] 0.0, 128
        %4296 = vxpose.xlu0.b32.cont [10/16] 0.0, 128
        %4297 = vxpose.xlu0.b32.cont [11/16] 0.0, 128
        %4298 = vxpose.xlu0.b32.cont [12/16] 0.0, 128
        %4299 = vxpose.xlu0.b32.cont [13/16] 0.0, 128
        %4300 = vxpose.xlu0.b32.cont [14/16] 0.0, 128
        %4301 = vxpose.xlu0.b32.cont [15/16] 0.0, 128
        %4302 = vxpose.xlu0.b32.end [16/16] 0.0, 128
        %v4303 = vpop.trf.xlu0
        %v4304 = vpop.trf.xlu0
        %v4305 = vpop.trf.xlu0
        %v4306 = vpop.trf.xlu0
        %v4307 = vpop.trf.xlu0
        %v4308 = vpop.trf.xlu0
        %v4309 = vpop.trf.xlu0
        %v4310 = vpop.trf.xlu0
        %v4311 = vpop.trf.xlu0
        %v4312 = vpop.trf.xlu0
        %v4313 = vpop.trf.xlu0
        %v4314 = vpop.trf.xlu0
        %v4315 = vpop.trf.xlu0
        %v4316 = vpop.trf.xlu0
        %v4317 = vpop.trf.xlu0
        %v4318 = vpop.trf.xlu0
        %v4320 = vsel %vm2002, %v4303, 0
        %4322 = vmatprep.subr.mxu0 0.0
        %4323 = vmatpush1.msra.mxu0 %v3863
        %4324 = vmatprep.subr.mxu0 0.0
        %4325 = vmatpush1.msra.mxu0 0.0
        %4326 = vmatprep.subr.mxu0 0.0
        %4327 = vmatpush1.msra.mxu0 0.0
        %4328 = vmatprep.subr.mxu0 0.0
        %4329 = vmatpush1.msra.mxu0 0.0
        %4330 = vmatprep.subr.mxu0 0.0
        %4331 = vmatpush1.msra.mxu0 0.0
        %4332 = vmatprep.subr.mxu0 0.0
        %4333 = vmatpush1.msra.mxu0 0.0
        %4334 = vmatprep.subr.mxu0 0.0
        %4335 = vmatpush1.msra.mxu0 0.0
        %4336 = vmatprep.subr.mxu0 0.0
        %4337 = vmatpush1.msra.mxu0 0.0
        %4338 = vmatprep.subr.mxu0 0.0
        %4339 = vmatpush1.msra.mxu0 0.0
        %4340 = vmatprep.subr.mxu0 0.0
        %4341 = vmatpush1.msra.mxu0 0.0
        %4342 = vmatprep.subr.mxu0 0.0
        %4343 = vmatpush1.msra.mxu0 0.0
        %4344 = vmatprep.subr.mxu0 0.0
        %4345 = vmatpush1.msra.mxu0 0.0
        %4346 = vmatprep.subr.mxu0 0.0
        %4347 = vmatpush1.msra.mxu0 0.0
        %4348 = vmatprep.subr.mxu0 0.0
        %4349 = vmatpush1.msra.mxu0 0.0
        %4350 = vmatprep.subr.mxu0 0.0
        %4351 = vmatpush1.msra.mxu0 0.0
        %4352 = vmatprep.subr.mxu0 0.0
        %4353 = vmatpush1.msra.mxu0 0.0
        %4354 = vmatprep.subr.mxu0 0.0
        %4355 = vmatpush1.msra.mxu0 0.0
        %4356 = vmatprep.subr.mxu0 0.0
        %4357 = vmatpush1.msra.mxu0 0.0
        %4358 = vmatprep.subr.mxu0 0.0
        %4359 = vmatpush1.msra.mxu0 0.0
        %4360 = vmatprep.subr.mxu0 0.0
        %4361 = vmatpush1.msra.mxu0 0.0
        %4362 = vmatprep.subr.mxu0 0.0
        %4363 = vmatpush1.msra.mxu0 0.0
        %4364 = vmatprep.subr.mxu0 0.0
        %4365 = vmatpush1.msra.mxu0 0.0
        %4366 = vmatprep.subr.mxu0 0.0
        %4367 = vmatpush1.msra.mxu0 0.0
        %4368 = vmatprep.subr.mxu0 0.0
        %4369 = vmatpush1.msra.mxu0 0.0
        %4370 = vmatprep.subr.mxu0 0.0
        %4371 = vmatpush1.msra.mxu0 0.0
        %4372 = vmatprep.subr.mxu0 0.0
        %4373 = vmatpush1.msra.mxu0 0.0
        %4374 = vmatprep.subr.mxu0 0.0
        %4375 = vmatpush1.msra.mxu0 0.0
        %4376 = vmatprep.subr.mxu0 0.0
        %4377 = vmatpush1.msra.mxu0 0.0
        %4378 = vmatprep.subr.mxu0 0.0
        %4379 = vmatpush1.msra.mxu0 0.0
        %4380 = vmatprep.subr.mxu0 0.0
        %4381 = vmatpush1.msra.mxu0 0.0
        %4382 = vmatprep.subr.mxu0 0.0
        %4383 = vmatpush1.msra.mxu0 0.0
        %4384 = vmatprep.subr.mxu0 0.0
        %4385 = vmatpush1.msra.mxu0 0.0
        %4386 = vmatprep.mubr.f32.mxu0 0.0
        %4387 = vmatmul.mubr.f32.gmra.mrb[0].mxu0 %v4320
        %v4388 = vpop.f32.mrb[0].mxu0
        %v4389 = vadd.f32 0.0, %v4388
        %v4390 = vpop.f32.mrb[0].mxu0
        %4391 = vdwg.mxu0
        %4392 = vxpose.xlu0.b32.start [1/16] %v3276, 128
        %4393 = vxpose.xlu0.b32.cont [2/16] 0.0, 128
        %4394 = vxpose.xlu0.b32.cont [3/16] 0.0, 128
        %4395 = vxpose.xlu0.b32.cont [4/16] 0.0, 128
        %4396 = vxpose.xlu0.b32.cont [5/16] 0.0, 128
        %4397 = vxpose.xlu0.b32.cont [6/16] 0.0, 128
        %4398 = vxpose.xlu0.b32.cont [7/16] 0.0, 128
        %4399 = vxpose.xlu0.b32.cont [8/16] 0.0, 128
        %4400 = vxpose.xlu0.b32.cont [9/16] 0.0, 128
        %4401 = vxpose.xlu0.b32.cont [10/16] 0.0, 128
        %4402 = vxpose.xlu0.b32.cont [11/16] 0.0, 128
        %4403 = vxpose.xlu0.b32.cont [12/16] 0.0, 128
        %4404 = vxpose.xlu0.b32.cont [13/16] 0.0, 128
        %4405 = vxpose.xlu0.b32.cont [14/16] 0.0, 128
        %4406 = vxpose.xlu0.b32.cont [15/16] 0.0, 128
        %4407 = vxpose.xlu0.b32.end [16/16] 0.0, 128
        %v4408 = vpop.trf.xlu0
        %v4409 = vpop.trf.xlu0
        %v4410 = vpop.trf.xlu0
        %v4411 = vpop.trf.xlu0
        %v4412 = vpop.trf.xlu0
        %v4413 = vpop.trf.xlu0
        %v4414 = vpop.trf.xlu0
        %v4415 = vpop.trf.xlu0
        %v4416 = vpop.trf.xlu0
        %v4417 = vpop.trf.xlu0
        %v4418 = vpop.trf.xlu0
        %v4419 = vpop.trf.xlu0
        %v4420 = vpop.trf.xlu0
        %v4421 = vpop.trf.xlu0
        %v4422 = vpop.trf.xlu0
        %v4423 = vpop.trf.xlu0
        %v4425 = vsel %vm2002, %v4408, 0
        %4427 = vmatprep.subr.mxu0 0.0
        %4428 = vmatpush1.msra.mxu0 %v3864
        %4429 = vmatprep.subr.mxu0 0.0
        %4430 = vmatpush1.msra.mxu0 0.0
        %4431 = vmatprep.subr.mxu0 0.0
        %4432 = vmatpush1.msra.mxu0 0.0
        %4433 = vmatprep.subr.mxu0 0.0
        %4434 = vmatpush1.msra.mxu0 0.0
        %4435 = vmatprep.subr.mxu0 0.0
        %4436 = vmatpush1.msra.mxu0 0.0
        %4437 = vmatprep.subr.mxu0 0.0
        %4438 = vmatpush1.msra.mxu0 0.0
        %4439 = vmatprep.subr.mxu0 0.0
        %4440 = vmatpush1.msra.mxu0 0.0
        %4441 = vmatprep.subr.mxu0 0.0
        %4442 = vmatpush1.msra.mxu0 0.0
        %4443 = vmatprep.subr.mxu0 0.0
        %4444 = vmatpush1.msra.mxu0 0.0
        %4445 = vmatprep.subr.mxu0 0.0
        %4446 = vmatpush1.msra.mxu0 0.0
        %4447 = vmatprep.subr.mxu0 0.0
        %4448 = vmatpush1.msra.mxu0 0.0
        %4449 = vmatprep.subr.mxu0 0.0
        %4450 = vmatpush1.msra.mxu0 0.0
        %4451 = vmatprep.subr.mxu0 0.0
        %4452 = vmatpush1.msra.mxu0 0.0
        %4453 = vmatprep.subr.mxu0 0.0
        %4454 = vmatpush1.msra.mxu0 0.0
        %4455 = vmatprep.subr.mxu0 0.0
        %4456 = vmatpush1.msra.mxu0 0.0
        %4457 = vmatprep.subr.mxu0 0.0
        %4458 = vmatpush1.msra.mxu0 0.0
        %4459 = vmatprep.subr.mxu0 0.0
        %4460 = vmatpush1.msra.mxu0 0.0
        %4461 = vmatprep.subr.mxu0 0.0
        %4462 = vmatpush1.msra.mxu0 0.0
        %4463 = vmatprep.subr.mxu0 0.0
        %4464 = vmatpush1.msra.mxu0 0.0
        %4465 = vmatprep.subr.mxu0 0.0
        %4466 = vmatpush1.msra.mxu0 0.0
        %4467 = vmatprep.subr.mxu0 0.0
        %4468 = vmatpush1.msra.mxu0 0.0
        %4469 = vmatprep.subr.mxu0 0.0
        %4470 = vmatpush1.msra.mxu0 0.0
        %4471 = vmatprep.subr.mxu0 0.0
        %4472 = vmatpush1.msra.mxu0 0.0
        %4473 = vmatprep.subr.mxu0 0.0
        %4474 = vmatpush1.msra.mxu0 0.0
        %4475 = vmatprep.subr.mxu0 0.0
        %4476 = vmatpush1.msra.mxu0 0.0
        %4477 = vmatprep.subr.mxu0 0.0
        %4478 = vmatpush1.msra.mxu0 0.0
        %4479 = vmatprep.subr.mxu0 0.0
        %4480 = vmatpush1.msra.mxu0 0.0
        %4481 = vmatprep.subr.mxu0 0.0
        %4482 = vmatpush1.msra.mxu0 0.0
        %4483 = vmatprep.subr.mxu0 0.0
        %4484 = vmatpush1.msra.mxu0 0.0
        %4485 = vmatprep.subr.mxu0 0.0
        %4486 = vmatpush1.msra.mxu0 0.0
        %4487 = vmatprep.subr.mxu0 0.0
        %4488 = vmatpush1.msra.mxu0 0.0
        %4489 = vmatprep.subr.mxu0 0.0
        %4490 = vmatpush1.msra.mxu0 0.0
        %4491 = vmatprep.mubr.f32.mxu0 0.0
        %4492 = vmatmul.mubr.f32.gmra.mrb[0].mxu0 %v4425
        %v4493 = vpop.f32.mrb[0].mxu0
        %v4494 = vadd.f32 0.0, %v4493
        %v4495 = vpop.f32.mrb[0].mxu0
        %4496 = vdwg.mxu0
        %4497 = vxpose.xlu0.b32.start [1/16] %v3277, 128
        %4498 = vxpose.xlu0.b32.cont [2/16] 0.0, 128
        %4499 = vxpose.xlu0.b32.cont [3/16] 0.0, 128
        %4500 = vxpose.xlu0.b32.cont [4/16] 0.0, 128
        %4501 = vxpose.xlu0.b32.cont [5/16] 0.0, 128
        %4502 = vxpose.xlu0.b32.cont [6/16] 0.0, 128
        %4503 = vxpose.xlu0.b32.cont [7/16] 0.0, 128
        %4504 = vxpose.xlu0.b32.cont [8/16] 0.0, 128
        %4505 = vxpose.xlu0.b32.cont [9/16] 0.0, 128
        %4506 = vxpose.xlu0.b32.cont [10/16] 0.0, 128
        %4507 = vxpose.xlu0.b32.cont [11/16] 0.0, 128
        %4508 = vxpose.xlu0.b32.cont [12/16] 0.0, 128
        %4509 = vxpose.xlu0.b32.cont [13/16] 0.0, 128
        %4510 = vxpose.xlu0.b32.cont [14/16] 0.0, 128
        %4511 = vxpose.xlu0.b32.cont [15/16] 0.0, 128
        %4512 = vxpose.xlu0.b32.end [16/16] 0.0, 128
        %v4513 = vpop.trf.xlu0
        %v4514 = vpop.trf.xlu0
        %v4515 = vpop.trf.xlu0
        %v4516 = vpop.trf.xlu0
        %v4517 = vpop.trf.xlu0
        %v4518 = vpop.trf.xlu0
        %v4519 = vpop.trf.xlu0
        %v4520 = vpop.trf.xlu0
        %v4521 = vpop.trf.xlu0
        %v4522 = vpop.trf.xlu0
        %v4523 = vpop.trf.xlu0
        %v4524 = vpop.trf.xlu0
        %v4525 = vpop.trf.xlu0
        %v4526 = vpop.trf.xlu0
        %v4527 = vpop.trf.xlu0
        %v4528 = vpop.trf.xlu0
        %v4530 = vsel %vm2002, %v4513, 0
        %4532 = vmatprep.subr.mxu0 0.0
        %4533 = vmatpush1.msra.mxu0 %v3865
        %4534 = vmatprep.subr.mxu0 0.0
        %4535 = vmatpush1.msra.mxu0 0.0
        %4536 = vmatprep.subr.mxu0 0.0
        %4537 = vmatpush1.msra.mxu0 0.0
        %4538 = vmatprep.subr.mxu0 0.0
        %4539 = vmatpush1.msra.mxu0 0.0
        %4540 = vmatprep.subr.mxu0 0.0
        %4541 = vmatpush1.msra.mxu0 0.0
        %4542 = vmatprep.subr.mxu0 0.0
        %4543 = vmatpush1.msra.mxu0 0.0
        %4544 = vmatprep.subr.mxu0 0.0
        %4545 = vmatpush1.msra.mxu0 0.0
        %4546 = vmatprep.subr.mxu0 0.0
        %4547 = vmatpush1.msra.mxu0 0.0
        %4548 = vmatprep.subr.mxu0 0.0
        %4549 = vmatpush1.msra.mxu0 0.0
        %4550 = vmatprep.subr.mxu0 0.0
        %4551 = vmatpush1.msra.mxu0 0.0
        %4552 = vmatprep.subr.mxu0 0.0
        %4553 = vmatpush1.msra.mxu0 0.0
        %4554 = vmatprep.subr.mxu0 0.0
        %4555 = vmatpush1.msra.mxu0 0.0
        %4556 = vmatprep.subr.mxu0 0.0
        %4557 = vmatpush1.msra.mxu0 0.0
        %4558 = vmatprep.subr.mxu0 0.0
        %4559 = vmatpush1.msra.mxu0 0.0
        %4560 = vmatprep.subr.mxu0 0.0
        %4561 = vmatpush1.msra.mxu0 0.0
        %4562 = vmatprep.subr.mxu0 0.0
        %4563 = vmatpush1.msra.mxu0 0.0
        %4564 = vmatprep.subr.mxu0 0.0
        %4565 = vmatpush1.msra.mxu0 0.0
        %4566 = vmatprep.subr.mxu0 0.0
        %4567 = vmatpush1.msra.mxu0 0.0
        %4568 = vmatprep.subr.mxu0 0.0
        %4569 = vmatpush1.msra.mxu0 0.0
        %4570 = vmatprep.subr.mxu0 0.0
        %4571 = vmatpush1.msra.mxu0 0.0
        %4572 = vmatprep.subr.mxu0 0.0
        %4573 = vmatpush1.msra.mxu0 0.0
        %4574 = vmatprep.subr.mxu0 0.0
        %4575 = vmatpush1.msra.mxu0 0.0
        %4576 = vmatprep.subr.mxu0 0.0
        %4577 = vmatpush1.msra.mxu0 0.0
        %4578 = vmatprep.subr.mxu0 0.0
        %4579 = vmatpush1.msra.mxu0 0.0
        %4580 = vmatprep.subr.mxu0 0.0
        %4581 = vmatpush1.msra.mxu0 0.0
        %4582 = vmatprep.subr.mxu0 0.0
        %4583 = vmatpush1.msra.mxu0 0.0
        %4584 = vmatprep.subr.mxu0 0.0
        %4585 = vmatpush1.msra.mxu0 0.0
        %4586 = vmatprep.subr.mxu0 0.0
        %4587 = vmatpush1.msra.mxu0 0.0
        %4588 = vmatprep.subr.mxu0 0.0
        %4589 = vmatpush1.msra.mxu0 0.0
        %4590 = vmatprep.subr.mxu0 0.0
        %4591 = vmatpush1.msra.mxu0 0.0
        %4592 = vmatprep.subr.mxu0 0.0
        %4593 = vmatpush1.msra.mxu0 0.0
        %4594 = vmatprep.subr.mxu0 0.0
        %4595 = vmatpush1.msra.mxu0 0.0
        %4596 = vmatprep.mubr.f32.mxu0 0.0
        %4597 = vmatmul.mubr.f32.gmra.mrb[0].mxu0 %v4530
        %v4598 = vpop.f32.mrb[0].mxu0
        %v4599 = vadd.f32 0.0, %v4598
        %v4600 = vpop.f32.mrb[0].mxu0
        %4601 = vdwg.mxu0
        %4602 = vxpose.xlu0.b32.start [1/16] %v3278, 128
        %4603 = vxpose.xlu0.b32.cont [2/16] 0.0, 128
        %4604 = vxpose.xlu0.b32.cont [3/16] 0.0, 128
        %4605 = vxpose.xlu0.b32.cont [4/16] 0.0, 128
        %4606 = vxpose.xlu0.b32.cont [5/16] 0.0, 128
        %4607 = vxpose.xlu0.b32.cont [6/16] 0.0, 128
        %4608 = vxpose.xlu0.b32.cont [7/16] 0.0, 128
        %4609 = vxpose.xlu0.b32.cont [8/16] 0.0, 128
        %4610 = vxpose.xlu0.b32.cont [9/16] 0.0, 128
        %4611 = vxpose.xlu0.b32.cont [10/16] 0.0, 128
        %4612 = vxpose.xlu0.b32.cont [11/16] 0.0, 128
        %4613 = vxpose.xlu0.b32.cont [12/16] 0.0, 128
        %4614 = vxpose.xlu0.b32.cont [13/16] 0.0, 128
        %4615 = vxpose.xlu0.b32.cont [14/16] 0.0, 128
        %4616 = vxpose.xlu0.b32.cont [15/16] 0.0, 128
        %4617 = vxpose.xlu0.b32.end [16/16] 0.0, 128
        %v4618 = vpop.trf.xlu0
        %v4619 = vpop.trf.xlu0
        %v4620 = vpop.trf.xlu0
        %v4621 = vpop.trf.xlu0
        %v4622 = vpop.trf.xlu0
        %v4623 = vpop.trf.xlu0
        %v4624 = vpop.trf.xlu0
        %v4625 = vpop.trf.xlu0
        %v4626 = vpop.trf.xlu0
        %v4627 = vpop.trf.xlu0
        %v4628 = vpop.trf.xlu0
        %v4629 = vpop.trf.xlu0
        %v4630 = vpop.trf.xlu0
        %v4631 = vpop.trf.xlu0
        %v4632 = vpop.trf.xlu0
        %v4633 = vpop.trf.xlu0
        %v4635 = vsel %vm2002, %v4618, 0
        %4637 = vmatprep.subr.mxu0 0.0
        %4638 = vmatpush1.msra.mxu0 %v3866
        %4639 = vmatprep.subr.mxu0 0.0
        %4640 = vmatpush1.msra.mxu0 0.0
        %4641 = vmatprep.subr.mxu0 0.0
        %4642 = vmatpush1.msra.mxu0 0.0
        %4643 = vmatprep.subr.mxu0 0.0
        %4644 = vmatpush1.msra.mxu0 0.0
        %4645 = vmatprep.subr.mxu0 0.0
        %4646 = vmatpush1.msra.mxu0 0.0
        %4647 = vmatprep.subr.mxu0 0.0
        %4648 = vmatpush1.msra.mxu0 0.0
        %4649 = vmatprep.subr.mxu0 0.0
        %4650 = vmatpush1.msra.mxu0 0.0
        %4651 = vmatprep.subr.mxu0 0.0
        %4652 = vmatpush1.msra.mxu0 0.0
        %4653 = vmatprep.subr.mxu0 0.0
        %4654 = vmatpush1.msra.mxu0 0.0
        %4655 = vmatprep.subr.mxu0 0.0
        %4656 = vmatpush1.msra.mxu0 0.0
        %4657 = vmatprep.subr.mxu0 0.0
        %4658 = vmatpush1.msra.mxu0 0.0
        %4659 = vmatprep.subr.mxu0 0.0
        %4660 = vmatpush1.msra.mxu0 0.0
        %4661 = vmatprep.subr.mxu0 0.0
        %4662 = vmatpush1.msra.mxu0 0.0
        %4663 = vmatprep.subr.mxu0 0.0
        %4664 = vmatpush1.msra.mxu0 0.0
        %4665 = vmatprep.subr.mxu0 0.0
        %4666 = vmatpush1.msra.mxu0 0.0
        %4667 = vmatprep.subr.mxu0 0.0
        %4668 = vmatpush1.msra.mxu0 0.0
        %4669 = vmatprep.subr.mxu0 0.0
        %4670 = vmatpush1.msra.mxu0 0.0
        %4671 = vmatprep.subr.mxu0 0.0
        %4672 = vmatpush1.msra.mxu0 0.0
        %4673 = vmatprep.subr.mxu0 0.0
        %4674 = vmatpush1.msra.mxu0 0.0
        %4675 = vmatprep.subr.mxu0 0.0
        %4676 = vmatpush1.msra.mxu0 0.0
        %4677 = vmatprep.subr.mxu0 0.0
        %4678 = vmatpush1.msra.mxu0 0.0
        %4679 = vmatprep.subr.mxu0 0.0
        %4680 = vmatpush1.msra.mxu0 0.0
        %4681 = vmatprep.subr.mxu0 0.0
        %4682 = vmatpush1.msra.mxu0 0.0
        %4683 = vmatprep.subr.mxu0 0.0
        %4684 = vmatpush1.msra.mxu0 0.0
        %4685 = vmatprep.subr.mxu0 0.0
        %4686 = vmatpush1.msra.mxu0 0.0
        %4687 = vmatprep.subr.mxu0 0.0
        %4688 = vmatpush1.msra.mxu0 0.0
        %4689 = vmatprep.subr.mxu0 0.0
        %4690 = vmatpush1.msra.mxu0 0.0
        %4691 = vmatprep.subr.mxu0 0.0
        %4692 = vmatpush1.msra.mxu0 0.0
        %4693 = vmatprep.subr.mxu0 0.0
        %4694 = vmatpush1.msra.mxu0 0.0
        %4695 = vmatprep.subr.mxu0 0.0
        %4696 = vmatpush1.msra.mxu0 0.0
        %4697 = vmatprep.subr.mxu0 0.0
        %4698 = vmatpush1.msra.mxu0 0.0
        %4699 = vmatprep.subr.mxu0 0.0
        %4700 = vmatpush1.msra.mxu0 0.0
        %4701 = vmatprep.mubr.f32.mxu0 0.0
        %4702 = vmatmul.mubr.f32.gmra.mrb[0].mxu0 %v4635
        %v4703 = vpop.f32.mrb[0].mxu0
        %v4704 = vadd.f32 0.0, %v4703
        %v4705 = vpop.f32.mrb[0].mxu0
        %4706 = vdwg.mxu0
        %4707 = vxpose.xlu0.b32.start [1/16] %v3969, 128
        %4708 = vxpose.xlu0.b32.cont [2/16] 0.0, 128
        %4709 = vxpose.xlu0.b32.cont [3/16] 0.0, 128
        %4710 = vxpose.xlu0.b32.cont [4/16] 0.0, 128
        %4711 = vxpose.xlu0.b32.cont [5/16] 0.0, 128
        %4712 = vxpose.xlu0.b32.cont [6/16] 0.0, 128
        %4713 = vxpose.xlu0.b32.cont [7/16] 0.0, 128
        %4714 = vxpose.xlu0.b32.cont [8/16] 0.0, 128
        %4715 = vxpose.xlu0.b32.cont [9/16] 0.0, 128
        %4716 = vxpose.xlu0.b32.cont [10/16] 0.0, 128
        %4717 = vxpose.xlu0.b32.cont [11/16] 0.0, 128
        %4718 = vxpose.xlu0.b32.cont [12/16] 0.0, 128
        %4719 = vxpose.xlu0.b32.cont [13/16] 0.0, 128
        %4720 = vxpose.xlu0.b32.cont [14/16] 0.0, 128
        %4721 = vxpose.xlu0.b32.cont [15/16] 0.0, 128
        %4722 = vxpose.xlu0.b32.end [16/16] 0.0, 128
        %v4723 = vpop.trf.xlu0
        %v4724 = vpop.trf.xlu0
        %v4725 = vpop.trf.xlu0
        %v4726 = vpop.trf.xlu0
        %v4727 = vpop.trf.xlu0
        %v4728 = vpop.trf.xlu0
        %v4729 = vpop.trf.xlu0
        %v4730 = vpop.trf.xlu0
        %v4731 = vpop.trf.xlu0
        %v4732 = vpop.trf.xlu0
        %v4733 = vpop.trf.xlu0
        %v4734 = vpop.trf.xlu0
        %v4735 = vpop.trf.xlu0
        %v4736 = vpop.trf.xlu0
        %v4737 = vpop.trf.xlu0
        %v4738 = vpop.trf.xlu0
        %4739 = vxpose.xlu0.b32.start [1/16] %v4074, 128
        %4740 = vxpose.xlu0.b32.cont [2/16] 0.0, 128
        %4741 = vxpose.xlu0.b32.cont [3/16] 0.0, 128
        %4742 = vxpose.xlu0.b32.cont [4/16] 0.0, 128
        %4743 = vxpose.xlu0.b32.cont [5/16] 0.0, 128
        %4744 = vxpose.xlu0.b32.cont [6/16] 0.0, 128
        %4745 = vxpose.xlu0.b32.cont [7/16] 0.0, 128
        %4746 = vxpose.xlu0.b32.cont [8/16] 0.0, 128
        %4747 = vxpose.xlu0.b32.cont [9/16] 0.0, 128
        %4748 = vxpose.xlu0.b32.cont [10/16] 0.0, 128
        %4749 = vxpose.xlu0.b32.cont [11/16] 0.0, 128
        %4750 = vxpose.xlu0.b32.cont [12/16] 0.0, 128
        %4751 = vxpose.xlu0.b32.cont [13/16] 0.0, 128
        %4752 = vxpose.xlu0.b32.cont [14/16] 0.0, 128
        %4753 = vxpose.xlu0.b32.cont [15/16] 0.0, 128
        %4754 = vxpose.xlu0.b32.end [16/16] 0.0, 128
        %v4755 = vpop.trf.xlu0
        %v4756 = vpop.trf.xlu0
        %v4757 = vpop.trf.xlu0
        %v4758 = vpop.trf.xlu0
        %v4759 = vpop.trf.xlu0
        %v4760 = vpop.trf.xlu0
        %v4761 = vpop.trf.xlu0
        %v4762 = vpop.trf.xlu0
        %v4763 = vpop.trf.xlu0
        %v4764 = vpop.trf.xlu0
        %v4765 = vpop.trf.xlu0
        %v4766 = vpop.trf.xlu0
        %v4767 = vpop.trf.xlu0
        %v4768 = vpop.trf.xlu0
        %v4769 = vpop.trf.xlu0
        %v4770 = vpop.trf.xlu0
        %4771 = vxpose.xlu0.b32.start [1/16] %v4179, 128
        %4772 = vxpose.xlu0.b32.cont [2/16] 0.0, 128
        %4773 = vxpose.xlu0.b32.cont [3/16] 0.0, 128
        %4774 = vxpose.xlu0.b32.cont [4/16] 0.0, 128
        %4775 = vxpose.xlu0.b32.cont [5/16] 0.0, 128
        %4776 = vxpose.xlu0.b32.cont [6/16] 0.0, 128
        %4777 = vxpose.xlu0.b32.cont [7/16] 0.0, 128
        %4778 = vxpose.xlu0.b32.cont [8/16] 0.0, 128
        %4779 = vxpose.xlu0.b32.cont [9/16] 0.0, 128
        %4780 = vxpose.xlu0.b32.cont [10/16] 0.0, 128
        %4781 = vxpose.xlu0.b32.cont [11/16] 0.0, 128
        %4782 = vxpose.xlu0.b32.cont [12/16] 0.0, 128
        %4783 = vxpose.xlu0.b32.cont [13/16] 0.0, 128
        %4784 = vxpose.xlu0.b32.cont [14/16] 0.0, 128
        %4785 = vxpose.xlu0.b32.cont [15/16] 0.0, 128
        %4786 = vxpose.xlu0.b32.end [16/16] 0.0, 128
        %v4787 = vpop.trf.xlu0
        %v4788 = vpop.trf.xlu0
        %v4789 = vpop.trf.xlu0
        %v4790 = vpop.trf.xlu0
        %v4791 = vpop.trf.xlu0
        %v4792 = vpop.trf.xlu0
        %v4793 = vpop.trf.xlu0
        %v4794 = vpop.trf.xlu0
        %v4795 = vpop.trf.xlu0
        %v4796 = vpop.trf.xlu0
        %v4797 = vpop.trf.xlu0
        %v4798 = vpop.trf.xlu0
        %v4799 = vpop.trf.xlu0
        %v4800 = vpop.trf.xlu0
        %v4801 = vpop.trf.xlu0
        %v4802 = vpop.trf.xlu0
        %4803 = vxpose.xlu0.b32.start [1/16] %v4284, 128
        %4804 = vxpose.xlu0.b32.cont [2/16] 0.0, 128
        %4805 = vxpose.xlu0.b32.cont [3/16] 0.0, 128
        %4806 = vxpose.xlu0.b32.cont [4/16] 0.0, 128
        %4807 = vxpose.xlu0.b32.cont [5/16] 0.0, 128
        %4808 = vxpose.xlu0.b32.cont [6/16] 0.0, 128
        %4809 = vxpose.xlu0.b32.cont [7/16] 0.0, 128
        %4810 = vxpose.xlu0.b32.cont [8/16] 0.0, 128
        %4811 = vxpose.xlu0.b32.cont [9/16] 0.0, 128
        %4812 = vxpose.xlu0.b32.cont [10/16] 0.0, 128
        %4813 = vxpose.xlu0.b32.cont [11/16] 0.0, 128
        %4814 = vxpose.xlu0.b32.cont [12/16] 0.0, 128
        %4815 = vxpose.xlu0.b32.cont [13/16] 0.0, 128
        %4816 = vxpose.xlu0.b32.cont [14/16] 0.0, 128
        %4817 = vxpose.xlu0.b32.cont [15/16] 0.0, 128
        %4818 = vxpose.xlu0.b32.end [16/16] 0.0, 128
        %v4819 = vpop.trf.xlu0
        %v4820 = vpop.trf.xlu0
        %v4821 = vpop.trf.xlu0
        %v4822 = vpop.trf.xlu0
        %v4823 = vpop.trf.xlu0
        %v4824 = vpop.trf.xlu0
        %v4825 = vpop.trf.xlu0
        %v4826 = vpop.trf.xlu0
        %v4827 = vpop.trf.xlu0
        %v4828 = vpop.trf.xlu0
        %v4829 = vpop.trf.xlu0
        %v4830 = vpop.trf.xlu0
        %v4831 = vpop.trf.xlu0
        %v4832 = vpop.trf.xlu0
        %v4833 = vpop.trf.xlu0
        %v4834 = vpop.trf.xlu0
        %4835 = vxpose.xlu0.b32.start [1/16] %v4389, 128
        %4836 = vxpose.xlu0.b32.cont [2/16] 0.0, 128
        %4837 = vxpose.xlu0.b32.cont [3/16] 0.0, 128
        %4838 = vxpose.xlu0.b32.cont [4/16] 0.0, 128
        %4839 = vxpose.xlu0.b32.cont [5/16] 0.0, 128
        %4840 = vxpose.xlu0.b32.cont [6/16] 0.0, 128
        %4841 = vxpose.xlu0.b32.cont [7/16] 0.0, 128
        %4842 = vxpose.xlu0.b32.cont [8/16] 0.0, 128
        %4843 = vxpose.xlu0.b32.cont [9/16] 0.0, 128
        %4844 = vxpose.xlu0.b32.cont [10/16] 0.0, 128
        %4845 = vxpose.xlu0.b32.cont [11/16] 0.0, 128
        %4846 = vxpose.xlu0.b32.cont [12/16] 0.0, 128
        %4847 = vxpose.xlu0.b32.cont [13/16] 0.0, 128
        %4848 = vxpose.xlu0.b32.cont [14/16] 0.0, 128
        %4849 = vxpose.xlu0.b32.cont [15/16] 0.0, 128
        %4850 = vxpose.xlu0.b32.end [16/16] 0.0, 128
        %v4851 = vpop.trf.xlu0
        %v4852 = vpop.trf.xlu0
        %v4853 = vpop.trf.xlu0
        %v4854 = vpop.trf.xlu0
        %v4855 = vpop.trf.xlu0
        %v4856 = vpop.trf.xlu0
        %v4857 = vpop.trf.xlu0
        %v4858 = vpop.trf.xlu0
        %v4859 = vpop.trf.xlu0
        %v4860 = vpop.trf.xlu0
        %v4861 = vpop.trf.xlu0
        %v4862 = vpop.trf.xlu0
        %v4863 = vpop.trf.xlu0
        %v4864 = vpop.trf.xlu0
        %v4865 = vpop.trf.xlu0
        %v4866 = vpop.trf.xlu0
        %4867 = vxpose.xlu0.b32.start [1/16] %v4494, 128
        %4868 = vxpose.xlu0.b32.cont [2/16] 0.0, 128
        %4869 = vxpose.xlu0.b32.cont [3/16] 0.0, 128
        %4870 = vxpose.xlu0.b32.cont [4/16] 0.0, 128
        %4871 = vxpose.xlu0.b32.cont [5/16] 0.0, 128
        %4872 = vxpose.xlu0.b32.cont [6/16] 0.0, 128
        %4873 = vxpose.xlu0.b32.cont [7/16] 0.0, 128
        %4874 = vxpose.xlu0.b32.cont [8/16] 0.0, 128
        %4875 = vxpose.xlu0.b32.cont [9/16] 0.0, 128
        %4876 = vxpose.xlu0.b32.cont [10/16] 0.0, 128
        %4877 = vxpose.xlu0.b32.cont [11/16] 0.0, 128
        %4878 = vxpose.xlu0.b32.cont [12/16] 0.0, 128
        %4879 = vxpose.xlu0.b32.cont [13/16] 0.0, 128
        %4880 = vxpose.xlu0.b32.cont [14/16] 0.0, 128
        %4881 = vxpose.xlu0.b32.cont [15/16] 0.0, 128
        %4882 = vxpose.xlu0.b32.end [16/16] 0.0, 128
        %v4883 = vpop.trf.xlu0
        %v4884 = vpop.trf.xlu0
        %v4885 = vpop.trf.xlu0
        %v4886 = vpop.trf.xlu0
        %v4887 = vpop.trf.xlu0
        %v4888 = vpop.trf.xlu0
        %v4889 = vpop.trf.xlu0
        %v4890 = vpop.trf.xlu0
        %v4891 = vpop.trf.xlu0
        %v4892 = vpop.trf.xlu0
        %v4893 = vpop.trf.xlu0
        %v4894 = vpop.trf.xlu0
        %v4895 = vpop.trf.xlu0
        %v4896 = vpop.trf.xlu0
        %v4897 = vpop.trf.xlu0
        %v4898 = vpop.trf.xlu0
        %4899 = vxpose.xlu0.b32.start [1/16] %v4599, 128
        %4900 = vxpose.xlu0.b32.cont [2/16] 0.0, 128
        %4901 = vxpose.xlu0.b32.cont [3/16] 0.0, 128
        %4902 = vxpose.xlu0.b32.cont [4/16] 0.0, 128
        %4903 = vxpose.xlu0.b32.cont [5/16] 0.0, 128
        %4904 = vxpose.xlu0.b32.cont [6/16] 0.0, 128
        %4905 = vxpose.xlu0.b32.cont [7/16] 0.0, 128
        %4906 = vxpose.xlu0.b32.cont [8/16] 0.0, 128
        %4907 = vxpose.xlu0.b32.cont [9/16] 0.0, 128
        %4908 = vxpose.xlu0.b32.cont [10/16] 0.0, 128
        %4909 = vxpose.xlu0.b32.cont [11/16] 0.0, 128
        %4910 = vxpose.xlu0.b32.cont [12/16] 0.0, 128
        %4911 = vxpose.xlu0.b32.cont [13/16] 0.0, 128
        %4912 = vxpose.xlu0.b32.cont [14/16] 0.0, 128
        %4913 = vxpose.xlu0.b32.cont [15/16] 0.0, 128
        %4914 = vxpose.xlu0.b32.end [16/16] 0.0, 128
        %v4915 = vpop.trf.xlu0
        %v4916 = vpop.trf.xlu0
        %v4917 = vpop.trf.xlu0
        %v4918 = vpop.trf.xlu0
        %v4919 = vpop.trf.xlu0
        %v4920 = vpop.trf.xlu0
        %v4921 = vpop.trf.xlu0
        %v4922 = vpop.trf.xlu0
        %v4923 = vpop.trf.xlu0
        %v4924 = vpop.trf.xlu0
        %v4925 = vpop.trf.xlu0
        %v4926 = vpop.trf.xlu0
        %v4927 = vpop.trf.xlu0
        %v4928 = vpop.trf.xlu0
        %v4929 = vpop.trf.xlu0
        %v4930 = vpop.trf.xlu0
        %4931 = vxpose.xlu0.b32.start [1/16] %v4704, 128
        %4932 = vxpose.xlu0.b32.cont [2/16] 0.0, 128
        %4933 = vxpose.xlu0.b32.cont [3/16] 0.0, 128
        %4934 = vxpose.xlu0.b32.cont [4/16] 0.0, 128
        %4935 = vxpose.xlu0.b32.cont [5/16] 0.0, 128
        %4936 = vxpose.xlu0.b32.cont [6/16] 0.0, 128
        %4937 = vxpose.xlu0.b32.cont [7/16] 0.0, 128
        %4938 = vxpose.xlu0.b32.cont [8/16] 0.0, 128
        %4939 = vxpose.xlu0.b32.cont [9/16] 0.0, 128
        %4940 = vxpose.xlu0.b32.cont [10/16] 0.0, 128
        %4941 = vxpose.xlu0.b32.cont [11/16] 0.0, 128
        %4942 = vxpose.xlu0.b32.cont [12/16] 0.0, 128
        %4943 = vxpose.xlu0.b32.cont [13/16] 0.0, 128
        %4944 = vxpose.xlu0.b32.cont [14/16] 0.0, 128
        %4945 = vxpose.xlu0.b32.cont [15/16] 0.0, 128
        %4946 = vxpose.xlu0.b32.end [16/16] 0.0, 128
        %v4947 = vpop.trf.xlu0
        %v4948 = vpop.trf.xlu0
        %v4949 = vpop.trf.xlu0
        %v4950 = vpop.trf.xlu0
        %v4951 = vpop.trf.xlu0
        %v4952 = vpop.trf.xlu0
        %v4953 = vpop.trf.xlu0
        %v4954 = vpop.trf.xlu0
        %v4955 = vpop.trf.xlu0
        %v4956 = vpop.trf.xlu0
        %v4957 = vpop.trf.xlu0
        %v4958 = vpop.trf.xlu0
        %v4959 = vpop.trf.xlu0
        %v4960 = vpop.trf.xlu0
        %v4961 = vpop.trf.xlu0
        %v4962 = vpop.trf.xlu0
        %v4963 = vcombine.low %v4723, %v4787
        %v4965 = vunpack.c.l.s4 1983009808
        %v4966 = vunpack.c.0.s8 %v4965
        %v4967 = vlaneseq
        %v4968 = vshrl.u32 %v4967, 7
        %v4969 = vsub.s32 %v4966, %v4968
        %v4970 = vrot.slane %v4963, %v4969
        %v4971 = vcombine.low %v4755, %v4819
        %v4973 = vunpack.c.l.s4 1983009808
        %v4974 = vunpack.c.0.s8 %v4973
        %v4975 = vlaneseq
        %v4976 = vshrl.u32 %v4975, 7
        %v4977 = vsub.s32 %v4974, %v4976
        %v4978 = vrot.slane %v4971, %v4977
        %v4979 = vcombine.low %v4851, %v4915
        %v4981 = vunpack.c.l.s4 1983009808
        %v4982 = vunpack.c.0.s8 %v4981
        %v4983 = vlaneseq
        %v4984 = vshrl.u32 %v4983, 7
        %v4985 = vsub.s32 %v4982, %v4984
        %v4986 = vrot.slane %v4979, %v4985
        %v4987 = vcombine.low %v4883, %v4947
        %v4989 = vunpack.c.l.s4 1983009808
        %v4990 = vunpack.c.0.s8 %v4989
        %v4991 = vlaneseq
        %v4992 = vshrl.u32 %v4991, 7
        %v4993 = vsub.s32 %v4990, %v4992
        %v4994 = vrot.slane %v4987, %v4993
        %v4995 = vcombine.low %v4970, %v4978
        %v4996 = vcombine.high %v4970, %v4978
        %v4998 = vunpack.c.l.s4 1934713408
        %v4999 = vunpack.c.0.s8 %v4998
        %v5000 = vlaneseq
        %v5001 = vshrl.u32 %v5000, 7
        %v5002 = vsub.s32 %v4999, %v5001
        %v5003 = vrot.slane %v4995, %v5002
        %v5005 = vunpack.c.l.s4 1934713408
        %v5006 = vunpack.c.0.s8 %v5005
        %v5007 = vlaneseq
        %v5008 = vshrl.u32 %v5007, 7
        %v5009 = vsub.s32 %v5006, %v5008
        %v5010 = vrot.slane %v4996, %v5009
        %v5011 = vcombine.low %v4986, %v4994
        %v5012 = vcombine.high %v4986, %v4994
        %v5014 = vunpack.c.l.s4 1934713408
        %v5015 = vunpack.c.0.s8 %v5014
        %v5016 = vlaneseq
        %v5017 = vshrl.u32 %v5016, 7
        %v5018 = vsub.s32 %v5015, %v5017
        %v5019 = vrot.slane %v5011, %v5018
        %v5021 = vunpack.c.l.s4 1934713408
        %v5022 = vunpack.c.0.s8 %v5021
        %v5023 = vlaneseq
        %v5024 = vshrl.u32 %v5023, 7
        %v5025 = vsub.s32 %v5022, %v5024
        %v5026 = vrot.slane %v5012, %v5025
        %v5027 = vcombine.low %v5003, %v5019
        %v5028 = vcombine.high %v5003, %v5019
        %v5029 = vcombine.low %v5010, %v5026
        %v5030 = vcombine.high %v5010, %v5026
        %v5032 = vsel %vm2002, %v3267, 0
        %5034 = vmatprep.subr.mxu0 0.0
        %5035 = vmatpush1.msra.mxu0 %v1193
        %5036 = vmatprep.subr.mxu0 0.0
        %5037 = vmatpush1.msra.mxu0 0.0
        %5038 = vmatprep.subr.mxu0 0.0
        %5039 = vmatpush1.msra.mxu0 0.0
        %5040 = vmatprep.subr.mxu0 0.0
        %5041 = vmatpush1.msra.mxu0 0.0
        %5042 = vmatprep.subr.mxu0 0.0
        %5043 = vmatpush1.msra.mxu0 0.0
        %5044 = vmatprep.subr.mxu0 0.0
        %5045 = vmatpush1.msra.mxu0 0.0
        %5046 = vmatprep.subr.mxu0 0.0
        %5047 = vmatpush1.msra.mxu0 0.0
        %5048 = vmatprep.subr.mxu0 0.0
        %5049 = vmatpush1.msra.mxu0 0.0
        %5050 = vmatprep.subr.mxu0 0.0
        %5051 = vmatpush1.msra.mxu0 0.0
        %5052 = vmatprep.subr.mxu0 0.0
        %5053 = vmatpush1.msra.mxu0 0.0
        %5054 = vmatprep.subr.mxu0 0.0
        %5055 = vmatpush1.msra.mxu0 0.0
        %5056 = vmatprep.subr.mxu0 0.0
        %5057 = vmatpush1.msra.mxu0 0.0
        %5058 = vmatprep.subr.mxu0 0.0
        %5059 = vmatpush1.msra.mxu0 0.0
        %5060 = vmatprep.subr.mxu0 0.0
        %5061 = vmatpush1.msra.mxu0 0.0
        %5062 = vmatprep.subr.mxu0 0.0
        %5063 = vmatpush1.msra.mxu0 0.0
        %5064 = vmatprep.subr.mxu0 0.0
        %5065 = vmatpush1.msra.mxu0 0.0
        %5066 = vmatprep.subr.mxu0 0.0
        %5067 = vmatpush1.msra.mxu0 0.0
        %5068 = vmatprep.subr.mxu0 0.0
        %5069 = vmatpush1.msra.mxu0 0.0
        %5070 = vmatprep.subr.mxu0 0.0
        %5071 = vmatpush1.msra.mxu0 0.0
        %5072 = vmatprep.subr.mxu0 0.0
        %5073 = vmatpush1.msra.mxu0 0.0
        %5074 = vmatprep.subr.mxu0 0.0
        %5075 = vmatpush1.msra.mxu0 0.0
        %5076 = vmatprep.subr.mxu0 0.0
        %5077 = vmatpush1.msra.mxu0 0.0
        %5078 = vmatprep.subr.mxu0 0.0
        %5079 = vmatpush1.msra.mxu0 0.0
        %5080 = vmatprep.subr.mxu0 0.0
        %5081 = vmatpush1.msra.mxu0 0.0
        %5082 = vmatprep.subr.mxu0 0.0
        %5083 = vmatpush1.msra.mxu0 0.0
        %5084 = vmatprep.subr.mxu0 0.0
        %5085 = vmatpush1.msra.mxu0 0.0
        %5086 = vmatprep.subr.mxu0 0.0
        %5087 = vmatpush1.msra.mxu0 0.0
        %5088 = vmatprep.subr.mxu0 0.0
        %5089 = vmatpush1.msra.mxu0 0.0
        %5090 = vmatprep.subr.mxu0 0.0
        %5091 = vmatpush1.msra.mxu0 0.0
        %5092 = vmatprep.subr.mxu0 0.0
        %5093 = vmatpush1.msra.mxu0 0.0
        %5094 = vmatprep.subr.mxu0 0.0
        %5095 = vmatpush1.msra.mxu0 0.0
        %5096 = vmatprep.subr.mxu0 0.0
        %5097 = vmatpush1.msra.mxu0 0.0
        %5098 = vmatprep.mubr.f32.mxu0 0.0
        %5099 = vmatmul.mubr.f32.gmra.mrb[0].mxu0 %v5032
        %v5100 = vpop.f32.mrb[0].mxu0
        %v5101 = vadd.f32 %v5027, %v5100
        %v5102 = vpop.f32.mrb[0].mxu0
        %5103 = vdwg.mxu0
        %v5105 = vsel %vm2002, %v3268, 0
        %5107 = vmatprep.subr.mxu0 0.0
        %5108 = vmatpush1.msra.mxu0 %v1263
        %5109 = vmatprep.subr.mxu0 0.0
        %5110 = vmatpush1.msra.mxu0 0.0
        %5111 = vmatprep.subr.mxu0 0.0
        %5112 = vmatpush1.msra.mxu0 0.0
        %5113 = vmatprep.subr.mxu0 0.0
        %5114 = vmatpush1.msra.mxu0 0.0
        %5115 = vmatprep.subr.mxu0 0.0
        %5116 = vmatpush1.msra.mxu0 0.0
        %5117 = vmatprep.subr.mxu0 0.0
        %5118 = vmatpush1.msra.mxu0 0.0
        %5119 = vmatprep.subr.mxu0 0.0
        %5120 = vmatpush1.msra.mxu0 0.0
        %5121 = vmatprep.subr.mxu0 0.0
        %5122 = vmatpush1.msra.mxu0 0.0
        %5123 = vmatprep.subr.mxu0 0.0
        %5124 = vmatpush1.msra.mxu0 0.0
        %5125 = vmatprep.subr.mxu0 0.0
        %5126 = vmatpush1.msra.mxu0 0.0
        %5127 = vmatprep.subr.mxu0 0.0
        %5128 = vmatpush1.msra.mxu0 0.0
        %5129 = vmatprep.subr.mxu0 0.0
        %5130 = vmatpush1.msra.mxu0 0.0
        %5131 = vmatprep.subr.mxu0 0.0
        %5132 = vmatpush1.msra.mxu0 0.0
        %5133 = vmatprep.subr.mxu0 0.0
        %5134 = vmatpush1.msra.mxu0 0.0
        %5135 = vmatprep.subr.mxu0 0.0
        %5136 = vmatpush1.msra.mxu0 0.0
        %5137 = vmatprep.subr.mxu0 0.0
        %5138 = vmatpush1.msra.mxu0 0.0
        %5139 = vmatprep.subr.mxu0 0.0
        %5140 = vmatpush1.msra.mxu0 0.0
        %5141 = vmatprep.subr.mxu0 0.0
        %5142 = vmatpush1.msra.mxu0 0.0
        %5143 = vmatprep.subr.mxu0 0.0
        %5144 = vmatpush1.msra.mxu0 0.0
        %5145 = vmatprep.subr.mxu0 0.0
        %5146 = vmatpush1.msra.mxu0 0.0
        %5147 = vmatprep.subr.mxu0 0.0
        %5148 = vmatpush1.msra.mxu0 0.0
        %5149 = vmatprep.subr.mxu0 0.0
        %5150 = vmatpush1.msra.mxu0 0.0
        %5151 = vmatprep.subr.mxu0 0.0
        %5152 = vmatpush1.msra.mxu0 0.0
        %5153 = vmatprep.subr.mxu0 0.0
        %5154 = vmatpush1.msra.mxu0 0.0
        %5155 = vmatprep.subr.mxu0 0.0
        %5156 = vmatpush1.msra.mxu0 0.0
        %5157 = vmatprep.subr.mxu0 0.0
        %5158 = vmatpush1.msra.mxu0 0.0
        %5159 = vmatprep.subr.mxu0 0.0
        %5160 = vmatpush1.msra.mxu0 0.0
        %5161 = vmatprep.subr.mxu0 0.0
        %5162 = vmatpush1.msra.mxu0 0.0
        %5163 = vmatprep.subr.mxu0 0.0
        %5164 = vmatpush1.msra.mxu0 0.0
        %5165 = vmatprep.subr.mxu0 0.0
        %5166 = vmatpush1.msra.mxu0 0.0
        %5167 = vmatprep.subr.mxu0 0.0
        %5168 = vmatpush1.msra.mxu0 0.0
        %5169 = vmatprep.subr.mxu0 0.0
        %5170 = vmatpush1.msra.mxu0 0.0
        %5171 = vmatprep.mubr.f32.mxu0 0.0
        %5172 = vmatmul.mubr.f32.gmra.mrb[0].mxu0 %v5105
        %v5173 = vpop.f32.mrb[0].mxu0
        %v5174 = vadd.f32 %v5028, %v5173
        %v5175 = vpop.f32.mrb[0].mxu0
        %5176 = vdwg.mxu0
        %v5178 = vsel %vm2002, %v3269, 0
        %5180 = vmatprep.subr.mxu0 0.0
        %5181 = vmatpush1.msra.mxu0 %v1333
        %5182 = vmatprep.subr.mxu0 0.0
        %5183 = vmatpush1.msra.mxu0 0.0
        %5184 = vmatprep.subr.mxu0 0.0
        %5185 = vmatpush1.msra.mxu0 0.0
        %5186 = vmatprep.subr.mxu0 0.0
        %5187 = vmatpush1.msra.mxu0 0.0
        %5188 = vmatprep.subr.mxu0 0.0
        %5189 = vmatpush1.msra.mxu0 0.0
        %5190 = vmatprep.subr.mxu0 0.0
        %5191 = vmatpush1.msra.mxu0 0.0
        %5192 = vmatprep.subr.mxu0 0.0
        %5193 = vmatpush1.msra.mxu0 0.0
        %5194 = vmatprep.subr.mxu0 0.0
        %5195 = vmatpush1.msra.mxu0 0.0
        %5196 = vmatprep.subr.mxu0 0.0
        %5197 = vmatpush1.msra.mxu0 0.0
        %5198 = vmatprep.subr.mxu0 0.0
        %5199 = vmatpush1.msra.mxu0 0.0
        %5200 = vmatprep.subr.mxu0 0.0
        %5201 = vmatpush1.msra.mxu0 0.0
        %5202 = vmatprep.subr.mxu0 0.0
        %5203 = vmatpush1.msra.mxu0 0.0
        %5204 = vmatprep.subr.mxu0 0.0
        %5205 = vmatpush1.msra.mxu0 0.0
        %5206 = vmatprep.subr.mxu0 0.0
        %5207 = vmatpush1.msra.mxu0 0.0
        %5208 = vmatprep.subr.mxu0 0.0
        %5209 = vmatpush1.msra.mxu0 0.0
        %5210 = vmatprep.subr.mxu0 0.0
        %5211 = vmatpush1.msra.mxu0 0.0
        %5212 = vmatprep.subr.mxu0 0.0
        %5213 = vmatpush1.msra.mxu0 0.0
        %5214 = vmatprep.subr.mxu0 0.0
        %5215 = vmatpush1.msra.mxu0 0.0
        %5216 = vmatprep.subr.mxu0 0.0
        %5217 = vmatpush1.msra.mxu0 0.0
        %5218 = vmatprep.subr.mxu0 0.0
        %5219 = vmatpush1.msra.mxu0 0.0
        %5220 = vmatprep.subr.mxu0 0.0
        %5221 = vmatpush1.msra.mxu0 0.0
        %5222 = vmatprep.subr.mxu0 0.0
        %5223 = vmatpush1.msra.mxu0 0.0
        %5224 = vmatprep.subr.mxu0 0.0
        %5225 = vmatpush1.msra.mxu0 0.0
        %5226 = vmatprep.subr.mxu0 0.0
        %5227 = vmatpush1.msra.mxu0 0.0
        %5228 = vmatprep.subr.mxu0 0.0
        %5229 = vmatpush1.msra.mxu0 0.0
        %5230 = vmatprep.subr.mxu0 0.0
        %5231 = vmatpush1.msra.mxu0 0.0
        %5232 = vmatprep.subr.mxu0 0.0
        %5233 = vmatpush1.msra.mxu0 0.0
        %5234 = vmatprep.subr.mxu0 0.0
        %5235 = vmatpush1.msra.mxu0 0.0
        %5236 = vmatprep.subr.mxu0 0.0
        %5237 = vmatpush1.msra.mxu0 0.0
        %5238 = vmatprep.subr.mxu0 0.0
        %5239 = vmatpush1.msra.mxu0 0.0
        %5240 = vmatprep.subr.mxu0 0.0
        %5241 = vmatpush1.msra.mxu0 0.0
        %5242 = vmatprep.subr.mxu0 0.0
        %5243 = vmatpush1.msra.mxu0 0.0
        %5244 = vmatprep.mubr.f32.mxu0 0.0
        %5245 = vmatmul.mubr.f32.gmra.mrb[0].mxu0 %v5178
        %v5246 = vpop.f32.mrb[0].mxu0
        %v5247 = vadd.f32 %v5029, %v5246
        %v5248 = vpop.f32.mrb[0].mxu0
        %5249 = vdwg.mxu0
        %v5251 = vsel %vm2002, %v3270, 0
        %5253 = vmatprep.subr.mxu0 0.0
        %5254 = vmatpush1.msra.mxu0 %v1403
        %5255 = vmatprep.subr.mxu0 0.0
        %5256 = vmatpush1.msra.mxu0 0.0
        %5257 = vmatprep.subr.mxu0 0.0
        %5258 = vmatpush1.msra.mxu0 0.0
        %5259 = vmatprep.subr.mxu0 0.0
        %5260 = vmatpush1.msra.mxu0 0.0
        %5261 = vmatprep.subr.mxu0 0.0
        %5262 = vmatpush1.msra.mxu0 0.0
        %5263 = vmatprep.subr.mxu0 0.0
        %5264 = vmatpush1.msra.mxu0 0.0
        %5265 = vmatprep.subr.mxu0 0.0
        %5266 = vmatpush1.msra.mxu0 0.0
        %5267 = vmatprep.subr.mxu0 0.0
        %5268 = vmatpush1.msra.mxu0 0.0
        %5269 = vmatprep.subr.mxu0 0.0
        %5270 = vmatpush1.msra.mxu0 0.0
        %5271 = vmatprep.subr.mxu0 0.0
        %5272 = vmatpush1.msra.mxu0 0.0
        %5273 = vmatprep.subr.mxu0 0.0
        %5274 = vmatpush1.msra.mxu0 0.0
        %5275 = vmatprep.subr.mxu0 0.0
        %5276 = vmatpush1.msra.mxu0 0.0
        %5277 = vmatprep.subr.mxu0 0.0
        %5278 = vmatpush1.msra.mxu0 0.0
        %5279 = vmatprep.subr.mxu0 0.0
        %5280 = vmatpush1.msra.mxu0 0.0
        %5281 = vmatprep.subr.mxu0 0.0
        %5282 = vmatpush1.msra.mxu0 0.0
        %5283 = vmatprep.subr.mxu0 0.0
        %5284 = vmatpush1.msra.mxu0 0.0
        %5285 = vmatprep.subr.mxu0 0.0
        %5286 = vmatpush1.msra.mxu0 0.0
        %5287 = vmatprep.subr.mxu0 0.0
        %5288 = vmatpush1.msra.mxu0 0.0
        %5289 = vmatprep.subr.mxu0 0.0
        %5290 = vmatpush1.msra.mxu0 0.0
        %5291 = vmatprep.subr.mxu0 0.0
        %5292 = vmatpush1.msra.mxu0 0.0
        %5293 = vmatprep.subr.mxu0 0.0
        %5294 = vmatpush1.msra.mxu0 0.0
        %5295 = vmatprep.subr.mxu0 0.0
        %5296 = vmatpush1.msra.mxu0 0.0
        %5297 = vmatprep.subr.mxu0 0.0
        %5298 = vmatpush1.msra.mxu0 0.0
        %5299 = vmatprep.subr.mxu0 0.0
        %5300 = vmatpush1.msra.mxu0 0.0
        %5301 = vmatprep.subr.mxu0 0.0
        %5302 = vmatpush1.msra.mxu0 0.0
        %5303 = vmatprep.subr.mxu0 0.0
        %5304 = vmatpush1.msra.mxu0 0.0
        %5305 = vmatprep.subr.mxu0 0.0
        %5306 = vmatpush1.msra.mxu0 0.0
        %5307 = vmatprep.subr.mxu0 0.0
        %5308 = vmatpush1.msra.mxu0 0.0
        %5309 = vmatprep.subr.mxu0 0.0
        %5310 = vmatpush1.msra.mxu0 0.0
        %5311 = vmatprep.subr.mxu0 0.0
        %5312 = vmatpush1.msra.mxu0 0.0
        %5313 = vmatprep.subr.mxu0 0.0
        %5314 = vmatpush1.msra.mxu0 0.0
        %5315 = vmatprep.subr.mxu0 0.0
        %5316 = vmatpush1.msra.mxu0 0.0
        %5317 = vmatprep.mubr.f32.mxu0 0.0
        %5318 = vmatmul.mubr.f32.gmra.mrb[0].mxu0 %v5251
        %v5319 = vpop.f32.mrb[0].mxu0
        %v5320 = vadd.f32 %v5030, %v5319
        %v5321 = vpop.f32.mrb[0].mxu0
        %5322 = vdwg.mxu0
        %v5323 = vld [vmem:[%s7] sm:$0xff]
        %v5324 = vld [vmem:[%s7 + $0x8] sm:$0xff]
        %v5325 = vld [vmem:[%s7 + $0x10] sm:$0xff]
        %v5326 = vld [vmem:[%s7 + $0x18] sm:$0xff]
        %v5328 = vsel %vm2002, %v5101, 0
        %5330 = vmatprep.subr.mxu0 0.0
        %5331 = vmatpush1.msra.mxu0 %v5323
        %5332 = vmatprep.subr.mxu0 0.0
        %5333 = vmatpush1.msra.mxu0 0.0
        %5334 = vmatprep.subr.mxu0 0.0
        %5335 = vmatpush1.msra.mxu0 0.0
        %5336 = vmatprep.subr.mxu0 0.0
        %5337 = vmatpush1.msra.mxu0 0.0
        %5338 = vmatprep.subr.mxu0 0.0
        %5339 = vmatpush1.msra.mxu0 0.0
        %5340 = vmatprep.subr.mxu0 0.0
        %5341 = vmatpush1.msra.mxu0 0.0
        %5342 = vmatprep.subr.mxu0 0.0
        %5343 = vmatpush1.msra.mxu0 0.0
        %5344 = vmatprep.subr.mxu0 0.0
        %5345 = vmatpush1.msra.mxu0 0.0
        %5346 = vmatprep.subr.mxu0 0.0
        %5347 = vmatpush1.msra.mxu0 0.0
        %5348 = vmatprep.subr.mxu0 0.0
        %5349 = vmatpush1.msra.mxu0 0.0
        %5350 = vmatprep.subr.mxu0 0.0
        %5351 = vmatpush1.msra.mxu0 0.0
        %5352 = vmatprep.subr.mxu0 0.0
        %5353 = vmatpush1.msra.mxu0 0.0
        %5354 = vmatprep.subr.mxu0 0.0
        %5355 = vmatpush1.msra.mxu0 0.0
        %5356 = vmatprep.subr.mxu0 0.0
        %5357 = vmatpush1.msra.mxu0 0.0
        %5358 = vmatprep.subr.mxu0 0.0
        %5359 = vmatpush1.msra.mxu0 0.0
        %5360 = vmatprep.subr.mxu0 0.0
        %5361 = vmatpush1.msra.mxu0 0.0
        %5362 = vmatprep.subr.mxu0 0.0
        %5363 = vmatpush1.msra.mxu0 0.0
        %5364 = vmatprep.subr.mxu0 0.0
        %5365 = vmatpush1.msra.mxu0 0.0
        %5366 = vmatprep.subr.mxu0 0.0
        %5367 = vmatpush1.msra.mxu0 0.0
        %5368 = vmatprep.subr.mxu0 0.0
        %5369 = vmatpush1.msra.mxu0 0.0
        %5370 = vmatprep.subr.mxu0 0.0
        %5371 = vmatpush1.msra.mxu0 0.0
        %5372 = vmatprep.subr.mxu0 0.0
        %5373 = vmatpush1.msra.mxu0 0.0
        %5374 = vmatprep.subr.mxu0 0.0
        %5375 = vmatpush1.msra.mxu0 0.0
        %5376 = vmatprep.subr.mxu0 0.0
        %5377 = vmatpush1.msra.mxu0 0.0
        %5378 = vmatprep.subr.mxu0 0.0
        %5379 = vmatpush1.msra.mxu0 0.0
        %5380 = vmatprep.subr.mxu0 0.0
        %5381 = vmatpush1.msra.mxu0 0.0
        %5382 = vmatprep.subr.mxu0 0.0
        %5383 = vmatpush1.msra.mxu0 0.0
        %5384 = vmatprep.subr.mxu0 0.0
        %5385 = vmatpush1.msra.mxu0 0.0
        %5386 = vmatprep.subr.mxu0 0.0
        %5387 = vmatpush1.msra.mxu0 0.0
        %5388 = vmatprep.subr.mxu0 0.0
        %5389 = vmatpush1.msra.mxu0 0.0
        %5390 = vmatprep.subr.mxu0 0.0
        %5391 = vmatpush1.msra.mxu0 0.0
        %5392 = vmatprep.subr.mxu0 0.0
        %5393 = vmatpush1.msra.mxu0 0.0
        %5394 = vmatprep.mubr.f32.mxu0 0.0
        %5395 = vmatmul.mubr.f32.gmra.mrb[0].mxu0 %v5328
        %v5396 = vpop.f32.mrb[0].mxu0
        %v5397 = vadd.f32 0.0, %v5396
        %v5398 = vpop.f32.mrb[0].mxu0
        %5399 = vdwg.mxu0
        %v5401 = vsel %vm2002, %v5174, 0
        %5403 = vmatprep.subr.mxu0 0.0
        %5404 = vmatpush1.msra.mxu0 %v5324
        %5405 = vmatprep.subr.mxu0 0.0
        %5406 = vmatpush1.msra.mxu0 0.0
        %5407 = vmatprep.subr.mxu0 0.0
        %5408 = vmatpush1.msra.mxu0 0.0
        %5409 = vmatprep.subr.mxu0 0.0
        %5410 = vmatpush1.msra.mxu0 0.0
        %5411 = vmatprep.subr.mxu0 0.0
        %5412 = vmatpush1.msra.mxu0 0.0
        %5413 = vmatprep.subr.mxu0 0.0
        %5414 = vmatpush1.msra.mxu0 0.0
        %5415 = vmatprep.subr.mxu0 0.0
        %5416 = vmatpush1.msra.mxu0 0.0
        %5417 = vmatprep.subr.mxu0 0.0
        %5418 = vmatpush1.msra.mxu0 0.0
        %5419 = vmatprep.subr.mxu0 0.0
        %5420 = vmatpush1.msra.mxu0 0.0
        %5421 = vmatprep.subr.mxu0 0.0
        %5422 = vmatpush1.msra.mxu0 0.0
        %5423 = vmatprep.subr.mxu0 0.0
        %5424 = vmatpush1.msra.mxu0 0.0
        %5425 = vmatprep.subr.mxu0 0.0
        %5426 = vmatpush1.msra.mxu0 0.0
        %5427 = vmatprep.subr.mxu0 0.0
        %5428 = vmatpush1.msra.mxu0 0.0
        %5429 = vmatprep.subr.mxu0 0.0
        %5430 = vmatpush1.msra.mxu0 0.0
        %5431 = vmatprep.subr.mxu0 0.0
        %5432 = vmatpush1.msra.mxu0 0.0
        %5433 = vmatprep.subr.mxu0 0.0
        %5434 = vmatpush1.msra.mxu0 0.0
        %5435 = vmatprep.subr.mxu0 0.0
        %5436 = vmatpush1.msra.mxu0 0.0
        %5437 = vmatprep.subr.mxu0 0.0
        %5438 = vmatpush1.msra.mxu0 0.0
        %5439 = vmatprep.subr.mxu0 0.0
        %5440 = vmatpush1.msra.mxu0 0.0
        %5441 = vmatprep.subr.mxu0 0.0
        %5442 = vmatpush1.msra.mxu0 0.0
        %5443 = vmatprep.subr.mxu0 0.0
        %5444 = vmatpush1.msra.mxu0 0.0
        %5445 = vmatprep.subr.mxu0 0.0
        %5446 = vmatpush1.msra.mxu0 0.0
        %5447 = vmatprep.subr.mxu0 0.0
        %5448 = vmatpush1.msra.mxu0 0.0
        %5449 = vmatprep.subr.mxu0 0.0
        %5450 = vmatpush1.msra.mxu0 0.0
        %5451 = vmatprep.subr.mxu0 0.0
        %5452 = vmatpush1.msra.mxu0 0.0
        %5453 = vmatprep.subr.mxu0 0.0
        %5454 = vmatpush1.msra.mxu0 0.0
        %5455 = vmatprep.subr.mxu0 0.0
        %5456 = vmatpush1.msra.mxu0 0.0
        %5457 = vmatprep.subr.mxu0 0.0
        %5458 = vmatpush1.msra.mxu0 0.0
        %5459 = vmatprep.subr.mxu0 0.0
        %5460 = vmatpush1.msra.mxu0 0.0
        %5461 = vmatprep.subr.mxu0 0.0
        %5462 = vmatpush1.msra.mxu0 0.0
        %5463 = vmatprep.subr.mxu0 0.0
        %5464 = vmatpush1.msra.mxu0 0.0
        %5465 = vmatprep.subr.mxu0 0.0
        %5466 = vmatpush1.msra.mxu0 0.0
        %5467 = vmatprep.mubr.f32.mxu0 0.0
        %5468 = vmatmul.mubr.f32.gmra.mrb[0].mxu0 %v5401
        %v5469 = vpop.f32.mrb[0].mxu0
        %v5470 = vadd.f32 0.0, %v5469
        %v5471 = vpop.f32.mrb[0].mxu0
        %5472 = vdwg.mxu0
        %v5474 = vsel %vm2002, %v5247, 0
        %5476 = vmatprep.subr.mxu0 0.0
        %5477 = vmatpush1.msra.mxu0 %v5325
        %5478 = vmatprep.subr.mxu0 0.0
        %5479 = vmatpush1.msra.mxu0 0.0
        %5480 = vmatprep.subr.mxu0 0.0
        %5481 = vmatpush1.msra.mxu0 0.0
        %5482 = vmatprep.subr.mxu0 0.0
        %5483 = vmatpush1.msra.mxu0 0.0
        %5484 = vmatprep.subr.mxu0 0.0
        %5485 = vmatpush1.msra.mxu0 0.0
        %5486 = vmatprep.subr.mxu0 0.0
        %5487 = vmatpush1.msra.mxu0 0.0
        %5488 = vmatprep.subr.mxu0 0.0
        %5489 = vmatpush1.msra.mxu0 0.0
        %5490 = vmatprep.subr.mxu0 0.0
        %5491 = vmatpush1.msra.mxu0 0.0
        %5492 = vmatprep.subr.mxu0 0.0
        %5493 = vmatpush1.msra.mxu0 0.0
        %5494 = vmatprep.subr.mxu0 0.0
        %5495 = vmatpush1.msra.mxu0 0.0
        %5496 = vmatprep.subr.mxu0 0.0
        %5497 = vmatpush1.msra.mxu0 0.0
        %5498 = vmatprep.subr.mxu0 0.0
        %5499 = vmatpush1.msra.mxu0 0.0
        %5500 = vmatprep.subr.mxu0 0.0
        %5501 = vmatpush1.msra.mxu0 0.0
        %5502 = vmatprep.subr.mxu0 0.0
        %5503 = vmatpush1.msra.mxu0 0.0
        %5504 = vmatprep.subr.mxu0 0.0
        %5505 = vmatpush1.msra.mxu0 0.0
        %5506 = vmatprep.subr.mxu0 0.0
        %5507 = vmatpush1.msra.mxu0 0.0
        %5508 = vmatprep.subr.mxu0 0.0
        %5509 = vmatpush1.msra.mxu0 0.0
        %5510 = vmatprep.subr.mxu0 0.0
        %5511 = vmatpush1.msra.mxu0 0.0
        %5512 = vmatprep.subr.mxu0 0.0
        %5513 = vmatpush1.msra.mxu0 0.0
        %5514 = vmatprep.subr.mxu0 0.0
        %5515 = vmatpush1.msra.mxu0 0.0
        %5516 = vmatprep.subr.mxu0 0.0
        %5517 = vmatpush1.msra.mxu0 0.0
        %5518 = vmatprep.subr.mxu0 0.0
        %5519 = vmatpush1.msra.mxu0 0.0
        %5520 = vmatprep.subr.mxu0 0.0
        %5521 = vmatpush1.msra.mxu0 0.0
        %5522 = vmatprep.subr.mxu0 0.0
        %5523 = vmatpush1.msra.mxu0 0.0
        %5524 = vmatprep.subr.mxu0 0.0
        %5525 = vmatpush1.msra.mxu0 0.0
        %5526 = vmatprep.subr.mxu0 0.0
        %5527 = vmatpush1.msra.mxu0 0.0
        %5528 = vmatprep.subr.mxu0 0.0
        %5529 = vmatpush1.msra.mxu0 0.0
        %5530 = vmatprep.subr.mxu0 0.0
        %5531 = vmatpush1.msra.mxu0 0.0
        %5532 = vmatprep.subr.mxu0 0.0
        %5533 = vmatpush1.msra.mxu0 0.0
        %5534 = vmatprep.subr.mxu0 0.0
        %5535 = vmatpush1.msra.mxu0 0.0
        %5536 = vmatprep.subr.mxu0 0.0
        %5537 = vmatpush1.msra.mxu0 0.0
        %5538 = vmatprep.subr.mxu0 0.0
        %5539 = vmatpush1.msra.mxu0 0.0
        %5540 = vmatprep.mubr.f32.mxu0 0.0
        %5541 = vmatmul.mubr.f32.gmra.mrb[0].mxu0 %v5474
        %v5542 = vpop.f32.mrb[0].mxu0
        %v5543 = vadd.f32 0.0, %v5542
        %v5544 = vpop.f32.mrb[0].mxu0
        %5545 = vdwg.mxu0
        %v5547 = vsel %vm2002, %v5320, 0
        %5549 = vmatprep.subr.mxu0 0.0
        %5550 = vmatpush1.msra.mxu0 %v5326
        %5551 = vmatprep.subr.mxu0 0.0
        %5552 = vmatpush1.msra.mxu0 0.0
        %5553 = vmatprep.subr.mxu0 0.0
        %5554 = vmatpush1.msra.mxu0 0.0
        %5555 = vmatprep.subr.mxu0 0.0
        %5556 = vmatpush1.msra.mxu0 0.0
        %5557 = vmatprep.subr.mxu0 0.0
        %5558 = vmatpush1.msra.mxu0 0.0
        %5559 = vmatprep.subr.mxu0 0.0
        %5560 = vmatpush1.msra.mxu0 0.0
        %5561 = vmatprep.subr.mxu0 0.0
        %5562 = vmatpush1.msra.mxu0 0.0
        %5563 = vmatprep.subr.mxu0 0.0
        %5564 = vmatpush1.msra.mxu0 0.0
        %5565 = vmatprep.subr.mxu0 0.0
        %5566 = vmatpush1.msra.mxu0 0.0
        %5567 = vmatprep.subr.mxu0 0.0
        %5568 = vmatpush1.msra.mxu0 0.0
        %5569 = vmatprep.subr.mxu0 0.0
        %5570 = vmatpush1.msra.mxu0 0.0
        %5571 = vmatprep.subr.mxu0 0.0
        %5572 = vmatpush1.msra.mxu0 0.0
        %5573 = vmatprep.subr.mxu0 0.0
        %5574 = vmatpush1.msra.mxu0 0.0
        %5575 = vmatprep.subr.mxu0 0.0
        %5576 = vmatpush1.msra.mxu0 0.0
        %5577 = vmatprep.subr.mxu0 0.0
        %5578 = vmatpush1.msra.mxu0 0.0
        %5579 = vmatprep.subr.mxu0 0.0
        %5580 = vmatpush1.msra.mxu0 0.0
        %5581 = vmatprep.subr.mxu0 0.0
        %5582 = vmatpush1.msra.mxu0 0.0
        %5583 = vmatprep.subr.mxu0 0.0
        %5584 = vmatpush1.msra.mxu0 0.0
        %5585 = vmatprep.subr.mxu0 0.0
        %5586 = vmatpush1.msra.mxu0 0.0
        %5587 = vmatprep.subr.mxu0 0.0
        %5588 = vmatpush1.msra.mxu0 0.0
        %5589 = vmatprep.subr.mxu0 0.0
        %5590 = vmatpush1.msra.mxu0 0.0
        %5591 = vmatprep.subr.mxu0 0.0
        %5592 = vmatpush1.msra.mxu0 0.0
        %5593 = vmatprep.subr.mxu0 0.0
        %5594 = vmatpush1.msra.mxu0 0.0
        %5595 = vmatprep.subr.mxu0 0.0
        %5596 = vmatpush1.msra.mxu0 0.0
        %5597 = vmatprep.subr.mxu0 0.0
        %5598 = vmatpush1.msra.mxu0 0.0
        %5599 = vmatprep.subr.mxu0 0.0
        %5600 = vmatpush1.msra.mxu0 0.0
        %5601 = vmatprep.subr.mxu0 0.0
        %5602 = vmatpush1.msra.mxu0 0.0
        %5603 = vmatprep.subr.mxu0 0.0
        %5604 = vmatpush1.msra.mxu0 0.0
        %5605 = vmatprep.subr.mxu0 0.0
        %5606 = vmatpush1.msra.mxu0 0.0
        %5607 = vmatprep.subr.mxu0 0.0
        %5608 = vmatpush1.msra.mxu0 0.0
        %5609 = vmatprep.subr.mxu0 0.0
        %5610 = vmatpush1.msra.mxu0 0.0
        %5611 = vmatprep.subr.mxu0 0.0
        %5612 = vmatpush1.msra.mxu0 0.0
        %5613 = vmatprep.mubr.f32.mxu0 0.0
        %5614 = vmatmul.mubr.f32.gmra.mrb[0].mxu0 %v5547
        %v5615 = vpop.f32.mrb[0].mxu0
        %v5616 = vadd.f32 0.0, %v5615
        %v5617 = vpop.f32.mrb[0].mxu0
        %5618 = vdwg.mxu0
        %v5619 = vsel %vm474, %v5397, 0.0
        %v5620 = vsel %vm474, %v5470, 0.0
        %v5621 = vadd.f32 %v5619, %v5620
        %v5622 = vsel %vm474, %v5543, 0.0
        %v5623 = vadd.f32 %v5621, %v5622
        %v5624 = vsel %vm474, %v5616, 0.0
        %v5625 = vadd.f32 %v5623, %v5624
        %v5626 = vld [vmem:[%s8] sm:$0x1]
        %v5628 = vlaneseq
        %v5629 = vshrl.u32 %v5628, 7
        %v5630 = vsub.s32 0, %v5629
        %v5631 = vrot.slane %v5626, %v5630
        %v5633 = vadd.f32 %v5625, %v5631
        %5634 = vst.msk [vmem:[%s419] sm:$0xff] %vm474, %v5633
        %s5635 = sand.u32 %s296, 1
        %s5636 = scalar_lea.sflag [#allocation3], %s5635
        %s5637 = sand.u32 %s296, 1
        %s5638 = smul.addr %s5637, 8
        %s5639 = scalar_lea.vmem [#allocation2], %s5638
        // Predicated region
        $region69: #{tpu_custom_call.1} parent=67 // pred_check
          %p5640 = pneg %p306
        $region70: #{tpu_custom_call.1} parent=67 // pred_check_branch
          %5642 = sbr.rel (%p5640) target = $region72
        $region71: #{tpu_custom_call.1} parent=67 // pred_region
          %s5644 = ssub.s32 128, 128
          %5645 = vsyncadd %s5636, %s5644
          %s5646 = smul.addr %s26, 128
          %s5647 = scalar_lea.hbm %s12, %s5646
          %s5649 = sshll.u32 %s5639, 4
          %s5650 = int_to_ptr.vmem [resolvable:$true] %s5649
          %5652 = dma.vmem_to_hbm [thread:$0]  %s5650, 128, %s5647, %s5636
        $region72: #{tpu_custom_call.1} parent=67 // pred_fallthru
          _
      $region68: #{tpu_custom_call.1} parent=5 // pred_fallthru
        _
      %p5653 = scmp.le.s32.totalorder 2, %s21
      // Predicated region
      $region73: #{tpu_custom_call.1} parent=5 // pred_check
        %p5654 = pneg %p5653
      $region74: #{tpu_custom_call.1} parent=5 // pred_check_branch
        %5656 = sbr.rel (%p5654) target = $region76
      $region75: #{tpu_custom_call.1} parent=5 // pred_region
        %s5657 = ssub.s32 %s21, 2
        // Predicated region
        $region77: #{tpu_custom_call.1} parent=75 // pred_check
          %p5658 = pneg %p312
        $region78: #{tpu_custom_call.1} parent=75 // pred_check_branch
          %5660 = sbr.rel (%p5658) target = $region80
        $region79: #{tpu_custom_call.1} parent=75 // pred_region
          %s5661 = sand.u32 %s297, 1
          %s5662 = scalar_lea.sflag [#allocation3], %s5661
          %s5663 = sand.u32 %s297, 1
          %s5664 = smul.addr %s5663, 8
          %s5665 = scalar_lea.vmem [#allocation2], %s5664
          %5666 = dma.done %s5662, 128
        $region80: #{tpu_custom_call.1} parent=75 // pred_fallthru
          _
      $region76: #{tpu_custom_call.1} parent=5 // pred_fallthru
        _
    $region6: #{tpu_custom_call.1} parent=1 // loop_footer
      %s25 = sadd.s32 1, %s21
    $region7: #{tpu_custom_call.1} parent=1 // loop_footer_branch
      %20 = sbr.rel target = $region3
    $region8: #{tpu_custom_call.1} parent=1 // loop_exit
      _
    %5667 = vsyncpa [#allocation3], 1
    %s5668 = scalar_lea.sflag [#allocation3], 1
    %5669 = vsyncpa %s5668, 1

</llo_original>
